<compile_context>
chip_gen: v7x
topology: tpu7x:2x2x1
jax: 0.10.0
libtpu: 0.0.40
codegen_flags: <defaults>
</compile_context>

<pallas_src>
import functools

import jax
import jax.numpy as jnp
import numpy as np
from jax.experimental import pallas as pl
from jax.experimental.pallas import tpu as pltpu


# ----------------------------- in-kernel helpers -----------------------------

def _erf_approx(x):
    # Abramowitz & Stegun 7.1.26 rational erf (|abs err| < 1.5e-7), built only
    # from ops that lower cleanly in Mosaic.  The divide is routed to the EUP
    # via pl.reciprocal(approx=True) so it overlaps MXU work.
    a1, a2, a3, a4, a5 = 0.254829592, -0.284496736, 1.421413741, -1.453152027, 1.061405429
    p = 0.3275911
    s = jnp.where(x >= 0.0, 1.0, -1.0)
    ax = jnp.abs(x)
    t = pl.reciprocal(1.0 + p * ax, approx=True)
    poly = ((((a5 * t + a4) * t + a3) * t + a2) * t + a1) * t
    return s * (1.0 - poly * jnp.exp(-ax * ax))


def _gelu_exact(x):
    # TODO(synk): ACT2FN["gelu"] is exact erf-based GELU; emulated here with a
    # 1.5e-7-accurate rational erf (effectively exact at f32 precision).
    return 0.5 * x * (1.0 + _erf_approx(x * 0.7071067811865476))


def _layer_norm(x, g, b, eps=1e-5):
    mu = jnp.mean(x, axis=-1, keepdims=True)
    var = jnp.mean(jnp.square(x - mu), axis=-1, keepdims=True)
    return (x - mu) * jax.lax.rsqrt(var + eps) * g + b


# --------------------------------- the kernel --------------------------------

def decoder_layer_kernel(
    x_full_ref, x_tile_ref,
    ln1_g_ref, ln1_b_ref,
    wq_ref, bq_ref, wk_ref, bk_ref, wv_ref, bv_ref, wo_ref, bo_ref,
    ln2_g_ref, ln2_b_ref,
    w1_ref, b1_ref, w2_ref, b2_ref,
    out_ref, k_out_ref, v_out_ref,
    h1_scratch, k_scratch, v_scratch, attn_scratch,
    *, num_heads, head_dim, q_tile,
):
    qi = pl.program_id(1)
    seq_len = k_scratch.shape[0]
    cdtype = k_scratch.dtype                     # bf16 compute dtype

    # ---- once per batch element: LN1 + K/V projections for the full sequence ----
    @pl.when(qi == 0)
    def _():
        hf = _layer_norm(x_full_ref[0], ln1_g_ref[...], ln1_b_ref[...]).astype(cdtype)
        h1_scratch[...] = hf
        k = jnp.dot(hf, wk_ref[...], preferred_element_type=jnp.float32) + bk_ref[...]
        v = jnp.dot(hf, wv_ref[...], preferred_element_type=jnp.float32) + bv_ref[...]
        k_scratch[...] = k.astype(cdtype)
        v_scratch[...] = v.astype(cdtype)

    # ---- present_key_value writeback: one lane-dense (q_tile, D) tile per step
    # (spreads the HBM writeback across qi steps instead of one resident burst).
    row0 = pl.multiple_of(qi * q_tile, q_tile)
    k_out_ref[0] = k_scratch[pl.ds(row0, q_tile), :].astype(k_out_ref.dtype)
    v_out_ref[0] = v_scratch[pl.ds(row0, q_tile), :].astype(v_out_ref.dtype)

    # ---- query tile: reuse LN1 output from scratch; scaling pre-folded into wq/bq
    ht = h1_scratch[pl.ds(row0, q_tile), :]
    q = (jnp.dot(ht, wq_ref[...], preferred_element_type=jnp.float32)
         + bq_ref[...]).astype(cdtype)

    # ---- causal additive mask generated in-kernel (no HBM mask traffic) ----
    # TODO(synk): per-batch padding masks (general HF attention_mask) would need
    # an extra additive-mask input; only the causal LM mask is built here.
    row = row0 + jax.lax.broadcasted_iota(jnp.int32, (q_tile, seq_len), 0)
    col = jax.lax.broadcasted_iota(jnp.int32, (q_tile, seq_len), 1)
    mask = jnp.where(col <= row, 0.0, jnp.finfo(jnp.float32).min)

    # ---- per-head attention; each head's output retired into attn_scratch ----
    # TODO(synk): at very large num_heads switch to lax.fori_loop over a
    # head-major scratch layout to bound trace size; the per-head store below
    # already retires each head's vregs before the next head starts.
    for h in range(num_heads):
        lo = h * head_dim
        qh = q[:, lo:lo + head_dim]
        kh = k_scratch[:, lo:lo + head_dim]
        vh = v_scratch[:, lo:lo + head_dim]
        # contraction on last dim of both operands -> feeds MXU directly,
        # no materialized (head_dim, S) transpose.
        s = jax.lax.dot_general(qh, kh, (((1,), (1,)), ((), ())),
                                preferred_element_type=jnp.float32) + mask
        s = s - jnp.max(s, axis=-1, keepdims=True)
        p = jnp.exp(s)
        denom = jnp.sum(p, axis=-1, keepdims=True)
        r = pl.reciprocal(denom, approx=True)
        r = r * (2.0 - denom * r)                 # one Newton step -> near-exact softmax
        p = (p * r).astype(cdtype)
        o_h = jnp.dot(p, vh, preferred_element_type=jnp.float32)
        attn_scratch[:, lo:lo + head_dim] = o_h.astype(cdtype)

    # single fused D-wide out-projection after the head loop
    attn = jnp.dot(attn_scratch[...], wo_ref[...],
                   preferred_element_type=jnp.float32) + bo_ref[...]

    x1 = x_tile_ref[0] + attn      # residual #1 (dropout is a no-op at inference)

    # ---- final_layer_norm + feed-forward (fc1 -> GELU -> fc2) ----
    # TODO(synk): for production D~768 / I~3072 on v7x (64 MiB VMEM) tile the FFN
    # over I with a third "arbitrary" grid axis streaming (D, I_t)/(I_t, D)
    # blocks of w1/w2 if the bf16 weights still do not fit.
    h2 = _layer_norm(x1, ln2_g_ref[...], ln2_b_ref[...]).astype(cdtype)
    f = jnp.dot(h2, w1_ref[...], preferred_element_type=jnp.float32) + b1_ref[...]
    f = _gelu_exact(f).astype(cdtype)
    f = jnp.dot(f, w2_ref[...], preferred_element_type=jnp.float32) + b2_ref[...]

    out_ref[0] = (x1 + f).astype(out_ref.dtype)  # residual #2


# --------------------------------- wrapper -----------------------------------

def prepare_params(params, *, num_heads, compute_dtype=jnp.bfloat16):
    """Host-side one-time transform: fold the attention scaling into wq/bq and
    cast the big matmul weights to bf16 (f32 accumulation happens in-kernel)."""
    D = params["wq"].shape[0]
    scaling = (D // num_heads) ** (-0.5)
    p = dict(params)
    p["wq"] = (params["wq"] * scaling).astype(compute_dtype)
    p["bq"] = params["bq"] * scaling                       # biases stay f32
    for name in ("wk", "wv", "wo", "w1", "w2"):
        p[name] = params[name].astype(compute_dtype)
    return p


def _vmem_limit_bytes():
    # ~100 MiB on 128 MiB parts (v5e/v6e), ~48 MiB on the 64 MiB v7x part.
    try:
        cap = pltpu.get_tpu_info().vmem_capacity_bytes
    except Exception:
        cap = 64 * 1024 * 1024
    return int(min(cap - 16 * 1024 * 1024, 100 * 1024 * 1024))


def _build_call(kernel, *, B, S, D, I, q_tile, n_q, out_dtype, compute_dtype,
                vmem_limit, cost, single_buffer_weights):
    def rep(shape):  # replicated (weights / biases): constant block index
        idx = lambda b, qi, _n=len(shape): (0,) * _n
        if single_buffer_weights:
            # Constant-index blocks never change: the second pipeline buffer is
            # pure VMEM waste, so request a single buffer.
            return pl.BlockSpec(shape, idx, pipeline_mode=pl.Buffered(buffer_count=1))
        return pl.BlockSpec(shape, idx)

    in_specs = [
        # TODO(synk): on v7x also single-buffer x_full; on v5e/v6e the second
        # buffer hides the next batch element's fetch behind the last qi step.
        pl.BlockSpec((1, S, D), lambda b, qi: (b, 0, 0)),        # x full (K/V once per batch)
        pl.BlockSpec((1, q_tile, D), lambda b, qi: (b, qi, 0)),  # x query tile
        rep((1, D)), rep((1, D)),                                # ln1 gamma / beta
        rep((D, D)), rep((1, D)),                                # wq (pre-scaled, bf16) / bq
        rep((D, D)), rep((1, D)),                                # wk / bk
        rep((D, D)), rep((1, D)),                                # wv / bv
        rep((D, D)), rep((1, D)),                                # wo / bo
        rep((1, D)), rep((1, D)),                                # ln2 gamma / beta
        rep((D, I)), rep((1, I)),                                # fc1 W (bf16) / b
        rep((I, D)), rep((1, D)),                                # fc2 W (bf16) / b
    ]
    out_specs = [
        pl.BlockSpec((1, q_tile, D), lambda b, qi: (b, qi, 0)),  # hidden states (lane-dense)
        pl.BlockSpec((1, q_tile, D), lambda b, qi: (b, qi, 0)),  # k cache tile (per qi)
        pl.BlockSpec((1, q_tile, D), lambda b, qi: (b, qi, 0)),  # v cache tile (per qi)
    ]
    out_shape = [
        jax.ShapeDtypeStruct((B, S, D), out_dtype),
        jax.ShapeDtypeStruct((B, S, D), out_dtype),
        jax.ShapeDtypeStruct((B, S, D), out_dtype),
    ]

    return pl.pallas_call(
        kernel,
        grid=(B, n_q),
        in_specs=in_specs,
        out_specs=out_specs,
        out_shape=out_shape,
        scratch_shapes=[
            pltpu.VMEM((S, D), compute_dtype),       # LN1(x), full sequence (reused per tile)
            pltpu.VMEM((S, D), compute_dtype),       # K, full sequence (bf16)
            pltpu.VMEM((S, D), compute_dtype),       # V, full sequence (bf16)
            pltpu.VMEM((q_tile, D), compute_dtype),  # per-tile multi-head attention output
        ],
        compiler_params=pltpu.CompilerParams(
            # qi must be "arbitrary": scratch computed at qi == 0 is reused by
            # later query tiles of the same batch element.
            # NOTE(megacore/v7x): batch is the only "parallel" axis, so B >= 2
            # is required to keep both TensorCores busy on v7x.
            dimension_semantics=("parallel", "arbitrary"),
            vmem_limit_bytes=vmem_limit,
        ),
        cost_estimate=cost,
    )


def histogpt_decoder_layer(x, params, *, num_heads, q_tile=None):
    B, S, D = x.shape
    head_dim = D // num_heads
    I = params["w1"].shape[1]
    compute_dtype = params["wq"].dtype
    vmem_limit = _vmem_limit_bytes()

    if q_tile is None:
        # Larger tiles amortize per-step overhead and weight reuse; 512 fits on
        # 128 MiB parts (v5e/v6e), 256 on the 64 MiB v7x part.
        q_tile = min(S, 512 if vmem_limit >= 96 * 1024 * 1024 else 256)
        while S % q_tile != 0:
            q_tile //= 2
    assert S % q_tile == 0
    # keep dynamic sublane slices of the bf16 scratch aligned to its packing
    min_align = 16 if jnp.dtype(compute_dtype).itemsize == 2 else 8
    assert q_tile == S or q_tile % min_align == 0
    n_q = S // q_tile

    kernel = functools.partial(
        decoder_layer_kernel,
        num_heads=num_heads, head_dim=head_dim, q_tile=q_tile,
    )

    # Advisory cost estimate (real flops / bytes of the layer).
    flops = B * (8 * S * D * D + 4 * S * S * D + 4 * S * D * I)
    transcendentals = B * (num_heads * S * S + S * I)
    bytes_accessed = (4 * 4 * B * S * D                 # x, out, k/v caches (f32)
                      + 2 * (4 * D * D + 2 * D * I)      # bf16 weights
                      + 4 * (7 * D + I))                 # f32 biases + LN params
    cost = pl.CostEstimate(flops=int(flops), transcendentals=int(transcendentals),
                           bytes_accessed=int(bytes_accessed))

    args = (
        x, x,
        params["ln1_g"], params["ln1_b"],
        params["wq"], params["bq"], params["wk"], params["bk"],
        params["wv"], params["bv"], params["wo"], params["bo"],
        params["ln2_g"], params["ln2_b"],
        params["w1"], params["b1"], params["w2"], params["b2"],
    )

    outs = None
    for single_buffer in (True, False):
        try:
            fn = _build_call(kernel, B=B, S=S, D=D, I=I, q_tile=q_tile, n_q=n_q,
                             out_dtype=x.dtype, compute_dtype=compute_dtype,
                             vmem_limit=vmem_limit, cost=cost,
                             single_buffer_weights=single_buffer)
            outs = fn(*args)
            break
        except Exception:
            # Graceful fallback if this Pallas build rejects pipeline_mode /
            # Buffered(1); default double-buffering is only a VMEM pessimization.
            if not single_buffer:
                raise
    out, k_bsd, v_bsd = outs

    # present_key_value in the module layout (B, H, S, head_dim): the
    # reshape/transpose is done outside so in-kernel stores stay lane-dense.
    k_cache = k_bsd.reshape(B, S, num_heads, head_dim).transpose(0, 2, 1, 3)
    v_cache = v_bsd.reshape(B, S, num_heads, head_dim).transpose(0, 2, 1, 3)
    return out, k_cache, v_cache


# ------------------------------- pure-JAX reference ---------------------------

def reference(x, mask, p, num_heads):
    B, S, D = x.shape
    hd = D // num_heads
    hp = jax.lax.Precision.HIGHEST

    def ln(v, g, b):
        mu = v.mean(-1, keepdims=True)
        var = ((v - mu) ** 2).mean(-1, keepdims=True)
        return (v - mu) / jnp.sqrt(var + 1e-5) * g + b

    h = ln(x, p["ln1_g"], p["ln1_b"])
    q = (jnp.einsum("bsd,de->bse", h, p["wq"], precision=hp) + p["bq"]) * hd ** (-0.5)
    k = jnp.einsum("bsd,de->bse", h, p["wk"], precision=hp) + p["bk"]
    v = jnp.einsum("bsd,de->bse", h, p["wv"], precision=hp) + p["bv"]
    qh = q.reshape(B, S, num_heads, hd).transpose(0, 2, 1, 3)
    kh = k.reshape(B, S, num_heads, hd).transpose(0, 2, 1, 3)
    vh = v.reshape(B, S, num_heads, hd).transpose(0, 2, 1, 3)
    scores = jnp.einsum("bhqd,bhkd->bhqk", qh, kh, precision=hp) + mask
    probs = jax.nn.softmax(scores, axis=-1)
    o = jnp.einsum("bhqk,bhkd->bhqd", probs, vh, precision=hp)
    o = o.transpose(0, 2, 1, 3).reshape(B, S, D)
    o = jnp.einsum("bsd,de->bse", o, p["wo"], precision=hp) + p["bo"]
    x = x + o
    h = ln(x, p["ln2_g"], p["ln2_b"])
    f = jnp.einsum("bsd,di->bsi", h, p["w1"], precision=hp) + p["b1"]
    f = 0.5 * f * (1.0 + jax.scipy.special.erf(f / jnp.sqrt(2.0)))
    f = jnp.einsum("bsi,id->bsd", f, p["w2"], precision=hp) + p["b2"]
    return x + f, kh, vh


# ----------------------------------- main -------------------------------------

if __name__ == "__main__":
    B, S, D, H = 2, 32, 32, 4           # batch, seq_len, hidden_size, num_heads
    I = 4 * D                           # intermediate_size
    TQ = 16                             # query tile -> 2 query tiles per sequence

    key = jax.random.PRNGKey(0)
    ks = jax.random.split(key, 20)
    n = lambda k, shape, s=0.02: s * jax.random.normal(k, shape, jnp.float32)

    params = {
        "ln1_g": 1.0 + n(ks[0], (1, D), 0.1), "ln1_b": n(ks[1], (1, D)),
        "wq": n(ks[2], (D, D)), "bq": n(ks[3], (1, D)),
        "wk": n(ks[4], (D, D)), "bk": n(ks[5], (1, D)),
        "wv": n(ks[6], (D, D)), "bv": n(ks[7], (1, D)),
        "wo": n(ks[8], (D, D)), "bo": n(ks[9], (1, D)),
        "ln2_g": 1.0 + n(ks[10], (1, D), 0.1), "ln2_b": n(ks[11], (1, D)),
        "w1": n(ks[12], (D, I)), "b1": n(ks[13], (1, I)),
        "w2": n(ks[14], (I, D)), "b2": n(ks[15], (1, D)),
    }

    x = jax.random.normal(ks[16], (B, S, D), jnp.float32)

    # Kernel: causal mask generated in-kernel; scaling folded into wq/bq; bf16
    # weights / K/V scratch with f32 accumulation.
    prepared = prepare_params(params, num_heads=H)
    out, k_cache, v_cache = histogpt_decoder_layer(x, prepared, num_heads=H, q_tile=TQ)
    jax.block_until_ready((out, k_cache, v_cache))

    # Reference uses the equivalent HF-style additive causal mask explicitly.
    neg = jnp.finfo(jnp.float32).min
    causal = jnp.triu(jnp.full((S, S), neg, jnp.float32), k=1)
    attention_mask = jnp.broadcast_to(causal, (B, 1, S, S))
    ref_out, ref_k, ref_v = reference(x, attention_mask, params, H)

    # Tolerances: bf16 matmul operands (f32 accumulation) vs an f32 reference.
    np.testing.assert_allclose(np.asarray(out), np.asarray(ref_out), rtol=2e-2, atol=5e-3)
    np.testing.assert_allclose(np.asarray(k_cache), np.asarray(ref_k), rtol=2e-2, atol=5e-3)
    np.testing.assert_allclose(np.asarray(v_cache), np.asarray(ref_v), rtol=2e-2, atol=5e-3)

    print("KERNEL_OK")
</pallas_src>

<mosaic_0001>
module attributes {stable_mosaic.version = 11 : i64} {
  func.func @decoder_layer_kernel(%arg0: i32, %arg1: i32, %arg2: memref<1x32x32xf32, #tpu.memory_space<vmem>>, %arg3: memref<1x16x32xf32, #tpu.memory_space<vmem>>, %arg4: memref<1x32xf32, #tpu.memory_space<vmem>>, %arg5: memref<1x32xf32, #tpu.memory_space<vmem>>, %arg6: memref<32x32xbf16, #tpu.memory_space<vmem>>, %arg7: memref<1x32xf32, #tpu.memory_space<vmem>>, %arg8: memref<32x32xbf16, #tpu.memory_space<vmem>>, %arg9: memref<1x32xf32, #tpu.memory_space<vmem>>, %arg10: memref<32x32xbf16, #tpu.memory_space<vmem>>, %arg11: memref<1x32xf32, #tpu.memory_space<vmem>>, %arg12: memref<32x32xbf16, #tpu.memory_space<vmem>>, %arg13: memref<1x32xf32, #tpu.memory_space<vmem>>, %arg14: memref<1x32xf32, #tpu.memory_space<vmem>>, %arg15: memref<1x32xf32, #tpu.memory_space<vmem>>, %arg16: memref<32x128xbf16, #tpu.memory_space<vmem>>, %arg17: memref<1x128xf32, #tpu.memory_space<vmem>>, %arg18: memref<128x32xbf16, #tpu.memory_space<vmem>>, %arg19: memref<1x32xf32, #tpu.memory_space<vmem>>, %arg20: memref<1x16x32xf32, #tpu.memory_space<vmem>>, %arg21: memref<1x16x32xf32, #tpu.memory_space<vmem>>, %arg22: memref<1x16x32xf32, #tpu.memory_space<vmem>>, %arg23: memref<32x32xbf16, #tpu.memory_space<vmem>>, %arg24: memref<32x32xbf16, #tpu.memory_space<vmem>>, %arg25: memref<32x32xbf16, #tpu.memory_space<vmem>>, %arg26: memref<16x32xbf16, #tpu.memory_space<vmem>>) attributes {dimension_semantics = [#tpu.dimension_semantics<parallel>, #tpu.dimension_semantics<arbitrary>], iteration_bounds = array<i64: 2, 2>, scalar_prefetch = 0 : i64, scratch_operands = 4 : i64, tpu.core_type = #tpu.core_type<tc>, window_params = [{transform_indices = @transform_0, window_bounds = array<i64: 1, 32, 32>}, {transform_indices = @transform_1, window_bounds = array<i64: 1, 16, 32>}, {pipeline_mode = #tpu.pipeline_mode<synchronous>, transform_indices = @transform_2, window_bounds = array<i64: 1, 32>}, {pipeline_mode = #tpu.pipeline_mode<synchronous>, transform_indices = @transform_3, window_bounds = array<i64: 1, 32>}, {pipeline_mode = #tpu.pipeline_mode<synchronous>, transform_indices = @transform_4, window_bounds = array<i64: 32, 32>}, {pipeline_mode = #tpu.pipeline_mode<synchronous>, transform_indices = @transform_5, window_bounds = array<i64: 1, 32>}, {pipeline_mode = #tpu.pipeline_mode<synchronous>, transform_indices = @transform_6, window_bounds = array<i64: 32, 32>}, {pipeline_mode = #tpu.pipeline_mode<synchronous>, transform_indices = @transform_7, window_bounds = array<i64: 1, 32>}, {pipeline_mode = #tpu.pipeline_mode<synchronous>, transform_indices = @transform_8, window_bounds = array<i64: 32, 32>}, {pipeline_mode = #tpu.pipeline_mode<synchronous>, transform_indices = @transform_9, window_bounds = array<i64: 1, 32>}, {pipeline_mode = #tpu.pipeline_mode<synchronous>, transform_indices = @transform_10, window_bounds = array<i64: 32, 32>}, {pipeline_mode = #tpu.pipeline_mode<synchronous>, transform_indices = @transform_11, window_bounds = array<i64: 1, 32>}, {pipeline_mode = #tpu.pipeline_mode<synchronous>, transform_indices = @transform_12, window_bounds = array<i64: 1, 32>}, {pipeline_mode = #tpu.pipeline_mode<synchronous>, transform_indices = @transform_13, window_bounds = array<i64: 1, 32>}, {pipeline_mode = #tpu.pipeline_mode<synchronous>, transform_indices = @transform_14, window_bounds = array<i64: 32, 128>}, {pipeline_mode = #tpu.pipeline_mode<synchronous>, transform_indices = @transform_15, window_bounds = array<i64: 1, 128>}, {pipeline_mode = #tpu.pipeline_mode<synchronous>, transform_indices = @transform_16, window_bounds = array<i64: 128, 32>}, {pipeline_mode = #tpu.pipeline_mode<synchronous>, transform_indices = @transform_17, window_bounds = array<i64: 1, 32>}, {transform_indices = @transform_18, window_bounds = array<i64: 1, 16, 32>}, {transform_indices = @transform_19, window_bounds = array<i64: 1, 16, 32>}, {transform_indices = @transform_20, window_bounds = array<i64: 1, 16, 32>}]} {
    %c0_i32 = arith.constant 0 : i32
    %0 = arith.cmpi eq, %arg1, %c0_i32 : i32
    %1 = arith.extui %0 : i1 to i32
    %c0_i32_0 = arith.constant 0 : i32
    %2 = arith.cmpi ne, %1, %c0_i32_0 : i32
    scf.if %2 {
      %c0_103 = arith.constant 0 : index
      %c0_104 = arith.constant 0 : index
      %c0_105 = arith.constant 0 : index
      %214 = vector.load %arg2[%c0_103, %c0_104, %c0_105] : memref<1x32x32xf32, #tpu.memory_space<vmem>>, vector<1x32x32xf32>
      %215 = vector.shape_cast %214 : vector<1x32x32xf32> to vector<32x32xf32>
      %c0_106 = arith.constant 0 : index
      %c0_107 = arith.constant 0 : index
      %216 = vector.load %arg4[%c0_106, %c0_107] : memref<1x32xf32, #tpu.memory_space<vmem>>, vector<1x32xf32>
      %c0_108 = arith.constant 0 : index
      %c0_109 = arith.constant 0 : index
      %217 = vector.load %arg5[%c0_108, %c0_109] : memref<1x32xf32, #tpu.memory_space<vmem>>, vector<1x32xf32>
      %cst_110 = arith.constant dense<0.000000e+00> : vector<32xf32>
      %218 = vector.multi_reduction <add>, %215, %cst_110 [1] : vector<32x32xf32> to vector<32xf32>
      %219 = vector.shape_cast %218 : vector<32xf32> to vector<32x1xf32>
      %cst_111 = arith.constant 3.200000e+01 : f32
      %220 = vector.broadcast %cst_111 : f32 to vector<32x1xf32>
      %221 = arith.divf %219, %220 : vector<32x1xf32>
      %222 = vector.broadcast %221 : vector<32x1xf32> to vector<32x32xf32>
      %223 = arith.subf %215, %222 : vector<32x32xf32>
      %224 = arith.mulf %223, %223 : vector<32x32xf32>
      %cst_112 = arith.constant dense<0.000000e+00> : vector<32xf32>
      %225 = vector.multi_reduction <add>, %224, %cst_112 [1] : vector<32x32xf32> to vector<32xf32>
      %226 = vector.shape_cast %225 : vector<32xf32> to vector<32x1xf32>
      %cst_113 = arith.constant 3.200000e+01 : f32
      %227 = vector.broadcast %cst_113 : f32 to vector<32x1xf32>
      %228 = arith.divf %226, %227 : vector<32x1xf32>
      %229 = vector.broadcast %221 : vector<32x1xf32> to vector<32x32xf32>
      %230 = arith.subf %215, %229 : vector<32x32xf32>
      %cst_114 = arith.constant 9.99999974E-6 : f32
      %231 = vector.broadcast %cst_114 : f32 to vector<32x1xf32>
      %232 = arith.addf %228, %231 : vector<32x1xf32>
      %233 = math.rsqrt %232 : vector<32x1xf32>
      %234 = vector.broadcast %233 : vector<32x1xf32> to vector<32x32xf32>
      %235 = arith.mulf %230, %234 : vector<32x32xf32>
      %236 = vector.broadcast %216 : vector<1x32xf32> to vector<32x32xf32>
      %237 = arith.mulf %235, %236 : vector<32x32xf32>
      %238 = vector.broadcast %217 : vector<1x32xf32> to vector<32x32xf32>
      %239 = arith.addf %237, %238 : vector<32x32xf32>
      %240 = arith.truncf %239 : vector<32x32xf32> to vector<32x32xbf16>
      %c0_115 = arith.constant 0 : index
      %c0_116 = arith.constant 0 : index
      %241 = vector.load %arg23[%c0_115, %c0_116] : memref<32x32xbf16, #tpu.memory_space<vmem>>, vector<32x32xbf16>
      tpu.vector_store %arg23[%c0_115, %c0_116], %240 {strides = array<i32>} : memref<32x32xbf16, #tpu.memory_space<vmem>>, vector<32x32xbf16>,
      %c0_117 = arith.constant 0 : index
      %c0_118 = arith.constant 0 : index
      %242 = vector.load %arg8[%c0_117, %c0_118] : memref<32x32xbf16, #tpu.memory_space<vmem>>, vector<32x32xbf16>
      %cst_119 = arith.constant dense<0.000000e+00> : vector<32x32xf32>
      %243 = tpu.matmul %240, %242, %cst_119 {dimension_numbers = #tpu.dot_dimension_numbers<[1], [0], [0], [1], [0, 0, 1, 1], [], []>} : vector<32x32xbf16>, vector<32x32xbf16>, vector<32x32xf32> -> vector<32x32xf32>
      %c0_120 = arith.constant 0 : index
      %c0_121 = arith.constant 0 : index
      %244 = vector.load %arg9[%c0_120, %c0_121] : memref<1x32xf32, #tpu.memory_space<vmem>>, vector<1x32xf32>
      %245 = vector.broadcast %244 : vector<1x32xf32> to vector<32x32xf32>
      %246 = arith.addf %243, %245 : vector<32x32xf32>
      %c0_122 = arith.constant 0 : index
      %c0_123 = arith.constant 0 : index
      %247 = vector.load %arg10[%c0_122, %c0_123] : memref<32x32xbf16, #tpu.memory_space<vmem>>, vector<32x32xbf16>
      %cst_124 = arith.constant dense<0.000000e+00> : vector<32x32xf32>
      %248 = tpu.matmul %240, %247, %cst_124 {dimension_numbers = #tpu.dot_dimension_numbers<[1], [0], [0], [1], [0, 0, 1, 1], [], []>} : vector<32x32xbf16>, vector<32x32xbf16>, vector<32x32xf32> -> vector<32x32xf32>
      %c0_125 = arith.constant 0 : index
      %c0_126 = arith.constant 0 : index
      %249 = vector.load %arg11[%c0_125, %c0_126] : memref<1x32xf32, #tpu.memory_space<vmem>>, vector<1x32xf32>
      %250 = vector.broadcast %249 : vector<1x32xf32> to vector<32x32xf32>
      %251 = arith.addf %248, %250 : vector<32x32xf32>
      %252 = arith.truncf %246 : vector<32x32xf32> to vector<32x32xbf16>
      %c0_127 = arith.constant 0 : index
      %c0_128 = arith.constant 0 : index
      %253 = vector.load %arg24[%c0_127, %c0_128] : memref<32x32xbf16, #tpu.memory_space<vmem>>, vector<32x32xbf16>
      tpu.vector_store %arg24[%c0_127, %c0_128], %252 {strides = array<i32>} : memref<32x32xbf16, #tpu.memory_space<vmem>>, vector<32x32xbf16>,
      %254 = arith.truncf %251 : vector<32x32xf32> to vector<32x32xbf16>
      %c0_129 = arith.constant 0 : index
      %c0_130 = arith.constant 0 : index
      %255 = vector.load %arg25[%c0_129, %c0_130] : memref<32x32xbf16, #tpu.memory_space<vmem>>, vector<32x32xbf16>
      tpu.vector_store %arg25[%c0_129, %c0_130], %254 {strides = array<i32>} : memref<32x32xbf16, #tpu.memory_space<vmem>>, vector<32x32xbf16>,
    } else {
    }
    %c16_i32 = arith.constant 16 : i32
    %3 = arith.muli %arg1, %c16_i32 : i32
    %4 = tpu.assume_multiple %3, 16 : i32
    %5 = arith.index_cast %4 : i32 to index
    %c0 = arith.constant 0 : index
    %6 = vector.load %arg24[%5, %c0] : memref<32x32xbf16, #tpu.memory_space<vmem>>, vector<16x32xbf16>
    %7 = arith.extf %6 : vector<16x32xbf16> to vector<16x32xf32>
    %c0_1 = arith.constant 0 : index
    %c0_2 = arith.constant 0 : index
    %c0_3 = arith.constant 0 : index
    %8 = vector.load %arg21[%c0_1, %c0_2, %c0_3] : memref<1x16x32xf32, #tpu.memory_space<vmem>>, vector<1x16x32xf32>
    %9 = vector.shape_cast %8 : vector<1x16x32xf32> to vector<16x32xf32>
    %10 = vector.shape_cast %7 : vector<16x32xf32> to vector<1x16x32xf32>
    tpu.vector_store %arg21[%c0_1, %c0_2, %c0_3], %10 {strides = array<i32>} : memref<1x16x32xf32, #tpu.memory_space<vmem>>, vector<1x16x32xf32>,
    %11 = arith.index_cast %4 : i32 to index
    %c0_4 = arith.constant 0 : index
    %12 = vector.load %arg25[%11, %c0_4] : memref<32x32xbf16, #tpu.memory_space<vmem>>, vector<16x32xbf16>
    %13 = arith.extf %12 : vector<16x32xbf16> to vector<16x32xf32>
    %c0_5 = arith.constant 0 : index
    %c0_6 = arith.constant 0 : index
    %c0_7 = arith.constant 0 : index
    %14 = vector.load %arg22[%c0_5, %c0_6, %c0_7] : memref<1x16x32xf32, #tpu.memory_space<vmem>>, vector<1x16x32xf32>
    %15 = vector.shape_cast %14 : vector<1x16x32xf32> to vector<16x32xf32>
    %16 = vector.shape_cast %13 : vector<16x32xf32> to vector<1x16x32xf32>
    tpu.vector_store %arg22[%c0_5, %c0_6, %c0_7], %16 {strides = array<i32>} : memref<1x16x32xf32, #tpu.memory_space<vmem>>, vector<1x16x32xf32>,
    %17 = arith.index_cast %4 : i32 to index
    %c0_8 = arith.constant 0 : index
    %18 = vector.load %arg23[%17, %c0_8] : memref<32x32xbf16, #tpu.memory_space<vmem>>, vector<16x32xbf16>
    %c0_9 = arith.constant 0 : index
    %c0_10 = arith.constant 0 : index
    %19 = vector.load %arg6[%c0_9, %c0_10] : memref<32x32xbf16, #tpu.memory_space<vmem>>, vector<32x32xbf16>
    %cst = arith.constant dense<0.000000e+00> : vector<16x32xf32>
    %20 = tpu.matmul %18, %19, %cst {dimension_numbers = #tpu.dot_dimension_numbers<[1], [0], [0], [1], [0, 0, 1, 1], [], []>} : vector<16x32xbf16>, vector<32x32xbf16>, vector<16x32xf32> -> vector<16x32xf32>
    %c0_11 = arith.constant 0 : index
    %c0_12 = arith.constant 0 : index
    %21 = vector.load %arg7[%c0_11, %c0_12] : memref<1x32xf32, #tpu.memory_space<vmem>>, vector<1x32xf32>
    %22 = vector.broadcast %21 : vector<1x32xf32> to vector<16x32xf32>
    %23 = arith.addf %20, %22 : vector<16x32xf32>
    %24 = arith.truncf %23 : vector<16x32xf32> to vector<16x32xbf16>
    %25 = tpu.iota {dimensions = array<i32: 0>} : vector<16x32xi32>
    %26 = vector.broadcast %4 : i32 to vector<16x32xi32>
    %27 = arith.addi %26, %25 : vector<16x32xi32>
    %28 = tpu.iota {dimensions = array<i32: 1>} : vector<16x32xi32>
    %29 = arith.cmpi sle, %28, %27 : vector<16x32xi32>
    %cst_13 = arith.constant 0.000000e+00 : f32
    %cst_14 = arith.constant -3.40282347E+38 : f32
    %30 = vector.broadcast %cst_13 : f32 to vector<16x32xf32>
    %31 = vector.broadcast %cst_14 : f32 to vector<16x32xf32>
    %32 = arith.select %29, %30, %31 : vector<16x32xi1>, vector<16x32xf32>
    %33 = vector.extract_strided_slice %24 {offsets = [0, 0], sizes = [16, 8], strides = [1, 1]} : vector<16x32xbf16> to vector<16x8xbf16>
    %c0_15 = arith.constant 0 : index
    %c0_16 = arith.constant 0 : index
    %34 = vector.load %arg24[%c0_15, %c0_16] : memref<32x32xbf16, #tpu.memory_space<vmem>>, vector<32x8xbf16>
    %c0_17 = arith.constant 0 : index
    %c0_18 = arith.constant 0 : index
    %35 = vector.load %arg25[%c0_17, %c0_18] : memref<32x32xbf16, #tpu.memory_space<vmem>>, vector<32x8xbf16>
    %cst_19 = arith.constant dense<0.000000e+00> : vector<16x32xf32>
    %36 = tpu.matmul %33, %34, %cst_19 {dimension_numbers = #tpu.dot_dimension_numbers<[1], [1], [0], [0], [0, 0, 1, 0], [], []>} : vector<16x8xbf16>, vector<32x8xbf16>, vector<16x32xf32> -> vector<16x32xf32>
    %37 = arith.addf %36, %32 : vector<16x32xf32>
    %cst_20 = arith.constant dense<0xFF800000> : vector<16xf32>
    %38 = vector.multi_reduction <maximumf>, %37, %cst_20 [1] : vector<16x32xf32> to vector<16xf32>
    %39 = vector.shape_cast %38 : vector<16xf32> to vector<16x1xf32>
    %40 = vector.broadcast %39 : vector<16x1xf32> to vector<16x32xf32>
    %41 = arith.subf %37, %40 : vector<16x32xf32>
    %42 = math.exp %41 : vector<16x32xf32>
    %cst_21 = arith.constant dense<0.000000e+00> : vector<16xf32>
    %43 = vector.multi_reduction <add>, %42, %cst_21 [1] : vector<16x32xf32> to vector<16xf32>
    %44 = vector.shape_cast %43 : vector<16xf32> to vector<16x1xf32>
    %45 = tpu.reciprocal %44 {approx = true} : vector<16x1xf32> -> vector<16x1xf32>
    %46 = arith.mulf %44, %45 : vector<16x1xf32>
    %cst_22 = arith.constant 2.000000e+00 : f32
    %47 = vector.broadcast %cst_22 : f32 to vector<16x1xf32>
    %48 = arith.subf %47, %46 : vector<16x1xf32>
    %49 = arith.mulf %45, %48 : vector<16x1xf32>
    %50 = vector.broadcast %49 : vector<16x1xf32> to vector<16x32xf32>
    %51 = arith.mulf %42, %50 : vector<16x32xf32>
    %52 = arith.truncf %51 : vector<16x32xf32> to vector<16x32xbf16>
    %cst_23 = arith.constant dense<0.000000e+00> : vector<16x8xf32>
    %53 = tpu.matmul %52, %35, %cst_23 {dimension_numbers = #tpu.dot_dimension_numbers<[1], [0], [0], [1], [0, 0, 1, 1], [], []>} : vector<16x32xbf16>, vector<32x8xbf16>, vector<16x8xf32> -> vector<16x8xf32>
    %54 = arith.truncf %53 : vector<16x8xf32> to vector<16x8xbf16>
    %c0_24 = arith.constant 0 : index
    %c0_25 = arith.constant 0 : index
    %55 = vector.load %arg26[%c0_24, %c0_25] : memref<16x32xbf16, #tpu.memory_space<vmem>>, vector<16x8xbf16>
    tpu.vector_store %arg26[%c0_24, %c0_25], %54 {strides = array<i32>} : memref<16x32xbf16, #tpu.memory_space<vmem>>, vector<16x8xbf16>,
    %56 = vector.extract_strided_slice %24 {offsets = [0, 8], sizes = [16, 8], strides = [1, 1]} : vector<16x32xbf16> to vector<16x8xbf16>
    %c0_26 = arith.constant 0 : index
    %c8 = arith.constant 8 : index
    %57 = vector.load %arg24[%c0_26, %c8] : memref<32x32xbf16, #tpu.memory_space<vmem>>, vector<32x8xbf16>
    %c0_27 = arith.constant 0 : index
    %c8_28 = arith.constant 8 : index
    %58 = vector.load %arg25[%c0_27, %c8_28] : memref<32x32xbf16, #tpu.memory_space<vmem>>, vector<32x8xbf16>
    %cst_29 = arith.constant dense<0.000000e+00> : vector<16x32xf32>
    %59 = tpu.matmul %56, %57, %cst_29 {dimension_numbers = #tpu.dot_dimension_numbers<[1], [1], [0], [0], [0, 0, 1, 0], [], []>} : vector<16x8xbf16>, vector<32x8xbf16>, vector<16x32xf32> -> vector<16x32xf32>
    %60 = arith.addf %59, %32 : vector<16x32xf32>
    %cst_30 = arith.constant dense<0xFF800000> : vector<16xf32>
    %61 = vector.multi_reduction <maximumf>, %60, %cst_30 [1] : vector<16x32xf32> to vector<16xf32>
    %62 = vector.shape_cast %61 : vector<16xf32> to vector<16x1xf32>
    %63 = vector.broadcast %62 : vector<16x1xf32> to vector<16x32xf32>
    %64 = arith.subf %60, %63 : vector<16x32xf32>
    %65 = math.exp %64 : vector<16x32xf32>
    %cst_31 = arith.constant dense<0.000000e+00> : vector<16xf32>
    %66 = vector.multi_reduction <add>, %65, %cst_31 [1] : vector<16x32xf32> to vector<16xf32>
    %67 = vector.shape_cast %66 : vector<16xf32> to vector<16x1xf32>
    %68 = tpu.reciprocal %67 {approx = true} : vector<16x1xf32> -> vector<16x1xf32>
    %69 = arith.mulf %67, %68 : vector<16x1xf32>
    %cst_32 = arith.constant 2.000000e+00 : f32
    %70 = vector.broadcast %cst_32 : f32 to vector<16x1xf32>
    %71 = arith.subf %70, %69 : vector<16x1xf32>
    %72 = arith.mulf %68, %71 : vector<16x1xf32>
    %73 = vector.broadcast %72 : vector<16x1xf32> to vector<16x32xf32>
    %74 = arith.mulf %65, %73 : vector<16x32xf32>
    %75 = arith.truncf %74 : vector<16x32xf32> to vector<16x32xbf16>
    %cst_33 = arith.constant dense<0.000000e+00> : vector<16x8xf32>
    %76 = tpu.matmul %75, %58, %cst_33 {dimension_numbers = #tpu.dot_dimension_numbers<[1], [0], [0], [1], [0, 0, 1, 1], [], []>} : vector<16x32xbf16>, vector<32x8xbf16>, vector<16x8xf32> -> vector<16x8xf32>
    %77 = arith.truncf %76 : vector<16x8xf32> to vector<16x8xbf16>
    %c0_34 = arith.constant 0 : index
    %c8_35 = arith.constant 8 : index
    %78 = vector.load %arg26[%c0_34, %c8_35] : memref<16x32xbf16, #tpu.memory_space<vmem>>, vector<16x8xbf16>
    tpu.vector_store %arg26[%c0_34, %c8_35], %77 {strides = array<i32>} : memref<16x32xbf16, #tpu.memory_space<vmem>>, vector<16x8xbf16>,
    %79 = vector.extract_strided_slice %24 {offsets = [0, 16], sizes = [16, 8], strides = [1, 1]} : vector<16x32xbf16> to vector<16x8xbf16>
    %c0_36 = arith.constant 0 : index
    %c16 = arith.constant 16 : index
    %80 = vector.load %arg24[%c0_36, %c16] : memref<32x32xbf16, #tpu.memory_space<vmem>>, vector<32x8xbf16>
    %c0_37 = arith.constant 0 : index
    %c16_38 = arith.constant 16 : index
    %81 = vector.load %arg25[%c0_37, %c16_38] : memref<32x32xbf16, #tpu.memory_space<vmem>>, vector<32x8xbf16>
    %cst_39 = arith.constant dense<0.000000e+00> : vector<16x32xf32>
    %82 = tpu.matmul %79, %80, %cst_39 {dimension_numbers = #tpu.dot_dimension_numbers<[1], [1], [0], [0], [0, 0, 1, 0], [], []>} : vector<16x8xbf16>, vector<32x8xbf16>, vector<16x32xf32> -> vector<16x32xf32>
    %83 = arith.addf %82, %32 : vector<16x32xf32>
    %cst_40 = arith.constant dense<0xFF800000> : vector<16xf32>
    %84 = vector.multi_reduction <maximumf>, %83, %cst_40 [1] : vector<16x32xf32> to vector<16xf32>
    %85 = vector.shape_cast %84 : vector<16xf32> to vector<16x1xf32>
    %86 = vector.broadcast %85 : vector<16x1xf32> to vector<16x32xf32>
    %87 = arith.subf %83, %86 : vector<16x32xf32>
    %88 = math.exp %87 : vector<16x32xf32>
    %cst_41 = arith.constant dense<0.000000e+00> : vector<16xf32>
    %89 = vector.multi_reduction <add>, %88, %cst_41 [1] : vector<16x32xf32> to vector<16xf32>
    %90 = vector.shape_cast %89 : vector<16xf32> to vector<16x1xf32>
    %91 = tpu.reciprocal %90 {approx = true} : vector<16x1xf32> -> vector<16x1xf32>
    %92 = arith.mulf %90, %91 : vector<16x1xf32>
    %cst_42 = arith.constant 2.000000e+00 : f32
    %93 = vector.broadcast %cst_42 : f32 to vector<16x1xf32>
    %94 = arith.subf %93, %92 : vector<16x1xf32>
    %95 = arith.mulf %91, %94 : vector<16x1xf32>
    %96 = vector.broadcast %95 : vector<16x1xf32> to vector<16x32xf32>
    %97 = arith.mulf %88, %96 : vector<16x32xf32>
    %98 = arith.truncf %97 : vector<16x32xf32> to vector<16x32xbf16>
    %cst_43 = arith.constant dense<0.000000e+00> : vector<16x8xf32>
    %99 = tpu.matmul %98, %81, %cst_43 {dimension_numbers = #tpu.dot_dimension_numbers<[1], [0], [0], [1], [0, 0, 1, 1], [], []>} : vector<16x32xbf16>, vector<32x8xbf16>, vector<16x8xf32> -> vector<16x8xf32>
    %100 = arith.truncf %99 : vector<16x8xf32> to vector<16x8xbf16>
    %c0_44 = arith.constant 0 : index
    %c16_45 = arith.constant 16 : index
    %101 = vector.load %arg26[%c0_44, %c16_45] : memref<16x32xbf16, #tpu.memory_space<vmem>>, vector<16x8xbf16>
    tpu.vector_store %arg26[%c0_44, %c16_45], %100 {strides = array<i32>} : memref<16x32xbf16, #tpu.memory_space<vmem>>, vector<16x8xbf16>,
    %102 = vector.extract_strided_slice %24 {offsets = [0, 24], sizes = [16, 8], strides = [1, 1]} : vector<16x32xbf16> to vector<16x8xbf16>
    %c0_46 = arith.constant 0 : index
    %c24 = arith.constant 24 : index
    %103 = vector.load %arg24[%c0_46, %c24] : memref<32x32xbf16, #tpu.memory_space<vmem>>, vector<32x8xbf16>
    %c0_47 = arith.constant 0 : index
    %c24_48 = arith.constant 24 : index
    %104 = vector.load %arg25[%c0_47, %c24_48] : memref<32x32xbf16, #tpu.memory_space<vmem>>, vector<32x8xbf16>
    %cst_49 = arith.constant dense<0.000000e+00> : vector<16x32xf32>
    %105 = tpu.matmul %102, %103, %cst_49 {dimension_numbers = #tpu.dot_dimension_numbers<[1], [1], [0], [0], [0, 0, 1, 0], [], []>} : vector<16x8xbf16>, vector<32x8xbf16>, vector<16x32xf32> -> vector<16x32xf32>
    %106 = arith.addf %105, %32 : vector<16x32xf32>
    %cst_50 = arith.constant dense<0xFF800000> : vector<16xf32>
    %107 = vector.multi_reduction <maximumf>, %106, %cst_50 [1] : vector<16x32xf32> to vector<16xf32>
    %108 = vector.shape_cast %107 : vector<16xf32> to vector<16x1xf32>
    %109 = vector.broadcast %108 : vector<16x1xf32> to vector<16x32xf32>
    %110 = arith.subf %106, %109 : vector<16x32xf32>
    %111 = math.exp %110 : vector<16x32xf32>
    %cst_51 = arith.constant dense<0.000000e+00> : vector<16xf32>
    %112 = vector.multi_reduction <add>, %111, %cst_51 [1] : vector<16x32xf32> to vector<16xf32>
    %113 = vector.shape_cast %112 : vector<16xf32> to vector<16x1xf32>
    %114 = tpu.reciprocal %113 {approx = true} : vector<16x1xf32> -> vector<16x1xf32>
    %115 = arith.mulf %113, %114 : vector<16x1xf32>
    %cst_52 = arith.constant 2.000000e+00 : f32
    %116 = vector.broadcast %cst_52 : f32 to vector<16x1xf32>
    %117 = arith.subf %116, %115 : vector<16x1xf32>
    %118 = arith.mulf %114, %117 : vector<16x1xf32>
    %119 = vector.broadcast %118 : vector<16x1xf32> to vector<16x32xf32>
    %120 = arith.mulf %111, %119 : vector<16x32xf32>
    %121 = arith.truncf %120 : vector<16x32xf32> to vector<16x32xbf16>
    %cst_53 = arith.constant dense<0.000000e+00> : vector<16x8xf32>
    %122 = tpu.matmul %121, %104, %cst_53 {dimension_numbers = #tpu.dot_dimension_numbers<[1], [0], [0], [1], [0, 0, 1, 1], [], []>} : vector<16x32xbf16>, vector<32x8xbf16>, vector<16x8xf32> -> vector<16x8xf32>
    %123 = arith.truncf %122 : vector<16x8xf32> to vector<16x8xbf16>
    %c0_54 = arith.constant 0 : index
    %c24_55 = arith.constant 24 : index
    %124 = vector.load %arg26[%c0_54, %c24_55] : memref<16x32xbf16, #tpu.memory_space<vmem>>, vector<16x8xbf16>
    tpu.vector_store %arg26[%c0_54, %c24_55], %123 {strides = array<i32>} : memref<16x32xbf16, #tpu.memory_space<vmem>>, vector<16x8xbf16>,
    %c0_56 = arith.constant 0 : index
    %c0_57 = arith.constant 0 : index
    %125 = vector.load %arg26[%c0_56, %c0_57] : memref<16x32xbf16, #tpu.memory_space<vmem>>, vector<16x32xbf16>
    %c0_58 = arith.constant 0 : index
    %c0_59 = arith.constant 0 : index
    %126 = vector.load %arg12[%c0_58, %c0_59] : memref<32x32xbf16, #tpu.memory_space<vmem>>, vector<32x32xbf16>
    %cst_60 = arith.constant dense<0.000000e+00> : vector<16x32xf32>
    %127 = tpu.matmul %125, %126, %cst_60 {dimension_numbers = #tpu.dot_dimension_numbers<[1], [0], [0], [1], [0, 0, 1, 1], [], []>} : vector<16x32xbf16>, vector<32x32xbf16>, vector<16x32xf32> -> vector<16x32xf32>
    %c0_61 = arith.constant 0 : index
    %c0_62 = arith.constant 0 : index
    %128 = vector.load %arg13[%c0_61, %c0_62] : memref<1x32xf32, #tpu.memory_space<vmem>>, vector<1x32xf32>
    %129 = vector.broadcast %128 : vector<1x32xf32> to vector<16x32xf32>
    %130 = arith.addf %127, %129 : vector<16x32xf32>
    %c0_63 = arith.constant 0 : index
    %c0_64 = arith.constant 0 : index
    %c0_65 = arith.constant 0 : index
    %131 = vector.load %arg3[%c0_63, %c0_64, %c0_65] : memref<1x16x32xf32, #tpu.memory_space<vmem>>, vector<1x16x32xf32>
    %132 = vector.shape_cast %131 : vector<1x16x32xf32> to vector<16x32xf32>
    %133 = arith.addf %132, %130 : vector<16x32xf32>
    %c0_66 = arith.constant 0 : index
    %c0_67 = arith.constant 0 : index
    %134 = vector.load %arg14[%c0_66, %c0_67] : memref<1x32xf32, #tpu.memory_space<vmem>>, vector<1x32xf32>
    %c0_68 = arith.constant 0 : index
    %c0_69 = arith.constant 0 : index
    %135 = vector.load %arg15[%c0_68, %c0_69] : memref<1x32xf32, #tpu.memory_space<vmem>>, vector<1x32xf32>
    %cst_70 = arith.constant dense<0.000000e+00> : vector<16xf32>
    %136 = vector.multi_reduction <add>, %133, %cst_70 [1] : vector<16x32xf32> to vector<16xf32>
    %137 = vector.shape_cast %136 : vector<16xf32> to vector<16x1xf32>
    %cst_71 = arith.constant 3.200000e+01 : f32
    %138 = vector.broadcast %cst_71 : f32 to vector<16x1xf32>
    %139 = arith.divf %137, %138 : vector<16x1xf32>
    %140 = vector.broadcast %139 : vector<16x1xf32> to vector<16x32xf32>
    %141 = arith.subf %133, %140 : vector<16x32xf32>
    %142 = arith.mulf %141, %141 : vector<16x32xf32>
    %cst_72 = arith.constant dense<0.000000e+00> : vector<16xf32>
    %143 = vector.multi_reduction <add>, %142, %cst_72 [1] : vector<16x32xf32> to vector<16xf32>
    %144 = vector.shape_cast %143 : vector<16xf32> to vector<16x1xf32>
    %cst_73 = arith.constant 3.200000e+01 : f32
    %145 = vector.broadcast %cst_73 : f32 to vector<16x1xf32>
    %146 = arith.divf %144, %145 : vector<16x1xf32>
    %147 = vector.broadcast %139 : vector<16x1xf32> to vector<16x32xf32>
    %148 = arith.subf %133, %147 : vector<16x32xf32>
    %cst_74 = arith.constant 9.99999974E-6 : f32
    %149 = vector.broadcast %cst_74 : f32 to vector<16x1xf32>
    %150 = arith.addf %146, %149 : vector<16x1xf32>
    %151 = math.rsqrt %150 : vector<16x1xf32>
    %152 = vector.broadcast %151 : vector<16x1xf32> to vector<16x32xf32>
    %153 = arith.mulf %148, %152 : vector<16x32xf32>
    %154 = vector.broadcast %134 : vector<1x32xf32> to vector<16x32xf32>
    %155 = arith.mulf %153, %154 : vector<16x32xf32>
    %156 = vector.broadcast %135 : vector<1x32xf32> to vector<16x32xf32>
    %157 = arith.addf %155, %156 : vector<16x32xf32>
    %158 = arith.truncf %157 : vector<16x32xf32> to vector<16x32xbf16>
    %c0_75 = arith.constant 0 : index
    %c0_76 = arith.constant 0 : index
    %159 = vector.load %arg16[%c0_75, %c0_76] : memref<32x128xbf16, #tpu.memory_space<vmem>>, vector<32x128xbf16>
    %cst_77 = arith.constant dense<0.000000e+00> : vector<16x128xf32>
    %160 = tpu.matmul %158, %159, %cst_77 {dimension_numbers = #tpu.dot_dimension_numbers<[1], [0], [0], [1], [0, 0, 1, 1], [], []>} : vector<16x32xbf16>, vector<32x128xbf16>, vector<16x128xf32> -> vector<16x128xf32>
    %c0_78 = arith.constant 0 : index
    %c0_79 = arith.constant 0 : index
    %161 = vector.load %arg17[%c0_78, %c0_79] : memref<1x128xf32, #tpu.memory_space<vmem>>, vector<1x128xf32>
    %162 = vector.broadcast %161 : vector<1x128xf32> to vector<16x128xf32>
    %163 = arith.addf %160, %162 : vector<16x128xf32>
    %cst_80 = arith.constant 5.000000e-01 : f32
    %164 = vector.broadcast %cst_80 : f32 to vector<16x128xf32>
    %165 = arith.mulf %164, %163 : vector<16x128xf32>
    %cst_81 = arith.constant 0.707106769 : f32
    %166 = vector.broadcast %cst_81 : f32 to vector<16x128xf32>
    %167 = arith.mulf %163, %166 : vector<16x128xf32>
    %cst_82 = arith.constant 0.000000e+00 : f32
    %168 = vector.broadcast %cst_82 : f32 to vector<16x128xf32>
    %169 = arith.cmpf oge, %167, %168 : vector<16x128xf32>
    %cst_83 = arith.constant 1.000000e+00 : f32
    %cst_84 = arith.constant -1.000000e+00 : f32
    %170 = vector.broadcast %cst_83 : f32 to vector<16x128xf32>
    %171 = vector.broadcast %cst_84 : f32 to vector<16x128xf32>
    %172 = arith.select %169, %170, %171 : vector<16x128xi1>, vector<16x128xf32>
    %173 = math.absf %167 : vector<16x128xf32>
    %cst_85 = arith.constant 0.327591091 : f32
    %174 = vector.broadcast %cst_85 : f32 to vector<16x128xf32>
    %175 = arith.mulf %174, %173 : vector<16x128xf32>
    %cst_86 = arith.constant 1.000000e+00 : f32
    %176 = vector.broadcast %cst_86 : f32 to vector<16x128xf32>
    %177 = arith.addf %176, %175 : vector<16x128xf32>
    %178 = tpu.reciprocal %177 {approx = true} : vector<16x128xf32> -> vector<16x128xf32>
    %cst_87 = arith.constant 1.06140542 : f32
    %179 = vector.broadcast %cst_87 : f32 to vector<16x128xf32>
    %180 = arith.mulf %179, %178 : vector<16x128xf32>
    %cst_88 = arith.constant -1.45315206 : f32
    %181 = vector.broadcast %cst_88 : f32 to vector<16x128xf32>
    %182 = arith.addf %180, %181 : vector<16x128xf32>
    %183 = arith.mulf %182, %178 : vector<16x128xf32>
    %cst_89 = arith.constant 1.42141378 : f32
    %184 = vector.broadcast %cst_89 : f32 to vector<16x128xf32>
    %185 = arith.addf %183, %184 : vector<16x128xf32>
    %186 = arith.mulf %185, %178 : vector<16x128xf32>
    %cst_90 = arith.constant -0.284496725 : f32
    %187 = vector.broadcast %cst_90 : f32 to vector<16x128xf32>
    %188 = arith.addf %186, %187 : vector<16x128xf32>
    %189 = arith.mulf %188, %178 : vector<16x128xf32>
    %cst_91 = arith.constant 0.254829586 : f32
    %190 = vector.broadcast %cst_91 : f32 to vector<16x128xf32>
    %191 = arith.addf %189, %190 : vector<16x128xf32>
    %192 = arith.mulf %191, %178 : vector<16x128xf32>
    %cst_92 = arith.constant 0.000000e+00 : f32
    %193 = vector.broadcast %cst_92 : f32 to vector<16x128xf32>
    %194 = arith.subf %193, %173 : vector<16x128xf32>
    %195 = arith.mulf %194, %173 : vector<16x128xf32>
    %196 = math.exp %195 : vector<16x128xf32>
    %197 = arith.mulf %192, %196 : vector<16x128xf32>
    %cst_93 = arith.constant 1.000000e+00 : f32
    %198 = vector.broadcast %cst_93 : f32 to vector<16x128xf32>
    %199 = arith.subf %198, %197 : vector<16x128xf32>
    %200 = arith.mulf %172, %199 : vector<16x128xf32>
    %cst_94 = arith.constant 1.000000e+00 : f32
    %201 = vector.broadcast %cst_94 : f32 to vector<16x128xf32>
    %202 = arith.addf %201, %200 : vector<16x128xf32>
    %203 = arith.mulf %165, %202 : vector<16x128xf32>
    %204 = arith.truncf %203 : vector<16x128xf32> to vector<16x128xbf16>
    %c0_95 = arith.constant 0 : index
    %c0_96 = arith.constant 0 : index
    %205 = vector.load %arg18[%c0_95, %c0_96] : memref<128x32xbf16, #tpu.memory_space<vmem>>, vector<128x32xbf16>
    %cst_97 = arith.constant dense<0.000000e+00> : vector<16x32xf32>
    %206 = tpu.matmul %204, %205, %cst_97 {dimension_numbers = #tpu.dot_dimension_numbers<[1], [0], [0], [1], [0, 0, 1, 1], [], []>} : vector<16x128xbf16>, vector<128x32xbf16>, vector<16x32xf32> -> vector<16x32xf32>
    %c0_98 = arith.constant 0 : index
    %c0_99 = arith.constant 0 : index
    %207 = vector.load %arg19[%c0_98, %c0_99] : memref<1x32xf32, #tpu.memory_space<vmem>>, vector<1x32xf32>
    %208 = vector.broadcast %207 : vector<1x32xf32> to vector<16x32xf32>
    %209 = arith.addf %206, %208 : vector<16x32xf32>
    %210 = arith.addf %133, %209 : vector<16x32xf32>
    %c0_100 = arith.constant 0 : index
    %c0_101 = arith.constant 0 : index
    %c0_102 = arith.constant 0 : index
    %211 = vector.load %arg20[%c0_100, %c0_101, %c0_102] : memref<1x16x32xf32, #tpu.memory_space<vmem>>, vector<1x16x32xf32>
    %212 = vector.shape_cast %211 : vector<1x16x32xf32> to vector<16x32xf32>
    %213 = vector.shape_cast %210 : vector<16x32xf32> to vector<1x16x32xf32>
    tpu.vector_store %arg20[%c0_100, %c0_101, %c0_102], %213 {strides = array<i32>} : memref<1x16x32xf32, #tpu.memory_space<vmem>>, vector<1x16x32xf32>,
    return
  }
  func.func @transform_0(%arg0: i32, %arg1: i32) -> (i32, i32, i32) {
    %c0_i32 = arith.constant 0 : i32
    %c0_i32_0 = arith.constant 0 : i32
    %c0_i32_1 = arith.constant 0 : i32
    return %arg0, %c0_i32, %c0_i32_0 : i32, i32, i32
  }
  func.func @transform_1(%arg0: i32, %arg1: i32) -> (i32, i32, i32) {
    %c0_i32 = arith.constant 0 : i32
    %c0_i32_0 = arith.constant 0 : i32
    return %arg0, %arg1, %c0_i32 : i32, i32, i32
  }
  func.func @transform_2(%arg0: i32, %arg1: i32) -> (i32, i32) {
    %c0_i32 = arith.constant 0 : i32
    %c0_i32_0 = arith.constant 0 : i32
    %c0_i32_1 = arith.constant 0 : i32
    return %c0_i32, %c0_i32_0 : i32, i32
  }
  func.func @transform_3(%arg0: i32, %arg1: i32) -> (i32, i32) {
    %c0_i32 = arith.constant 0 : i32
    %c0_i32_0 = arith.constant 0 : i32
    %c0_i32_1 = arith.constant 0 : i32
    return %c0_i32, %c0_i32_0 : i32, i32
  }
  func.func @transform_4(%arg0: i32, %arg1: i32) -> (i32, i32) {
    %c0_i32 = arith.constant 0 : i32
    %c0_i32_0 = arith.constant 0 : i32
    %c0_i32_1 = arith.constant 0 : i32
    return %c0_i32, %c0_i32_0 : i32, i32
  }
  func.func @transform_5(%arg0: i32, %arg1: i32) -> (i32, i32) {
    %c0_i32 = arith.constant 0 : i32
    %c0_i32_0 = arith.constant 0 : i32
    %c0_i32_1 = arith.constant 0 : i32
    return %c0_i32, %c0_i32_0 : i32, i32
  }
  func.func @transform_6(%arg0: i32, %arg1: i32) -> (i32, i32) {
    %c0_i32 = arith.constant 0 : i32
    %c0_i32_0 = arith.constant 0 : i32
    %c0_i32_1 = arith.constant 0 : i32
    return %c0_i32, %c0_i32_0 : i32, i32
  }
  func.func @transform_7(%arg0: i32, %arg1: i32) -> (i32, i32) {
    %c0_i32 = arith.constant 0 : i32
    %c0_i32_0 = arith.constant 0 : i32
    %c0_i32_1 = arith.constant 0 : i32
    return %c0_i32, %c0_i32_0 : i32, i32
  }
  func.func @transform_8(%arg0: i32, %arg1: i32) -> (i32, i32) {
    %c0_i32 = arith.constant 0 : i32
    %c0_i32_0 = arith.constant 0 : i32
    %c0_i32_1 = arith.constant 0 : i32
    return %c0_i32, %c0_i32_0 : i32, i32
  }
  func.func @transform_9(%arg0: i32, %arg1: i32) -> (i32, i32) {
    %c0_i32 = arith.constant 0 : i32
    %c0_i32_0 = arith.constant 0 : i32
    %c0_i32_1 = arith.constant 0 : i32
    return %c0_i32, %c0_i32_0 : i32, i32
  }
  func.func @transform_10(%arg0: i32, %arg1: i32) -> (i32, i32) {
    %c0_i32 = arith.constant 0 : i32
    %c0_i32_0 = arith.constant 0 : i32
    %c0_i32_1 = arith.constant 0 : i32
    return %c0_i32, %c0_i32_0 : i32, i32
  }
  func.func @transform_11(%arg0: i32, %arg1: i32) -> (i32, i32) {
    %c0_i32 = arith.constant 0 : i32
    %c0_i32_0 = arith.constant 0 : i32
    %c0_i32_1 = arith.constant 0 : i32
    return %c0_i32, %c0_i32_0 : i32, i32
  }
  func.func @transform_12(%arg0: i32, %arg1: i32) -> (i32, i32) {
    %c0_i32 = arith.constant 0 : i32
    %c0_i32_0 = arith.constant 0 : i32
    %c0_i32_1 = arith.constant 0 : i32
    return %c0_i32, %c0_i32_0 : i32, i32
  }
  func.func @transform_13(%arg0: i32, %arg1: i32) -> (i32, i32) {
    %c0_i32 = arith.constant 0 : i32
    %c0_i32_0 = arith.constant 0 : i32
    %c0_i32_1 = arith.constant 0 : i32
    return %c0_i32, %c0_i32_0 : i32, i32
  }
  func.func @transform_14(%arg0: i32, %arg1: i32) -> (i32, i32) {
    %c0_i32 = arith.constant 0 : i32
    %c0_i32_0 = arith.constant 0 : i32
    %c0_i32_1 = arith.constant 0 : i32
    return %c0_i32, %c0_i32_0 : i32, i32
  }
  func.func @transform_15(%arg0: i32, %arg1: i32) -> (i32, i32) {
    %c0_i32 = arith.constant 0 : i32
    %c0_i32_0 = arith.constant 0 : i32
    %c0_i32_1 = arith.constant 0 : i32
    return %c0_i32, %c0_i32_0 : i32, i32
  }
  func.func @transform_16(%arg0: i32, %arg1: i32) -> (i32, i32) {
    %c0_i32 = arith.constant 0 : i32
    %c0_i32_0 = arith.constant 0 : i32
    %c0_i32_1 = arith.constant 0 : i32
    return %c0_i32, %c0_i32_0 : i32, i32
  }
  func.func @transform_17(%arg0: i32, %arg1: i32) -> (i32, i32) {
    %c0_i32 = arith.constant 0 : i32
    %c0_i32_0 = arith.constant 0 : i32
    %c0_i32_1 = arith.constant 0 : i32
    return %c0_i32, %c0_i32_0 : i32, i32
  }
  func.func @transform_18(%arg0: i32, %arg1: i32) -> (i32, i32, i32) {
    %c0_i32 = arith.constant 0 : i32
    %c0_i32_0 = arith.constant 0 : i32
    return %arg0, %arg1, %c0_i32 : i32, i32, i32
  }
  func.func @transform_19(%arg0: i32, %arg1: i32) -> (i32, i32, i32) {
    %c0_i32 = arith.constant 0 : i32
    %c0_i32_0 = arith.constant 0 : i32
    return %arg0, %arg1, %c0_i32 : i32, i32, i32
  }
  func.func @transform_20(%arg0: i32, %arg1: i32) -> (i32, i32, i32) {
    %c0_i32 = arith.constant 0 : i32
    %c0_i32_0 = arith.constant 0 : i32
    return %arg0, %arg1, %c0_i32 : i32, i32, i32
  }
}

module attributes {stable_mosaic.version = 11 : i64} {
  func.func @decoder_layer_kernel(%arg0: i32, %arg1: i32, %arg2: memref<1x32x32xf32, #tpu.memory_space<vmem>>, %arg3: memref<1x16x32xf32, #tpu.memory_space<vmem>>, %arg4: memref<1x32xf32, #tpu.memory_space<vmem>>, %arg5: memref<1x32xf32, #tpu.memory_space<vmem>>, %arg6: memref<32x32xbf16, #tpu.memory_space<vmem>>, %arg7: memref<1x32xf32, #tpu.memory_space<vmem>>, %arg8: memref<32x32xbf16, #tpu.memory_space<vmem>>, %arg9: memref<1x32xf32, #tpu.memory_space<vmem>>, %arg10: memref<32x32xbf16, #tpu.memory_space<vmem>>, %arg11: memref<1x32xf32, #tpu.memory_space<vmem>>, %arg12: memref<32x32xbf16, #tpu.memory_space<vmem>>, %arg13: memref<1x32xf32, #tpu.memory_space<vmem>>, %arg14: memref<1x32xf32, #tpu.memory_space<vmem>>, %arg15: memref<1x32xf32, #tpu.memory_space<vmem>>, %arg16: memref<32x128xbf16, #tpu.memory_space<vmem>>, %arg17: memref<1x128xf32, #tpu.memory_space<vmem>>, %arg18: memref<128x32xbf16, #tpu.memory_space<vmem>>, %arg19: memref<1x32xf32, #tpu.memory_space<vmem>>, %arg20: memref<1x16x32xf32, #tpu.memory_space<vmem>>, %arg21: memref<1x16x32xf32, #tpu.memory_space<vmem>>, %arg22: memref<1x16x32xf32, #tpu.memory_space<vmem>>, %arg23: memref<32x32xbf16, #tpu.memory_space<vmem>>, %arg24: memref<32x32xbf16, #tpu.memory_space<vmem>>, %arg25: memref<32x32xbf16, #tpu.memory_space<vmem>>, %arg26: memref<16x32xbf16, #tpu.memory_space<vmem>>) attributes {dimension_semantics = [#tpu.dimension_semantics<parallel>, #tpu.dimension_semantics<arbitrary>], iteration_bounds = array<i64: 2, 2>, scalar_prefetch = 0 : i64, scratch_operands = 4 : i64, tpu.core_type = #tpu.core_type<tc>, window_params = [{transform_indices = @transform_0, window_bounds = array<i64: 1, 32, 32>}, {transform_indices = @transform_1, window_bounds = array<i64: 1, 16, 32>}, {pipeline_mode = #tpu.pipeline_mode<synchronous>, transform_indices = @transform_2, window_bounds = array<i64: 1, 32>}, {pipeline_mode = #tpu.pipeline_mode<synchronous>, transform_indices = @transform_3, window_bounds = array<i64: 1, 32>}, {pipeline_mode = #tpu.pipeline_mode<synchronous>, transform_indices = @transform_4, window_bounds = array<i64: 32, 32>}, {pipeline_mode = #tpu.pipeline_mode<synchronous>, transform_indices = @transform_5, window_bounds = array<i64: 1, 32>}, {pipeline_mode = #tpu.pipeline_mode<synchronous>, transform_indices = @transform_6, window_bounds = array<i64: 32, 32>}, {pipeline_mode = #tpu.pipeline_mode<synchronous>, transform_indices = @transform_7, window_bounds = array<i64: 1, 32>}, {pipeline_mode = #tpu.pipeline_mode<synchronous>, transform_indices = @transform_8, window_bounds = array<i64: 32, 32>}, {pipeline_mode = #tpu.pipeline_mode<synchronous>, transform_indices = @transform_9, window_bounds = array<i64: 1, 32>}, {pipeline_mode = #tpu.pipeline_mode<synchronous>, transform_indices = @transform_10, window_bounds = array<i64: 32, 32>}, {pipeline_mode = #tpu.pipeline_mode<synchronous>, transform_indices = @transform_11, window_bounds = array<i64: 1, 32>}, {pipeline_mode = #tpu.pipeline_mode<synchronous>, transform_indices = @transform_12, window_bounds = array<i64: 1, 32>}, {pipeline_mode = #tpu.pipeline_mode<synchronous>, transform_indices = @transform_13, window_bounds = array<i64: 1, 32>}, {pipeline_mode = #tpu.pipeline_mode<synchronous>, transform_indices = @transform_14, window_bounds = array<i64: 32, 128>}, {pipeline_mode = #tpu.pipeline_mode<synchronous>, transform_indices = @transform_15, window_bounds = array<i64: 1, 128>}, {pipeline_mode = #tpu.pipeline_mode<synchronous>, transform_indices = @transform_16, window_bounds = array<i64: 128, 32>}, {pipeline_mode = #tpu.pipeline_mode<synchronous>, transform_indices = @transform_17, window_bounds = array<i64: 1, 32>}, {transform_indices = @transform_18, window_bounds = array<i64: 1, 16, 32>}, {transform_indices = @transform_19, window_bounds = array<i64: 1, 16, 32>}, {transform_indices = @transform_20, window_bounds = array<i64: 1, 16, 32>}]} {
    %c0_i32 = arith.constant 0 : i32
    %0 = arith.cmpi eq, %arg1, %c0_i32 : i32
    %1 = arith.extui %0 : i1 to i32
    %c0_i32_0 = arith.constant 0 : i32
    %2 = arith.cmpi ne, %1, %c0_i32_0 : i32
    scf.if %2 {
      %c0_103 = arith.constant 0 : index
      %c0_104 = arith.constant 0 : index
      %c0_105 = arith.constant 0 : index
      %214 = vector.load %arg2[%c0_103, %c0_104, %c0_105] : memref<1x32x32xf32, #tpu.memory_space<vmem>>, vector<1x32x32xf32>
      %215 = vector.shape_cast %214 : vector<1x32x32xf32> to vector<32x32xf32>
      %c0_106 = arith.constant 0 : index
      %c0_107 = arith.constant 0 : index
      %216 = vector.load %arg4[%c0_106, %c0_107] : memref<1x32xf32, #tpu.memory_space<vmem>>, vector<1x32xf32>
      %c0_108 = arith.constant 0 : index
      %c0_109 = arith.constant 0 : index
      %217 = vector.load %arg5[%c0_108, %c0_109] : memref<1x32xf32, #tpu.memory_space<vmem>>, vector<1x32xf32>
      %cst_110 = arith.constant dense<0.000000e+00> : vector<32xf32>
      %218 = vector.multi_reduction <add>, %215, %cst_110 [1] : vector<32x32xf32> to vector<32xf32>
      %219 = vector.shape_cast %218 : vector<32xf32> to vector<32x1xf32>
      %cst_111 = arith.constant 3.200000e+01 : f32
      %220 = vector.broadcast %cst_111 : f32 to vector<32x1xf32>
      %221 = arith.divf %219, %220 : vector<32x1xf32>
      %222 = vector.broadcast %221 : vector<32x1xf32> to vector<32x32xf32>
      %223 = arith.subf %215, %222 : vector<32x32xf32>
      %224 = arith.mulf %223, %223 : vector<32x32xf32>
      %cst_112 = arith.constant dense<0.000000e+00> : vector<32xf32>
      %225 = vector.multi_reduction <add>, %224, %cst_112 [1] : vector<32x32xf32> to vector<32xf32>
      %226 = vector.shape_cast %225 : vector<32xf32> to vector<32x1xf32>
      %cst_113 = arith.constant 3.200000e+01 : f32
      %227 = vector.broadcast %cst_113 : f32 to vector<32x1xf32>
      %228 = arith.divf %226, %227 : vector<32x1xf32>
      %229 = vector.broadcast %221 : vector<32x1xf32> to vector<32x32xf32>
      %230 = arith.subf %215, %229 : vector<32x32xf32>
      %cst_114 = arith.constant 9.99999974E-6 : f32
      %231 = vector.broadcast %cst_114 : f32 to vector<32x1xf32>
      %232 = arith.addf %228, %231 : vector<32x1xf32>
      %233 = math.rsqrt %232 : vector<32x1xf32>
      %234 = vector.broadcast %233 : vector<32x1xf32> to vector<32x32xf32>
      %235 = arith.mulf %230, %234 : vector<32x32xf32>
      %236 = vector.broadcast %216 : vector<1x32xf32> to vector<32x32xf32>
      %237 = arith.mulf %235, %236 : vector<32x32xf32>
      %238 = vector.broadcast %217 : vector<1x32xf32> to vector<32x32xf32>
      %239 = arith.addf %237, %238 : vector<32x32xf32>
      %240 = arith.truncf %239 : vector<32x32xf32> to vector<32x32xbf16>
      %c0_115 = arith.constant 0 : index
      %c0_116 = arith.constant 0 : index
      %241 = vector.load %arg23[%c0_115, %c0_116] : memref<32x32xbf16, #tpu.memory_space<vmem>>, vector<32x32xbf16>
      tpu.vector_store %arg23[%c0_115, %c0_116], %240 {strides = array<i32>} : memref<32x32xbf16, #tpu.memory_space<vmem>>, vector<32x32xbf16>,
      %c0_117 = arith.constant 0 : index
      %c0_118 = arith.constant 0 : index
      %242 = vector.load %arg8[%c0_117, %c0_118] : memref<32x32xbf16, #tpu.memory_space<vmem>>, vector<32x32xbf16>
      %cst_119 = arith.constant dense<0.000000e+00> : vector<32x32xf32>
      %243 = tpu.matmul %240, %242, %cst_119 {dimension_numbers = #tpu.dot_dimension_numbers<[1], [0], [0], [1], [0, 0, 1, 1], [], []>} : vector<32x32xbf16>, vector<32x32xbf16>, vector<32x32xf32> -> vector<32x32xf32>
      %c0_120 = arith.constant 0 : index
      %c0_121 = arith.constant 0 : index
      %244 = vector.load %arg9[%c0_120, %c0_121] : memref<1x32xf32, #tpu.memory_space<vmem>>, vector<1x32xf32>
      %245 = vector.broadcast %244 : vector<1x32xf32> to vector<32x32xf32>
      %246 = arith.addf %243, %245 : vector<32x32xf32>
      %c0_122 = arith.constant 0 : index
      %c0_123 = arith.constant 0 : index
      %247 = vector.load %arg10[%c0_122, %c0_123] : memref<32x32xbf16, #tpu.memory_space<vmem>>, vector<32x32xbf16>
      %cst_124 = arith.constant dense<0.000000e+00> : vector<32x32xf32>
      %248 = tpu.matmul %240, %247, %cst_124 {dimension_numbers = #tpu.dot_dimension_numbers<[1], [0], [0], [1], [0, 0, 1, 1], [], []>} : vector<32x32xbf16>, vector<32x32xbf16>, vector<32x32xf32> -> vector<32x32xf32>
      %c0_125 = arith.constant 0 : index
      %c0_126 = arith.constant 0 : index
      %249 = vector.load %arg11[%c0_125, %c0_126] : memref<1x32xf32, #tpu.memory_space<vmem>>, vector<1x32xf32>
      %250 = vector.broadcast %249 : vector<1x32xf32> to vector<32x32xf32>
      %251 = arith.addf %248, %250 : vector<32x32xf32>
      %252 = arith.truncf %246 : vector<32x32xf32> to vector<32x32xbf16>
      %c0_127 = arith.constant 0 : index
      %c0_128 = arith.constant 0 : index
      %253 = vector.load %arg24[%c0_127, %c0_128] : memref<32x32xbf16, #tpu.memory_space<vmem>>, vector<32x32xbf16>
      tpu.vector_store %arg24[%c0_127, %c0_128], %252 {strides = array<i32>} : memref<32x32xbf16, #tpu.memory_space<vmem>>, vector<32x32xbf16>,
      %254 = arith.truncf %251 : vector<32x32xf32> to vector<32x32xbf16>
      %c0_129 = arith.constant 0 : index
      %c0_130 = arith.constant 0 : index
      %255 = vector.load %arg25[%c0_129, %c0_130] : memref<32x32xbf16, #tpu.memory_space<vmem>>, vector<32x32xbf16>
      tpu.vector_store %arg25[%c0_129, %c0_130], %254 {strides = array<i32>} : memref<32x32xbf16, #tpu.memory_space<vmem>>, vector<32x32xbf16>,
    } else {
    }
    %c16_i32 = arith.constant 16 : i32
    %3 = arith.muli %arg1, %c16_i32 : i32
    %4 = tpu.assume_multiple %3, 16 : i32
    %5 = arith.index_cast %4 : i32 to index
    %c0 = arith.constant 0 : index
    %6 = vector.load %arg24[%5, %c0] : memref<32x32xbf16, #tpu.memory_space<vmem>>, vector<16x32xbf16>
    %7 = arith.extf %6 : vector<16x32xbf16> to vector<16x32xf32>
    %c0_1 = arith.constant 0 : index
    %c0_2 = arith.constant 0 : index
    %c0_3 = arith.constant 0 : index
    %8 = vector.load %arg21[%c0_1, %c0_2, %c0_3] : memref<1x16x32xf32, #tpu.memory_space<vmem>>, vector<1x16x32xf32>
    %9 = vector.shape_cast %8 : vector<1x16x32xf32> to vector<16x32xf32>
    %10 = vector.shape_cast %7 : vector<16x32xf32> to vector<1x16x32xf32>
    tpu.vector_store %arg21[%c0_1, %c0_2, %c0_3], %10 {strides = array<i32>} : memref<1x16x32xf32, #tpu.memory_space<vmem>>, vector<1x16x32xf32>,
    %11 = arith.index_cast %4 : i32 to index
    %c0_4 = arith.constant 0 : index
    %12 = vector.load %arg25[%11, %c0_4] : memref<32x32xbf16, #tpu.memory_space<vmem>>, vector<16x32xbf16>
    %13 = arith.extf %12 : vector<16x32xbf16> to vector<16x32xf32>
    %c0_5 = arith.constant 0 : index
    %c0_6 = arith.constant 0 : index
    %c0_7 = arith.constant 0 : index
    %14 = vector.load %arg22[%c0_5, %c0_6, %c0_7] : memref<1x16x32xf32, #tpu.memory_space<vmem>>, vector<1x16x32xf32>
    %15 = vector.shape_cast %14 : vector<1x16x32xf32> to vector<16x32xf32>
    %16 = vector.shape_cast %13 : vector<16x32xf32> to vector<1x16x32xf32>
    tpu.vector_store %arg22[%c0_5, %c0_6, %c0_7], %16 {strides = array<i32>} : memref<1x16x32xf32, #tpu.memory_space<vmem>>, vector<1x16x32xf32>,
    %17 = arith.index_cast %4 : i32 to index
    %c0_8 = arith.constant 0 : index
    %18 = vector.load %arg23[%17, %c0_8] : memref<32x32xbf16, #tpu.memory_space<vmem>>, vector<16x32xbf16>
    %c0_9 = arith.constant 0 : index
    %c0_10 = arith.constant 0 : index
    %19 = vector.load %arg6[%c0_9, %c0_10] : memref<32x32xbf16, #tpu.memory_space<vmem>>, vector<32x32xbf16>
    %cst = arith.constant dense<0.000000e+00> : vector<16x32xf32>
    %20 = tpu.matmul %18, %19, %cst {dimension_numbers = #tpu.dot_dimension_numbers<[1], [0], [0], [1], [0, 0, 1, 1], [], []>} : vector<16x32xbf16>, vector<32x32xbf16>, vector<16x32xf32> -> vector<16x32xf32>
    %c0_11 = arith.constant 0 : index
    %c0_12 = arith.constant 0 : index
    %21 = vector.load %arg7[%c0_11, %c0_12] : memref<1x32xf32, #tpu.memory_space<vmem>>, vector<1x32xf32>
    %22 = vector.broadcast %21 : vector<1x32xf32> to vector<16x32xf32>
    %23 = arith.addf %20, %22 : vector<16x32xf32>
    %24 = arith.truncf %23 : vector<16x32xf32> to vector<16x32xbf16>
    %25 = tpu.iota {dimensions = array<i32: 0>} : vector<16x32xi32>
    %26 = vector.broadcast %4 : i32 to vector<16x32xi32>
    %27 = arith.addi %26, %25 : vector<16x32xi32>
    %28 = tpu.iota {dimensions = array<i32: 1>} : vector<16x32xi32>
    %29 = arith.cmpi sle, %28, %27 : vector<16x32xi32>
    %cst_13 = arith.constant 0.000000e+00 : f32
    %cst_14 = arith.constant -3.40282347E+38 : f32
    %30 = vector.broadcast %cst_13 : f32 to vector<16x32xf32>
    %31 = vector.broadcast %cst_14 : f32 to vector<16x32xf32>
    %32 = arith.select %29, %30, %31 : vector<16x32xi1>, vector<16x32xf32>
    %33 = vector.extract_strided_slice %24 {offsets = [0, 0], sizes = [16, 8], strides = [1, 1]} : vector<16x32xbf16> to vector<16x8xbf16>
    %c0_15 = arith.constant 0 : index
    %c0_16 = arith.constant 0 : index
    %34 = vector.load %arg24[%c0_15, %c0_16] : memref<32x32xbf16, #tpu.memory_space<vmem>>, vector<32x8xbf16>
    %c0_17 = arith.constant 0 : index
    %c0_18 = arith.constant 0 : index
    %35 = vector.load %arg25[%c0_17, %c0_18] : memref<32x32xbf16, #tpu.memory_space<vmem>>, vector<32x8xbf16>
    %cst_19 = arith.constant dense<0.000000e+00> : vector<16x32xf32>
    %36 = tpu.matmul %33, %34, %cst_19 {dimension_numbers = #tpu.dot_dimension_numbers<[1], [1], [0], [0], [0, 0, 1, 0], [], []>} : vector<16x8xbf16>, vector<32x8xbf16>, vector<16x32xf32> -> vector<16x32xf32>
    %37 = arith.addf %36, %32 : vector<16x32xf32>
    %cst_20 = arith.constant dense<0xFF800000> : vector<16xf32>
    %38 = vector.multi_reduction <maximumf>, %37, %cst_20 [1] : vector<16x32xf32> to vector<16xf32>
    %39 = vector.shape_cast %38 : vector<16xf32> to vector<16x1xf32>
    %40 = vector.broadcast %39 : vector<16x1xf32> to vector<16x32xf32>
    %41 = arith.subf %37, %40 : vector<16x32xf32>
    %42 = math.exp %41 : vector<16x32xf32>
    %cst_21 = arith.constant dense<0.000000e+00> : vector<16xf32>
    %43 = vector.multi_reduction <add>, %42, %cst_21 [1] : vector<16x32xf32> to vector<16xf32>
    %44 = vector.shape_cast %43 : vector<16xf32> to vector<16x1xf32>
    %45 = tpu.reciprocal %44 {approx = true} : vector<16x1xf32> -> vector<16x1xf32>
    %46 = arith.mulf %44, %45 : vector<16x1xf32>
    %cst_22 = arith.constant 2.000000e+00 : f32
    %47 = vector.broadcast %cst_22 : f32 to vector<16x1xf32>
    %48 = arith.subf %47, %46 : vector<16x1xf32>
    %49 = arith.mulf %45, %48 : vector<16x1xf32>
    %50 = vector.broadcast %49 : vector<16x1xf32> to vector<16x32xf32>
    %51 = arith.mulf %42, %50 : vector<16x32xf32>
    %52 = arith.truncf %51 : vector<16x32xf32> to vector<16x32xbf16>
    %cst_23 = arith.constant dense<0.000000e+00> : vector<16x8xf32>
    %53 = tpu.matmul %52, %35, %cst_23 {dimension_numbers = #tpu.dot_dimension_numbers<[1], [0], [0], [1], [0, 0, 1, 1], [], []>} : vector<16x32xbf16>, vector<32x8xbf16>, vector<16x8xf32> -> vector<16x8xf32>
    %54 = arith.truncf %53 : vector<16x8xf32> to vector<16x8xbf16>
    %c0_24 = arith.constant 0 : index
    %c0_25 = arith.constant 0 : index
    %55 = vector.load %arg26[%c0_24, %c0_25] : memref<16x32xbf16, #tpu.memory_space<vmem>>, vector<16x8xbf16>
    tpu.vector_store %arg26[%c0_24, %c0_25], %54 {strides = array<i32>} : memref<16x32xbf16, #tpu.memory_space<vmem>>, vector<16x8xbf16>,
    %56 = vector.extract_strided_slice %24 {offsets = [0, 8], sizes = [16, 8], strides = [1, 1]} : vector<16x32xbf16> to vector<16x8xbf16>
    %c0_26 = arith.constant 0 : index
    %c8 = arith.constant 8 : index
    %57 = vector.load %arg24[%c0_26, %c8] : memref<32x32xbf16, #tpu.memory_space<vmem>>, vector<32x8xbf16>
    %c0_27 = arith.constant 0 : index
    %c8_28 = arith.constant 8 : index
    %58 = vector.load %arg25[%c0_27, %c8_28] : memref<32x32xbf16, #tpu.memory_space<vmem>>, vector<32x8xbf16>
    %cst_29 = arith.constant dense<0.000000e+00> : vector<16x32xf32>
    %59 = tpu.matmul %56, %57, %cst_29 {dimension_numbers = #tpu.dot_dimension_numbers<[1], [1], [0], [0], [0, 0, 1, 0], [], []>} : vector<16x8xbf16>, vector<32x8xbf16>, vector<16x32xf32> -> vector<16x32xf32>
    %60 = arith.addf %59, %32 : vector<16x32xf32>
    %cst_30 = arith.constant dense<0xFF800000> : vector<16xf32>
    %61 = vector.multi_reduction <maximumf>, %60, %cst_30 [1] : vector<16x32xf32> to vector<16xf32>
    %62 = vector.shape_cast %61 : vector<16xf32> to vector<16x1xf32>
    %63 = vector.broadcast %62 : vector<16x1xf32> to vector<16x32xf32>
    %64 = arith.subf %60, %63 : vector<16x32xf32>
    %65 = math.exp %64 : vector<16x32xf32>
    %cst_31 = arith.constant dense<0.000000e+00> : vector<16xf32>
    %66 = vector.multi_reduction <add>, %65, %cst_31 [1] : vector<16x32xf32> to vector<16xf32>
    %67 = vector.shape_cast %66 : vector<16xf32> to vector<16x1xf32>
    %68 = tpu.reciprocal %67 {approx = true} : vector<16x1xf32> -> vector<16x1xf32>
    %69 = arith.mulf %67, %68 : vector<16x1xf32>
    %cst_32 = arith.constant 2.000000e+00 : f32
    %70 = vector.broadcast %cst_32 : f32 to vector<16x1xf32>
    %71 = arith.subf %70, %69 : vector<16x1xf32>
    %72 = arith.mulf %68, %71 : vector<16x1xf32>
    %73 = vector.broadcast %72 : vector<16x1xf32> to vector<16x32xf32>
    %74 = arith.mulf %65, %73 : vector<16x32xf32>
    %75 = arith.truncf %74 : vector<16x32xf32> to vector<16x32xbf16>
    %cst_33 = arith.constant dense<0.000000e+00> : vector<16x8xf32>
    %76 = tpu.matmul %75, %58, %cst_33 {dimension_numbers = #tpu.dot_dimension_numbers<[1], [0], [0], [1], [0, 0, 1, 1], [], []>} : vector<16x32xbf16>, vector<32x8xbf16>, vector<16x8xf32> -> vector<16x8xf32>
    %77 = arith.truncf %76 : vector<16x8xf32> to vector<16x8xbf16>
    %c0_34 = arith.constant 0 : index
    %c8_35 = arith.constant 8 : index
    %78 = vector.load %arg26[%c0_34, %c8_35] : memref<16x32xbf16, #tpu.memory_space<vmem>>, vector<16x8xbf16>
    tpu.vector_store %arg26[%c0_34, %c8_35], %77 {strides = array<i32>} : memref<16x32xbf16, #tpu.memory_space<vmem>>, vector<16x8xbf16>,
    %79 = vector.extract_strided_slice %24 {offsets = [0, 16], sizes = [16, 8], strides = [1, 1]} : vector<16x32xbf16> to vector<16x8xbf16>
    %c0_36 = arith.constant 0 : index
    %c16 = arith.constant 16 : index
    %80 = vector.load %arg24[%c0_36, %c16] : memref<32x32xbf16, #tpu.memory_space<vmem>>, vector<32x8xbf16>
    %c0_37 = arith.constant 0 : index
    %c16_38 = arith.constant 16 : index
    %81 = vector.load %arg25[%c0_37, %c16_38] : memref<32x32xbf16, #tpu.memory_space<vmem>>, vector<32x8xbf16>
    %cst_39 = arith.constant dense<0.000000e+00> : vector<16x32xf32>
    %82 = tpu.matmul %79, %80, %cst_39 {dimension_numbers = #tpu.dot_dimension_numbers<[1], [1], [0], [0], [0, 0, 1, 0], [], []>} : vector<16x8xbf16>, vector<32x8xbf16>, vector<16x32xf32> -> vector<16x32xf32>
    %83 = arith.addf %82, %32 : vector<16x32xf32>
    %cst_40 = arith.constant dense<0xFF800000> : vector<16xf32>
    %84 = vector.multi_reduction <maximumf>, %83, %cst_40 [1] : vector<16x32xf32> to vector<16xf32>
    %85 = vector.shape_cast %84 : vector<16xf32> to vector<16x1xf32>
    %86 = vector.broadcast %85 : vector<16x1xf32> to vector<16x32xf32>
    %87 = arith.subf %83, %86 : vector<16x32xf32>
    %88 = math.exp %87 : vector<16x32xf32>
    %cst_41 = arith.constant dense<0.000000e+00> : vector<16xf32>
    %89 = vector.multi_reduction <add>, %88, %cst_41 [1] : vector<16x32xf32> to vector<16xf32>
    %90 = vector.shape_cast %89 : vector<16xf32> to vector<16x1xf32>
    %91 = tpu.reciprocal %90 {approx = true} : vector<16x1xf32> -> vector<16x1xf32>
    %92 = arith.mulf %90, %91 : vector<16x1xf32>
    %cst_42 = arith.constant 2.000000e+00 : f32
    %93 = vector.broadcast %cst_42 : f32 to vector<16x1xf32>
    %94 = arith.subf %93, %92 : vector<16x1xf32>
    %95 = arith.mulf %91, %94 : vector<16x1xf32>
    %96 = vector.broadcast %95 : vector<16x1xf32> to vector<16x32xf32>
    %97 = arith.mulf %88, %96 : vector<16x32xf32>
    %98 = arith.truncf %97 : vector<16x32xf32> to vector<16x32xbf16>
    %cst_43 = arith.constant dense<0.000000e+00> : vector<16x8xf32>
    %99 = tpu.matmul %98, %81, %cst_43 {dimension_numbers = #tpu.dot_dimension_numbers<[1], [0], [0], [1], [0, 0, 1, 1], [], []>} : vector<16x32xbf16>, vector<32x8xbf16>, vector<16x8xf32> -> vector<16x8xf32>
    %100 = arith.truncf %99 : vector<16x8xf32> to vector<16x8xbf16>
    %c0_44 = arith.constant 0 : index
    %c16_45 = arith.constant 16 : index
    %101 = vector.load %arg26[%c0_44, %c16_45] : memref<16x32xbf16, #tpu.memory_space<vmem>>, vector<16x8xbf16>
    tpu.vector_store %arg26[%c0_44, %c16_45], %100 {strides = array<i32>} : memref<16x32xbf16, #tpu.memory_space<vmem>>, vector<16x8xbf16>,
    %102 = vector.extract_strided_slice %24 {offsets = [0, 24], sizes = [16, 8], strides = [1, 1]} : vector<16x32xbf16> to vector<16x8xbf16>
    %c0_46 = arith.constant 0 : index
    %c24 = arith.constant 24 : index
    %103 = vector.load %arg24[%c0_46, %c24] : memref<32x32xbf16, #tpu.memory_space<vmem>>, vector<32x8xbf16>
    %c0_47 = arith.constant 0 : index
    %c24_48 = arith.constant 24 : index
    %104 = vector.load %arg25[%c0_47, %c24_48] : memref<32x32xbf16, #tpu.memory_space<vmem>>, vector<32x8xbf16>
    %cst_49 = arith.constant dense<0.000000e+00> : vector<16x32xf32>
    %105 = tpu.matmul %102, %103, %cst_49 {dimension_numbers = #tpu.dot_dimension_numbers<[1], [1], [0], [0], [0, 0, 1, 0], [], []>} : vector<16x8xbf16>, vector<32x8xbf16>, vector<16x32xf32> -> vector<16x32xf32>
    %106 = arith.addf %105, %32 : vector<16x32xf32>
    %cst_50 = arith.constant dense<0xFF800000> : vector<16xf32>
    %107 = vector.multi_reduction <maximumf>, %106, %cst_50 [1] : vector<16x32xf32> to vector<16xf32>
    %108 = vector.shape_cast %107 : vector<16xf32> to vector<16x1xf32>
    %109 = vector.broadcast %108 : vector<16x1xf32> to vector<16x32xf32>
    %110 = arith.subf %106, %109 : vector<16x32xf32>
    %111 = math.exp %110 : vector<16x32xf32>
    %cst_51 = arith.constant dense<0.000000e+00> : vector<16xf32>
    %112 = vector.multi_reduction <add>, %111, %cst_51 [1] : vector<16x32xf32> to vector<16xf32>
    %113 = vector.shape_cast %112 : vector<16xf32> to vector<16x1xf32>
    %114 = tpu.reciprocal %113 {approx = true} : vector<16x1xf32> -> vector<16x1xf32>
    %115 = arith.mulf %113, %114 : vector<16x1xf32>
    %cst_52 = arith.constant 2.000000e+00 : f32
    %116 = vector.broadcast %cst_52 : f32 to vector<16x1xf32>
    %117 = arith.subf %116, %115 : vector<16x1xf32>
    %118 = arith.mulf %114, %117 : vector<16x1xf32>
    %119 = vector.broadcast %118 : vector<16x1xf32> to vector<16x32xf32>
    %120 = arith.mulf %111, %119 : vector<16x32xf32>
    %121 = arith.truncf %120 : vector<16x32xf32> to vector<16x32xbf16>
    %cst_53 = arith.constant dense<0.000000e+00> : vector<16x8xf32>
    %122 = tpu.matmul %121, %104, %cst_53 {dimension_numbers = #tpu.dot_dimension_numbers<[1], [0], [0], [1], [0, 0, 1, 1], [], []>} : vector<16x32xbf16>, vector<32x8xbf16>, vector<16x8xf32> -> vector<16x8xf32>
    %123 = arith.truncf %122 : vector<16x8xf32> to vector<16x8xbf16>
    %c0_54 = arith.constant 0 : index
    %c24_55 = arith.constant 24 : index
    %124 = vector.load %arg26[%c0_54, %c24_55] : memref<16x32xbf16, #tpu.memory_space<vmem>>, vector<16x8xbf16>
    tpu.vector_store %arg26[%c0_54, %c24_55], %123 {strides = array<i32>} : memref<16x32xbf16, #tpu.memory_space<vmem>>, vector<16x8xbf16>,
    %c0_56 = arith.constant 0 : index
    %c0_57 = arith.constant 0 : index
    %125 = vector.load %arg26[%c0_56, %c0_57] : memref<16x32xbf16, #tpu.memory_space<vmem>>, vector<16x32xbf16>
    %c0_58 = arith.constant 0 : index
    %c0_59 = arith.constant 0 : index
    %126 = vector.load %arg12[%c0_58, %c0_59] : memref<32x32xbf16, #tpu.memory_space<vmem>>, vector<32x32xbf16>
    %cst_60 = arith.constant dense<0.000000e+00> : vector<16x32xf32>
    %127 = tpu.matmul %125, %126, %cst_60 {dimension_numbers = #tpu.dot_dimension_numbers<[1], [0], [0], [1], [0, 0, 1, 1], [], []>} : vector<16x32xbf16>, vector<32x32xbf16>, vector<16x32xf32> -> vector<16x32xf32>
    %c0_61 = arith.constant 0 : index
    %c0_62 = arith.constant 0 : index
    %128 = vector.load %arg13[%c0_61, %c0_62] : memref<1x32xf32, #tpu.memory_space<vmem>>, vector<1x32xf32>
    %129 = vector.broadcast %128 : vector<1x32xf32> to vector<16x32xf32>
    %130 = arith.addf %127, %129 : vector<16x32xf32>
    %c0_63 = arith.constant 0 : index
    %c0_64 = arith.constant 0 : index
    %c0_65 = arith.constant 0 : index
    %131 = vector.load %arg3[%c0_63, %c0_64, %c0_65] : memref<1x16x32xf32, #tpu.memory_space<vmem>>, vector<1x16x32xf32>
    %132 = vector.shape_cast %131 : vector<1x16x32xf32> to vector<16x32xf32>
    %133 = arith.addf %132, %130 : vector<16x32xf32>
    %c0_66 = arith.constant 0 : index
    %c0_67 = arith.constant 0 : index
    %134 = vector.load %arg14[%c0_66, %c0_67] : memref<1x32xf32, #tpu.memory_space<vmem>>, vector<1x32xf32>
    %c0_68 = arith.constant 0 : index
    %c0_69 = arith.constant 0 : index
    %135 = vector.load %arg15[%c0_68, %c0_69] : memref<1x32xf32, #tpu.memory_space<vmem>>, vector<1x32xf32>
    %cst_70 = arith.constant dense<0.000000e+00> : vector<16xf32>
    %136 = vector.multi_reduction <add>, %133, %cst_70 [1] : vector<16x32xf32> to vector<16xf32>
    %137 = vector.shape_cast %136 : vector<16xf32> to vector<16x1xf32>
    %cst_71 = arith.constant 3.200000e+01 : f32
    %138 = vector.broadcast %cst_71 : f32 to vector<16x1xf32>
    %139 = arith.divf %137, %138 : vector<16x1xf32>
    %140 = vector.broadcast %139 : vector<16x1xf32> to vector<16x32xf32>
    %141 = arith.subf %133, %140 : vector<16x32xf32>
    %142 = arith.mulf %141, %141 : vector<16x32xf32>
    %cst_72 = arith.constant dense<0.000000e+00> : vector<16xf32>
    %143 = vector.multi_reduction <add>, %142, %cst_72 [1] : vector<16x32xf32> to vector<16xf32>
    %144 = vector.shape_cast %143 : vector<16xf32> to vector<16x1xf32>
    %cst_73 = arith.constant 3.200000e+01 : f32
    %145 = vector.broadcast %cst_73 : f32 to vector<16x1xf32>
    %146 = arith.divf %144, %145 : vector<16x1xf32>
    %147 = vector.broadcast %139 : vector<16x1xf32> to vector<16x32xf32>
    %148 = arith.subf %133, %147 : vector<16x32xf32>
    %cst_74 = arith.constant 9.99999974E-6 : f32
    %149 = vector.broadcast %cst_74 : f32 to vector<16x1xf32>
    %150 = arith.addf %146, %149 : vector<16x1xf32>
    %151 = math.rsqrt %150 : vector<16x1xf32>
    %152 = vector.broadcast %151 : vector<16x1xf32> to vector<16x32xf32>
    %153 = arith.mulf %148, %152 : vector<16x32xf32>
    %154 = vector.broadcast %134 : vector<1x32xf32> to vector<16x32xf32>
    %155 = arith.mulf %153, %154 : vector<16x32xf32>
    %156 = vector.broadcast %135 : vector<1x32xf32> to vector<16x32xf32>
    %157 = arith.addf %155, %156 : vector<16x32xf32>
    %158 = arith.truncf %157 : vector<16x32xf32> to vector<16x32xbf16>
    %c0_75 = arith.constant 0 : index
    %c0_76 = arith.constant 0 : index
    %159 = vector.load %arg16[%c0_75, %c0_76] : memref<32x128xbf16, #tpu.memory_space<vmem>>, vector<32x128xbf16>
    %cst_77 = arith.constant dense<0.000000e+00> : vector<16x128xf32>
    %160 = tpu.matmul %158, %159, %cst_77 {dimension_numbers = #tpu.dot_dimension_numbers<[1], [0], [0], [1], [0, 0, 1, 1], [], []>} : vector<16x32xbf16>, vector<32x128xbf16>, vector<16x128xf32> -> vector<16x128xf32>
    %c0_78 = arith.constant 0 : index
    %c0_79 = arith.constant 0 : index
    %161 = vector.load %arg17[%c0_78, %c0_79] : memref<1x128xf32, #tpu.memory_space<vmem>>, vector<1x128xf32>
    %162 = vector.broadcast %161 : vector<1x128xf32> to vector<16x128xf32>
    %163 = arith.addf %160, %162 : vector<16x128xf32>
    %cst_80 = arith.constant 5.000000e-01 : f32
    %164 = vector.broadcast %cst_80 : f32 to vector<16x128xf32>
    %165 = arith.mulf %164, %163 : vector<16x128xf32>
    %cst_81 = arith.constant 0.707106769 : f32
    %166 = vector.broadcast %cst_81 : f32 to vector<16x128xf32>
    %167 = arith.mulf %163, %166 : vector<16x128xf32>
    %cst_82 = arith.constant 0.000000e+00 : f32
    %168 = vector.broadcast %cst_82 : f32 to vector<16x128xf32>
    %169 = arith.cmpf oge, %167, %168 : vector<16x128xf32>
    %cst_83 = arith.constant 1.000000e+00 : f32
    %cst_84 = arith.constant -1.000000e+00 : f32
    %170 = vector.broadcast %cst_83 : f32 to vector<16x128xf32>
    %171 = vector.broadcast %cst_84 : f32 to vector<16x128xf32>
    %172 = arith.select %169, %170, %171 : vector<16x128xi1>, vector<16x128xf32>
    %173 = math.absf %167 : vector<16x128xf32>
    %cst_85 = arith.constant 0.327591091 : f32
    %174 = vector.broadcast %cst_85 : f32 to vector<16x128xf32>
    %175 = arith.mulf %174, %173 : vector<16x128xf32>
    %cst_86 = arith.constant 1.000000e+00 : f32
    %176 = vector.broadcast %cst_86 : f32 to vector<16x128xf32>
    %177 = arith.addf %176, %175 : vector<16x128xf32>
    %178 = tpu.reciprocal %177 {approx = true} : vector<16x128xf32> -> vector<16x128xf32>
    %cst_87 = arith.constant 1.06140542 : f32
    %179 = vector.broadcast %cst_87 : f32 to vector<16x128xf32>
    %180 = arith.mulf %179, %178 : vector<16x128xf32>
    %cst_88 = arith.constant -1.45315206 : f32
    %181 = vector.broadcast %cst_88 : f32 to vector<16x128xf32>
    %182 = arith.addf %180, %181 : vector<16x128xf32>
    %183 = arith.mulf %182, %178 : vector<16x128xf32>
    %cst_89 = arith.constant 1.42141378 : f32
    %184 = vector.broadcast %cst_89 : f32 to vector<16x128xf32>
    %185 = arith.addf %183, %184 : vector<16x128xf32>
    %186 = arith.mulf %185, %178 : vector<16x128xf32>
    %cst_90 = arith.constant -0.284496725 : f32
    %187 = vector.broadcast %cst_90 : f32 to vector<16x128xf32>
    %188 = arith.addf %186, %187 : vector<16x128xf32>
    %189 = arith.mulf %188, %178 : vector<16x128xf32>
    %cst_91 = arith.constant 0.254829586 : f32
    %190 = vector.broadcast %cst_91 : f32 to vector<16x128xf32>
    %191 = arith.addf %189, %190 : vector<16x128xf32>
    %192 = arith.mulf %191, %178 : vector<16x128xf32>
    %cst_92 = arith.constant 0.000000e+00 : f32
    %193 = vector.broadcast %cst_92 : f32 to vector<16x128xf32>
    %194 = arith.subf %193, %173 : vector<16x128xf32>
    %195 = arith.mulf %194, %173 : vector<16x128xf32>
    %196 = math.exp %195 : vector<16x128xf32>
    %197 = arith.mulf %192, %196 : vector<16x128xf32>
    %cst_93 = arith.constant 1.000000e+00 : f32
    %198 = vector.broadcast %cst_93 : f32 to vector<16x128xf32>
    %199 = arith.subf %198, %197 : vector<16x128xf32>
    %200 = arith.mulf %172, %199 : vector<16x128xf32>
    %cst_94 = arith.constant 1.000000e+00 : f32
    %201 = vector.broadcast %cst_94 : f32 to vector<16x128xf32>
    %202 = arith.addf %201, %200 : vector<16x128xf32>
    %203 = arith.mulf %165, %202 : vector<16x128xf32>
    %204 = arith.truncf %203 : vector<16x128xf32> to vector<16x128xbf16>
    %c0_95 = arith.constant 0 : index
    %c0_96 = arith.constant 0 : index
    %205 = vector.load %arg18[%c0_95, %c0_96] : memref<128x32xbf16, #tpu.memory_space<vmem>>, vector<128x32xbf16>
    %cst_97 = arith.constant dense<0.000000e+00> : vector<16x32xf32>
    %206 = tpu.matmul %204, %205, %cst_97 {dimension_numbers = #tpu.dot_dimension_numbers<[1], [0], [0], [1], [0, 0, 1, 1], [], []>} : vector<16x128xbf16>, vector<128x32xbf16>, vector<16x32xf32> -> vector<16x32xf32>
    %c0_98 = arith.constant 0 : index
    %c0_99 = arith.constant 0 : index
    %207 = vector.load %arg19[%c0_98, %c0_99] : memref<1x32xf32, #tpu.memory_space<vmem>>, vector<1x32xf32>
    %208 = vector.broadcast %207 : vector<1x32xf32> to vector<16x32xf32>
    %209 = arith.addf %206, %208 : vector<16x32xf32>
    %210 = arith.addf %133, %209 : vector<16x32xf32>
    %c0_100 = arith.constant 0 : index
    %c0_101 = arith.constant 0 : index
    %c0_102 = arith.constant 0 : index
    %211 = vector.load %arg20[%c0_100, %c0_101, %c0_102] : memref<1x16x32xf32, #tpu.memory_space<vmem>>, vector<1x16x32xf32>
    %212 = vector.shape_cast %211 : vector<1x16x32xf32> to vector<16x32xf32>
    %213 = vector.shape_cast %210 : vector<16x32xf32> to vector<1x16x32xf32>
    tpu.vector_store %arg20[%c0_100, %c0_101, %c0_102], %213 {strides = array<i32>} : memref<1x16x32xf32, #tpu.memory_space<vmem>>, vector<1x16x32xf32>,
    return
  }
  func.func @transform_0(%arg0: i32, %arg1: i32) -> (i32, i32, i32) {
    %c0_i32 = arith.constant 0 : i32
    %c0_i32_0 = arith.constant 0 : i32
    %c0_i32_1 = arith.constant 0 : i32
    return %arg0, %c0_i32, %c0_i32_0 : i32, i32, i32
  }
  func.func @transform_1(%arg0: i32, %arg1: i32) -> (i32, i32, i32) {
    %c0_i32 = arith.constant 0 : i32
    %c0_i32_0 = arith.constant 0 : i32
    return %arg0, %arg1, %c0_i32 : i32, i32, i32
  }
  func.func @transform_2(%arg0: i32, %arg1: i32) -> (i32, i32) {
    %c0_i32 = arith.constant 0 : i32
    %c0_i32_0 = arith.constant 0 : i32
    %c0_i32_1 = arith.constant 0 : i32
    return %c0_i32, %c0_i32_0 : i32, i32
  }
  func.func @transform_3(%arg0: i32, %arg1: i32) -> (i32, i32) {
    %c0_i32 = arith.constant 0 : i32
    %c0_i32_0 = arith.constant 0 : i32
    %c0_i32_1 = arith.constant 0 : i32
    return %c0_i32, %c0_i32_0 : i32, i32
  }
  func.func @transform_4(%arg0: i32, %arg1: i32) -> (i32, i32) {
    %c0_i32 = arith.constant 0 : i32
    %c0_i32_0 = arith.constant 0 : i32
    %c0_i32_1 = arith.constant 0 : i32
    return %c0_i32, %c0_i32_0 : i32, i32
  }
  func.func @transform_5(%arg0: i32, %arg1: i32) -> (i32, i32) {
    %c0_i32 = arith.constant 0 : i32
    %c0_i32_0 = arith.constant 0 : i32
    %c0_i32_1 = arith.constant 0 : i32
    return %c0_i32, %c0_i32_0 : i32, i32
  }
  func.func @transform_6(%arg0: i32, %arg1: i32) -> (i32, i32) {
    %c0_i32 = arith.constant 0 : i32
    %c0_i32_0 = arith.constant 0 : i32
    %c0_i32_1 = arith.constant 0 : i32
    return %c0_i32, %c0_i32_0 : i32, i32
  }
  func.func @transform_7(%arg0: i32, %arg1: i32) -> (i32, i32) {
    %c0_i32 = arith.constant 0 : i32
    %c0_i32_0 = arith.constant 0 : i32
    %c0_i32_1 = arith.constant 0 : i32
    return %c0_i32, %c0_i32_0 : i32, i32
  }
  func.func @transform_8(%arg0: i32, %arg1: i32) -> (i32, i32) {
    %c0_i32 = arith.constant 0 : i32
    %c0_i32_0 = arith.constant 0 : i32
    %c0_i32_1 = arith.constant 0 : i32
    return %c0_i32, %c0_i32_0 : i32, i32
  }
  func.func @transform_9(%arg0: i32, %arg1: i32) -> (i32, i32) {
    %c0_i32 = arith.constant 0 : i32
    %c0_i32_0 = arith.constant 0 : i32
    %c0_i32_1 = arith.constant 0 : i32
    return %c0_i32, %c0_i32_0 : i32, i32
  }
  func.func @transform_10(%arg0: i32, %arg1: i32) -> (i32, i32) {
    %c0_i32 = arith.constant 0 : i32
    %c0_i32_0 = arith.constant 0 : i32
    %c0_i32_1 = arith.constant 0 : i32
    return %c0_i32, %c0_i32_0 : i32, i32
  }
  func.func @transform_11(%arg0: i32, %arg1: i32) -> (i32, i32) {
    %c0_i32 = arith.constant 0 : i32
    %c0_i32_0 = arith.constant 0 : i32
    %c0_i32_1 = arith.constant 0 : i32
    return %c0_i32, %c0_i32_0 : i32, i32
  }
  func.func @transform_12(%arg0: i32, %arg1: i32) -> (i32, i32) {
    %c0_i32 = arith.constant 0 : i32
    %c0_i32_0 = arith.constant 0 : i32
    %c0_i32_1 = arith.constant 0 : i32
    return %c0_i32, %c0_i32_0 : i32, i32
  }
  func.func @transform_13(%arg0: i32, %arg1: i32) -> (i32, i32) {
    %c0_i32 = arith.constant 0 : i32
    %c0_i32_0 = arith.constant 0 : i32
    %c0_i32_1 = arith.constant 0 : i32
    return %c0_i32, %c0_i32_0 : i32, i32
  }
  func.func @transform_14(%arg0: i32, %arg1: i32) -> (i32, i32) {
    %c0_i32 = arith.constant 0 : i32
    %c0_i32_0 = arith.constant 0 : i32
    %c0_i32_1 = arith.constant 0 : i32
    return %c0_i32, %c0_i32_0 : i32, i32
  }
  func.func @transform_15(%arg0: i32, %arg1: i32) -> (i32, i32) {
    %c0_i32 = arith.constant 0 : i32
    %c0_i32_0 = arith.constant 0 : i32
    %c0_i32_1 = arith.constant 0 : i32
    return %c0_i32, %c0_i32_0 : i32, i32
  }
  func.func @transform_16(%arg0: i32, %arg1: i32) -> (i32, i32) {
    %c0_i32 = arith.constant 0 : i32
    %c0_i32_0 = arith.constant 0 : i32
    %c0_i32_1 = arith.constant 0 : i32
    return %c0_i32, %c0_i32_0 : i32, i32
  }
  func.func @transform_17(%arg0: i32, %arg1: i32) -> (i32, i32) {
    %c0_i32 = arith.constant 0 : i32
    %c0_i32_0 = arith.constant 0 : i32
    %c0_i32_1 = arith.constant 0 : i32
    return %c0_i32, %c0_i32_0 : i32, i32
  }
  func.func @transform_18(%arg0: i32, %arg1: i32) -> (i32, i32, i32) {
    %c0_i32 = arith.constant 0 : i32
    %c0_i32_0 = arith.constant 0 : i32
    return %arg0, %arg1, %c0_i32 : i32, i32, i32
  }
  func.func @transform_19(%arg0: i32, %arg1: i32) -> (i32, i32, i32) {
    %c0_i32 = arith.constant 0 : i32
    %c0_i32_0 = arith.constant 0 : i32
    return %arg0, %arg1, %c0_i32 : i32, i32, i32
  }
  func.func @transform_20(%arg0: i32, %arg1: i32) -> (i32, i32, i32) {
    %c0_i32 = arith.constant 0 : i32
    %c0_i32_0 = arith.constant 0 : i32
    return %arg0, %arg1, %c0_i32 : i32, i32, i32
  }
}

</mosaic_0001>

<llo_original>
// kernel: tpu_custom_call.1
$region0: #{tpu_custom_call.1}
  #allocation0 [shape = 'u32[]', space=smem, size = 0x4, offset = 0x4, fixed_abs, tag = 'smem constant byte address 0x4 - core index']
  #allocation1 [shape = 'u32[144,128]{1,0:T(1,128)}', space=vmem, size = 0x12000, scoped, tag = 'internal scratch']
  #allocation2 [shape = 'bf16[32,32]{1,0:T(16,128)(2,1)}', space=vmem, size = 0x2000, scoped, tag = 'scratch operand']
  #allocation3 [shape = 'bf16[32,32]{1,0:T(16,128)(2,1)}', space=vmem, size = 0x2000, scoped, tag = 'scratch operand']
  #allocation4 [shape = 'bf16[32,32]{1,0:T(16,128)(2,1)}', space=vmem, size = 0x2000, scoped, tag = 'scratch operand']
  #allocation5 [shape = 'bf16[16,32]{1,0:T(16,128)(2,1)}', space=vmem, size = 0x1000, scoped, tag = 'scratch operand']
  %s0 = inlined_call_operand.vmem [shape: f32[2,32,32], index: 0, kind: input, shape index: {}]
  %s1 = inlined_call_operand.hbm [shape: f32[2,32,32], index: 1, kind: input, shape index: {}]
  %s2 = inlined_call_operand.vmem [shape: f32[1,32], index: 2, kind: input, shape index: {}]
  %s3 = inlined_call_operand.hbm [shape: f32[1,32], index: 3, kind: input, shape index: {}]
  %s4 = inlined_call_operand.vmem [shape: bf16[32,32], index: 4, kind: input, shape index: {}]
  %s5 = inlined_call_operand.hbm [shape: f32[1,32], index: 5, kind: input, shape index: {}]
  %s6 = inlined_call_operand.hbm [shape: bf16[32,32], index: 6, kind: input, shape index: {}]
  %s7 = inlined_call_operand.hbm [shape: f32[1,32], index: 7, kind: input, shape index: {}]
  %s8 = inlined_call_operand.hbm [shape: bf16[32,32], index: 8, kind: input, shape index: {}]
  %s9 = inlined_call_operand.hbm [shape: f32[1,32], index: 9, kind: input, shape index: {}]
  %s10 = inlined_call_operand.vmem [shape: bf16[32,32], index: 10, kind: input, shape index: {}]
  %s11 = inlined_call_operand.hbm [shape: f32[1,32], index: 11, kind: input, shape index: {}]
  %s12 = inlined_call_operand.hbm [shape: f32[1,32], index: 12, kind: input, shape index: {}]
  %s13 = inlined_call_operand.hbm [shape: f32[1,32], index: 13, kind: input, shape index: {}]
  %s14 = inlined_call_operand.vmem [shape: bf16[32,128], index: 14, kind: input, shape index: {}]
  %s15 = inlined_call_operand.vmem [shape: f32[1,128], index: 15, kind: input, shape index: {}]
  %s16 = inlined_call_operand.vmem [shape: bf16[128,32], index: 16, kind: input, shape index: {}]
  %s17 = inlined_call_operand.vmem [shape: f32[1,32], index: 17, kind: input, shape index: {}]
  %s18 = inlined_call_operand.hbm [shape: f32[2,32,32], index: 18, kind: output, shape index: {0}]
  %s19 = inlined_call_operand.hbm [shape: f32[2,32,32], index: 19, kind: output, shape index: {1}]
  %s20 = inlined_call_operand.hbm [shape: f32[2,32,32], index: 20, kind: output, shape index: {2}]
  %21 = xla_tuple %s18, %s19, %s20
  %s22 = sld [smem:[#allocation0]]
  $region165: #{tpu_custom_call.1} parent=0
    _
  %s24 = ssub.s32 1, %s22
  %s25 = scalar_select 0, %s24, %s22
  $region1: #{tpu_custom_call.1} parent=0
    #allocation6 [shape = 'u8[16384]{0}', space=vmem, size = 0x4000, scoped, tag = 'input window, operand 1']
    #allocation7 [shape = 's32[2]{0}', space=sflag, size = 0x8, scoped, tag = 'scoped memory for tpu_custom_call.1']
    #allocation8 [shape = 's32[2]{0}', space=sflag, size = 0x8, scoped, tag = 'scoped memory for tpu_custom_call.1']
    #allocation9 [shape = 'u8[512]{0}', space=vmem, size = 0x400, scoped, tag = 'input window, operand 3, single buffered']
    #allocation10 [shape = 's32[1]{0}', space=sflag, size = 0x4, scoped, tag = 'scoped memory for tpu_custom_call.1']
    #allocation11 [shape = 'u8[512]{0}', space=vmem, size = 0x400, scoped, tag = 'input window, operand 5, single buffered']
    #allocation12 [shape = 'u8[8192]{0}', space=vmem, size = 0x2000, scoped, tag = 'input window, operand 6, single buffered']
    #allocation13 [shape = 's32[1]{0}', space=sflag, size = 0x4, scoped, tag = 'scoped memory for tpu_custom_call.1']
    #allocation14 [shape = 'u8[512]{0}', space=vmem, size = 0x400, scoped, tag = 'input window, operand 7, single buffered']
    #allocation15 [shape = 'u8[8192]{0}', space=vmem, size = 0x2000, scoped, tag = 'input window, operand 8, single buffered']
    #allocation16 [shape = 's32[1]{0}', space=sflag, size = 0x4, scoped, tag = 'scoped memory for tpu_custom_call.1']
    #allocation17 [shape = 'u8[512]{0}', space=vmem, size = 0x400, scoped, tag = 'input window, operand 9, single buffered']
    #allocation18 [shape = 'u8[512]{0}', space=vmem, size = 0x400, scoped, tag = 'input window, operand 11, single buffered']
    #allocation19 [shape = 's32[1]{0}', space=sflag, size = 0x4, scoped, tag = 'scoped memory for tpu_custom_call.1']
    #allocation20 [shape = 'u8[512]{0}', space=vmem, size = 0x400, scoped, tag = 'input window, operand 12, single buffered']
    #allocation21 [shape = 'u8[512]{0}', space=vmem, size = 0x400, scoped, tag = 'input window, operand 13, single buffered']
    #allocation22 [shape = 's32[1]{0}', space=sflag, size = 0x4, scoped, tag = 'scoped memory for tpu_custom_call.1']
    #allocation23 [shape = 'u8[16384]{0}', space=vmem, size = 0x4000, scoped, tag = 'output window, operand 0']
    #allocation24 [shape = 'u8[16384]{0}', space=vmem, size = 0x4000, scoped, tag = 'output window, operand 1']
    #allocation25 [shape = 's32[2]{0}', space=sflag, size = 0x8, scoped, tag = 'scoped memory for tpu_custom_call.1']
    #allocation26 [shape = 'u8[16384]{0}', space=vmem, size = 0x4000, scoped, tag = 'output window, operand 2']
    %26 = vsyncpa [#allocation7], 0
    %s27 = scalar_lea.sflag [#allocation7], 1
    %28 = vsyncpa %s27, 0
    %29 = vsyncpa [#allocation10], 0
    %30 = vsyncpa [#allocation13], 0
    %31 = vsyncpa [#allocation16], 0
    %32 = vsyncpa [#allocation19], 0
    %33 = vsyncpa [#allocation22], 0
    %34 = vsyncpa [#allocation8], 0
    %s35 = scalar_lea.sflag [#allocation8], 1
    %36 = vsyncpa %s35, 0
    %37 = vsyncpa [#allocation25], 0
    %s38 = scalar_lea.sflag [#allocation25], 1
    %39 = vsyncpa %s38, 0
    loop: start=0, step=1, limit=6
    $region2: #{tpu_custom_call.1} parent=1 // loop_pre_header
      _
    $region3: #{tpu_custom_call.1} parent=1 // loop_header
      %s41 = sphi 0, %s45
      %p42 = scmp.ge.s32.totalorder %s41, 6
      %s48 = sphi 0, %s60
      %s49 = sphi 0, %s56
      %s50 = sphi 0, %s48
      %s51 = sphi 0, %s49
      %s52 = sphi 0, %s50
      %s53 = sphi 0, %s51
      %s63 = sphi 0, %s65
      %s66 = sphi 0, %s63
      %s67 = sphi 0, %s66
      %s83 = sphi 0, %s67
      %s91 = sphi 0, %s93
      %s94 = sphi 0, %s91
      %s95 = sphi 0, %s94
      %s111 = sphi 0, %s95
      %s115 = sphi 0, %s115
      %s117 = sphi 0, %s115
      %s118 = sphi 0, %s117
      %s132 = sphi 0, %s118
      %s136 = sphi 0, %s136
      %s138 = sphi 0, %s136
      %s139 = sphi 0, %s138
      %s153 = sphi 0, %s139
      %s157 = sphi 0, %s157
      %s159 = sphi 0, %s157
      %s160 = sphi 0, %s159
      %s174 = sphi 0, %s160
      %s178 = sphi 0, %s178
      %s180 = sphi 0, %s178
      %s181 = sphi 0, %s180
      %s195 = sphi 0, %s181
      %s199 = sphi 0, %s199
      %s201 = sphi 0, %s199
      %s202 = sphi 0, %s201
      %s216 = sphi 0, %s202
      %s220 = sphi 0, %s220
      %s222 = sphi 0, %s220
      %s223 = sphi 0, %s222
      %s237 = sphi 0, %s223
      %s241 = sphi 0, %s241
      %s243 = sphi 0, %s241
      %s244 = sphi 0, %s243
      %s258 = sphi 0, %s244
      %s262 = sphi 0, %s262
      %s264 = sphi 0, %s262
      %s265 = sphi 0, %s264
      %s279 = sphi 0, %s265
      %s283 = sphi 0, %s283
      %s285 = sphi 0, %s283
      %s286 = sphi 0, %s285
      %s300 = sphi 0, %s286
      %s304 = sphi 0, %s304
      %s306 = sphi 0, %s304
      %s307 = sphi 0, %s306
      %s321 = sphi 0, %s307
      %s325 = sphi 0, %s325
      %s327 = sphi 0, %s325
      %s328 = sphi 0, %s327
      %s342 = sphi 0, %s328
      %s346 = sphi 0, %s346
      %s348 = sphi 0, %s346
      %s349 = sphi 0, %s348
      %s363 = sphi 0, %s349
      %s367 = sphi 0, %s367
      %s369 = sphi 0, %s367
      %s370 = sphi 0, %s369
      %s384 = sphi 0, %s370
      %s388 = sphi 0, %s388
      %s390 = sphi 0, %s388
      %s391 = sphi 0, %s390
      %s405 = sphi 0, %s391
      %s409 = sphi 0, %s409
      %s411 = sphi 0, %s409
      %s412 = sphi 0, %s411
      %s426 = sphi 0, %s412
      %s430 = sphi 0, %s430
      %s432 = sphi 0, %s430
      %s433 = sphi 0, %s432
      %s447 = sphi 0, %s433
      %s455 = sphi 0, %s457
      %s458 = sphi 0, %s455
      %s459 = sphi 0, %s458
      %s475 = sphi 0, %s459
      %s483 = sphi 0, %s485
      %s486 = sphi 0, %s483
      %s487 = sphi 0, %s486
      %s503 = sphi 0, %s487
      %s511 = sphi 0, %s513
      %s514 = sphi 0, %s511
      %s515 = sphi 0, %s514
      %s531 = sphi 0, %s515
    $region4: #{tpu_custom_call.1} parent=1 // loop_header_branch
      %44 = sbr.rel (%p42) target = $region8
    $region5: #{tpu_custom_call.1} parent=1 // loop_body
      %s46 = ssub.s32 %s41, 1
      %s47 = ssub.s32 %s41, 2
      %s54 = sadd.s32 1, %s49
      %p55 = scmp.ge.s32.totalorder %s54, 2
      %s56 = scalar_select %p55, 0, %s54
      %s57 = sadd.s32 1, %s48
      %s58 = scalar_select %p55, %s57, %s48
      %p59 = scmp.ge.s32.totalorder %s58, 2
      %s60 = scalar_select %p59, 0, %s58
      %s61 = ssub.s32 %s48, %s60
      %p62 = scmp.eq.s32.totalorder %s61, 0
      %s64 = sadd.s32 %s63, 1
      %s65 = scalar_select %p62, %s63, %s64
      %p68 = pneg %p62
      %p69 = scmp.eq.s32.totalorder %s41, 3
      %p70 = por %p68, %p69
      %p71 = scmp.ne.s32.totalorder %s63, %s66
      %p72 = scmp.eq.s32.totalorder %s41, 0
      %p73 = por %p71, %p72
      %p74 = scmp.ne.s32.totalorder %s63, %s66
      %p75 = scmp.eq.s32.totalorder %s46, 3
      %p76 = por %p74, %p75
      %p77 = scmp.ne.s32.totalorder %s66, %s67
      %p78 = scmp.eq.s32.totalorder %s46, 0
      %p79 = por %p77, %p78
      %p80 = scmp.ne.s32.totalorder %s66, %s67
      %p81 = scmp.eq.s32.totalorder %s47, 3
      %p82 = por %p80, %p81
      %p84 = scmp.ne.s32.totalorder %s67, %s83
      %p85 = scmp.eq.s32.totalorder %s47, 0
      %p86 = por %p84, %p85
      %s87 = ssub.s32 %s48, %s60
      %s88 = ssub.s32 %s49, %s56
      %s89 = sor.u32 %s87, %s88
      %p90 = scmp.eq.s32.totalorder %s89, 0
      %s92 = sadd.s32 %s91, 1
      %s93 = scalar_select %p90, %s91, %s92
      %p96 = pneg %p90
      %p97 = scmp.eq.s32.totalorder %s41, 3
      %p98 = por %p96, %p97
      %p99 = scmp.ne.s32.totalorder %s91, %s94
      %p100 = scmp.eq.s32.totalorder %s41, 0
      %p101 = por %p99, %p100
      %p102 = scmp.ne.s32.totalorder %s91, %s94
      %p103 = scmp.eq.s32.totalorder %s46, 3
      %p104 = por %p102, %p103
      %p105 = scmp.ne.s32.totalorder %s94, %s95
      %p106 = scmp.eq.s32.totalorder %s46, 0
      %p107 = por %p105, %p106
      %p108 = scmp.ne.s32.totalorder %s94, %s95
      %p109 = scmp.eq.s32.totalorder %s47, 3
      %p110 = por %p108, %p109
      %p112 = scmp.ne.s32.totalorder %s95, %s111
      %p113 = scmp.eq.s32.totalorder %s47, 0
      %p114 = por %p112, %p113
      %s116 = sadd.s32 %s115, 1
      %p119 = scmp.eq.s32.totalorder %s41, 3
      %p120 = scmp.ne.s32.totalorder %s115, %s117
      %p121 = scmp.eq.s32.totalorder %s41, 0
      %p122 = por %p120, %p121
      %p123 = scmp.ne.s32.totalorder %s115, %s117
      %p124 = scmp.eq.s32.totalorder %s46, 3
      %p125 = por %p123, %p124
      %p126 = scmp.ne.s32.totalorder %s117, %s118
      %p127 = scmp.eq.s32.totalorder %s46, 0
      %p128 = por %p126, %p127
      %p129 = scmp.ne.s32.totalorder %s117, %s118
      %p130 = scmp.eq.s32.totalorder %s47, 3
      %p131 = por %p129, %p130
      %p133 = scmp.ne.s32.totalorder %s118, %s132
      %p134 = scmp.eq.s32.totalorder %s47, 0
      %p135 = por %p133, %p134
      %s137 = sadd.s32 %s136, 1
      %p140 = scmp.eq.s32.totalorder %s41, 3
      %p141 = scmp.ne.s32.totalorder %s136, %s138
      %p142 = scmp.eq.s32.totalorder %s41, 0
      %p143 = por %p141, %p142
      %p144 = scmp.ne.s32.totalorder %s136, %s138
      %p145 = scmp.eq.s32.totalorder %s46, 3
      %p146 = por %p144, %p145
      %p147 = scmp.ne.s32.totalorder %s138, %s139
      %p148 = scmp.eq.s32.totalorder %s46, 0
      %p149 = por %p147, %p148
      %p150 = scmp.ne.s32.totalorder %s138, %s139
      %p151 = scmp.eq.s32.totalorder %s47, 3
      %p152 = por %p150, %p151
      %p154 = scmp.ne.s32.totalorder %s139, %s153
      %p155 = scmp.eq.s32.totalorder %s47, 0
      %p156 = por %p154, %p155
      %s158 = sadd.s32 %s157, 1
      %p161 = scmp.eq.s32.totalorder %s41, 3
      %p162 = scmp.ne.s32.totalorder %s157, %s159
      %p163 = scmp.eq.s32.totalorder %s41, 0
      %p164 = por %p162, %p163
      %p165 = scmp.ne.s32.totalorder %s157, %s159
      %p166 = scmp.eq.s32.totalorder %s46, 3
      %p167 = por %p165, %p166
      %p168 = scmp.ne.s32.totalorder %s159, %s160
      %p169 = scmp.eq.s32.totalorder %s46, 0
      %p170 = por %p168, %p169
      %p171 = scmp.ne.s32.totalorder %s159, %s160
      %p172 = scmp.eq.s32.totalorder %s47, 3
      %p173 = por %p171, %p172
      %p175 = scmp.ne.s32.totalorder %s160, %s174
      %p176 = scmp.eq.s32.totalorder %s47, 0
      %p177 = por %p175, %p176
      %s179 = sadd.s32 %s178, 1
      %p182 = scmp.eq.s32.totalorder %s41, 3
      %p183 = scmp.ne.s32.totalorder %s178, %s180
      %p184 = scmp.eq.s32.totalorder %s41, 0
      %p185 = por %p183, %p184
      %p186 = scmp.ne.s32.totalorder %s178, %s180
      %p187 = scmp.eq.s32.totalorder %s46, 3
      %p188 = por %p186, %p187
      %p189 = scmp.ne.s32.totalorder %s180, %s181
      %p190 = scmp.eq.s32.totalorder %s46, 0
      %p191 = por %p189, %p190
      %p192 = scmp.ne.s32.totalorder %s180, %s181
      %p193 = scmp.eq.s32.totalorder %s47, 3
      %p194 = por %p192, %p193
      %p196 = scmp.ne.s32.totalorder %s181, %s195
      %p197 = scmp.eq.s32.totalorder %s47, 0
      %p198 = por %p196, %p197
      %s200 = sadd.s32 %s199, 1
      %p203 = scmp.eq.s32.totalorder %s41, 3
      %p204 = scmp.ne.s32.totalorder %s199, %s201
      %p205 = scmp.eq.s32.totalorder %s41, 0
      %p206 = por %p204, %p205
      %p207 = scmp.ne.s32.totalorder %s199, %s201
      %p208 = scmp.eq.s32.totalorder %s46, 3
      %p209 = por %p207, %p208
      %p210 = scmp.ne.s32.totalorder %s201, %s202
      %p211 = scmp.eq.s32.totalorder %s46, 0
      %p212 = por %p210, %p211
      %p213 = scmp.ne.s32.totalorder %s201, %s202
      %p214 = scmp.eq.s32.totalorder %s47, 3
      %p215 = por %p213, %p214
      %p217 = scmp.ne.s32.totalorder %s202, %s216
      %p218 = scmp.eq.s32.totalorder %s47, 0
      %p219 = por %p217, %p218
      %s221 = sadd.s32 %s220, 1
      %p224 = scmp.eq.s32.totalorder %s41, 3
      %p225 = scmp.ne.s32.totalorder %s220, %s222
      %p226 = scmp.eq.s32.totalorder %s41, 0
      %p227 = por %p225, %p226
      %p228 = scmp.ne.s32.totalorder %s220, %s222
      %p229 = scmp.eq.s32.totalorder %s46, 3
      %p230 = por %p228, %p229
      %p231 = scmp.ne.s32.totalorder %s222, %s223
      %p232 = scmp.eq.s32.totalorder %s46, 0
      %p233 = por %p231, %p232
      %p234 = scmp.ne.s32.totalorder %s222, %s223
      %p235 = scmp.eq.s32.totalorder %s47, 3
      %p236 = por %p234, %p235
      %p238 = scmp.ne.s32.totalorder %s223, %s237
      %p239 = scmp.eq.s32.totalorder %s47, 0
      %p240 = por %p238, %p239
      %s242 = sadd.s32 %s241, 1
      %p245 = scmp.eq.s32.totalorder %s41, 3
      %p246 = scmp.ne.s32.totalorder %s241, %s243
      %p247 = scmp.eq.s32.totalorder %s41, 0
      %p248 = por %p246, %p247
      %p249 = scmp.ne.s32.totalorder %s241, %s243
      %p250 = scmp.eq.s32.totalorder %s46, 3
      %p251 = por %p249, %p250
      %p252 = scmp.ne.s32.totalorder %s243, %s244
      %p253 = scmp.eq.s32.totalorder %s46, 0
      %p254 = por %p252, %p253
      %p255 = scmp.ne.s32.totalorder %s243, %s244
      %p256 = scmp.eq.s32.totalorder %s47, 3
      %p257 = por %p255, %p256
      %p259 = scmp.ne.s32.totalorder %s244, %s258
      %p260 = scmp.eq.s32.totalorder %s47, 0
      %p261 = por %p259, %p260
      %s263 = sadd.s32 %s262, 1
      %p266 = scmp.eq.s32.totalorder %s41, 3
      %p267 = scmp.ne.s32.totalorder %s262, %s264
      %p268 = scmp.eq.s32.totalorder %s41, 0
      %p269 = por %p267, %p268
      %p270 = scmp.ne.s32.totalorder %s262, %s264
      %p271 = scmp.eq.s32.totalorder %s46, 3
      %p272 = por %p270, %p271
      %p273 = scmp.ne.s32.totalorder %s264, %s265
      %p274 = scmp.eq.s32.totalorder %s46, 0
      %p275 = por %p273, %p274
      %p276 = scmp.ne.s32.totalorder %s264, %s265
      %p277 = scmp.eq.s32.totalorder %s47, 3
      %p278 = por %p276, %p277
      %p280 = scmp.ne.s32.totalorder %s265, %s279
      %p281 = scmp.eq.s32.totalorder %s47, 0
      %p282 = por %p280, %p281
      %s284 = sadd.s32 %s283, 1
      %p287 = scmp.eq.s32.totalorder %s41, 3
      %p288 = scmp.ne.s32.totalorder %s283, %s285
      %p289 = scmp.eq.s32.totalorder %s41, 0
      %p290 = por %p288, %p289
      %p291 = scmp.ne.s32.totalorder %s283, %s285
      %p292 = scmp.eq.s32.totalorder %s46, 3
      %p293 = por %p291, %p292
      %p294 = scmp.ne.s32.totalorder %s285, %s286
      %p295 = scmp.eq.s32.totalorder %s46, 0
      %p296 = por %p294, %p295
      %p297 = scmp.ne.s32.totalorder %s285, %s286
      %p298 = scmp.eq.s32.totalorder %s47, 3
      %p299 = por %p297, %p298
      %p301 = scmp.ne.s32.totalorder %s286, %s300
      %p302 = scmp.eq.s32.totalorder %s47, 0
      %p303 = por %p301, %p302
      %s305 = sadd.s32 %s304, 1
      %p308 = scmp.eq.s32.totalorder %s41, 3
      %p309 = scmp.ne.s32.totalorder %s304, %s306
      %p310 = scmp.eq.s32.totalorder %s41, 0
      %p311 = por %p309, %p310
      %p312 = scmp.ne.s32.totalorder %s304, %s306
      %p313 = scmp.eq.s32.totalorder %s46, 3
      %p314 = por %p312, %p313
      %p315 = scmp.ne.s32.totalorder %s306, %s307
      %p316 = scmp.eq.s32.totalorder %s46, 0
      %p317 = por %p315, %p316
      %p318 = scmp.ne.s32.totalorder %s306, %s307
      %p319 = scmp.eq.s32.totalorder %s47, 3
      %p320 = por %p318, %p319
      %p322 = scmp.ne.s32.totalorder %s307, %s321
      %p323 = scmp.eq.s32.totalorder %s47, 0
      %p324 = por %p322, %p323
      %s326 = sadd.s32 %s325, 1
      %p329 = scmp.eq.s32.totalorder %s41, 3
      %p330 = scmp.ne.s32.totalorder %s325, %s327
      %p331 = scmp.eq.s32.totalorder %s41, 0
      %p332 = por %p330, %p331
      %p333 = scmp.ne.s32.totalorder %s325, %s327
      %p334 = scmp.eq.s32.totalorder %s46, 3
      %p335 = por %p333, %p334
      %p336 = scmp.ne.s32.totalorder %s327, %s328
      %p337 = scmp.eq.s32.totalorder %s46, 0
      %p338 = por %p336, %p337
      %p339 = scmp.ne.s32.totalorder %s327, %s328
      %p340 = scmp.eq.s32.totalorder %s47, 3
      %p341 = por %p339, %p340
      %p343 = scmp.ne.s32.totalorder %s328, %s342
      %p344 = scmp.eq.s32.totalorder %s47, 0
      %p345 = por %p343, %p344
      %s347 = sadd.s32 %s346, 1
      %p350 = scmp.eq.s32.totalorder %s41, 3
      %p351 = scmp.ne.s32.totalorder %s346, %s348
      %p352 = scmp.eq.s32.totalorder %s41, 0
      %p353 = por %p351, %p352
      %p354 = scmp.ne.s32.totalorder %s346, %s348
      %p355 = scmp.eq.s32.totalorder %s46, 3
      %p356 = por %p354, %p355
      %p357 = scmp.ne.s32.totalorder %s348, %s349
      %p358 = scmp.eq.s32.totalorder %s46, 0
      %p359 = por %p357, %p358
      %p360 = scmp.ne.s32.totalorder %s348, %s349
      %p361 = scmp.eq.s32.totalorder %s47, 3
      %p362 = por %p360, %p361
      %p364 = scmp.ne.s32.totalorder %s349, %s363
      %p365 = scmp.eq.s32.totalorder %s47, 0
      %p366 = por %p364, %p365
      %s368 = sadd.s32 %s367, 1
      %p371 = scmp.eq.s32.totalorder %s41, 3
      %p372 = scmp.ne.s32.totalorder %s367, %s369
      %p373 = scmp.eq.s32.totalorder %s41, 0
      %p374 = por %p372, %p373
      %p375 = scmp.ne.s32.totalorder %s367, %s369
      %p376 = scmp.eq.s32.totalorder %s46, 3
      %p377 = por %p375, %p376
      %p378 = scmp.ne.s32.totalorder %s369, %s370
      %p379 = scmp.eq.s32.totalorder %s46, 0
      %p380 = por %p378, %p379
      %p381 = scmp.ne.s32.totalorder %s369, %s370
      %p382 = scmp.eq.s32.totalorder %s47, 3
      %p383 = por %p381, %p382
      %p385 = scmp.ne.s32.totalorder %s370, %s384
      %p386 = scmp.eq.s32.totalorder %s47, 0
      %p387 = por %p385, %p386
      %s389 = sadd.s32 %s388, 1
      %p392 = scmp.eq.s32.totalorder %s41, 3
      %p393 = scmp.ne.s32.totalorder %s388, %s390
      %p394 = scmp.eq.s32.totalorder %s41, 0
      %p395 = por %p393, %p394
      %p396 = scmp.ne.s32.totalorder %s388, %s390
      %p397 = scmp.eq.s32.totalorder %s46, 3
      %p398 = por %p396, %p397
      %p399 = scmp.ne.s32.totalorder %s390, %s391
      %p400 = scmp.eq.s32.totalorder %s46, 0
      %p401 = por %p399, %p400
      %p402 = scmp.ne.s32.totalorder %s390, %s391
      %p403 = scmp.eq.s32.totalorder %s47, 3
      %p404 = por %p402, %p403
      %p406 = scmp.ne.s32.totalorder %s391, %s405
      %p407 = scmp.eq.s32.totalorder %s47, 0
      %p408 = por %p406, %p407
      %s410 = sadd.s32 %s409, 1
      %p413 = scmp.eq.s32.totalorder %s41, 3
      %p414 = scmp.ne.s32.totalorder %s409, %s411
      %p415 = scmp.eq.s32.totalorder %s41, 0
      %p416 = por %p414, %p415
      %p417 = scmp.ne.s32.totalorder %s409, %s411
      %p418 = scmp.eq.s32.totalorder %s46, 3
      %p419 = por %p417, %p418
      %p420 = scmp.ne.s32.totalorder %s411, %s412
      %p421 = scmp.eq.s32.totalorder %s46, 0
      %p422 = por %p420, %p421
      %p423 = scmp.ne.s32.totalorder %s411, %s412
      %p424 = scmp.eq.s32.totalorder %s47, 3
      %p425 = por %p423, %p424
      %p427 = scmp.ne.s32.totalorder %s412, %s426
      %p428 = scmp.eq.s32.totalorder %s47, 0
      %p429 = por %p427, %p428
      %s431 = sadd.s32 %s430, 1
      %p434 = scmp.eq.s32.totalorder %s41, 3
      %p435 = scmp.ne.s32.totalorder %s430, %s432
      %p436 = scmp.eq.s32.totalorder %s41, 0
      %p437 = por %p435, %p436
      %p438 = scmp.ne.s32.totalorder %s430, %s432
      %p439 = scmp.eq.s32.totalorder %s46, 3
      %p440 = por %p438, %p439
      %p441 = scmp.ne.s32.totalorder %s432, %s433
      %p442 = scmp.eq.s32.totalorder %s46, 0
      %p443 = por %p441, %p442
      %p444 = scmp.ne.s32.totalorder %s432, %s433
      %p445 = scmp.eq.s32.totalorder %s47, 3
      %p446 = por %p444, %p445
      %p448 = scmp.ne.s32.totalorder %s433, %s447
      %p449 = scmp.eq.s32.totalorder %s47, 0
      %p450 = por %p448, %p449
      %s451 = ssub.s32 %s48, %s60
      %s452 = ssub.s32 %s49, %s56
      %s453 = sor.u32 %s451, %s452
      %p454 = scmp.eq.s32.totalorder %s453, 0
      %s456 = sadd.s32 %s455, 1
      %s457 = scalar_select %p454, %s455, %s456
      %p460 = pneg %p454
      %p461 = scmp.eq.s32.totalorder %s41, 3
      %p462 = por %p460, %p461
      %p463 = scmp.ne.s32.totalorder %s455, %s458
      %p464 = scmp.eq.s32.totalorder %s41, 0
      %p465 = por %p463, %p464
      %p466 = scmp.ne.s32.totalorder %s455, %s458
      %p467 = scmp.eq.s32.totalorder %s46, 3
      %p468 = por %p466, %p467
      %p469 = scmp.ne.s32.totalorder %s458, %s459
      %p470 = scmp.eq.s32.totalorder %s46, 0
      %p471 = por %p469, %p470
      %p472 = scmp.ne.s32.totalorder %s458, %s459
      %p473 = scmp.eq.s32.totalorder %s47, 3
      %p474 = por %p472, %p473
      %p476 = scmp.ne.s32.totalorder %s459, %s475
      %p477 = scmp.eq.s32.totalorder %s47, 0
      %p478 = por %p476, %p477
      %s479 = ssub.s32 %s48, %s60
      %s480 = ssub.s32 %s49, %s56
      %s481 = sor.u32 %s479, %s480
      %p482 = scmp.eq.s32.totalorder %s481, 0
      %s484 = sadd.s32 %s483, 1
      %s485 = scalar_select %p482, %s483, %s484
      %p488 = pneg %p482
      %p489 = scmp.eq.s32.totalorder %s41, 3
      %p490 = por %p488, %p489
      %p491 = scmp.ne.s32.totalorder %s483, %s486
      %p492 = scmp.eq.s32.totalorder %s41, 0
      %p493 = por %p491, %p492
      %p494 = scmp.ne.s32.totalorder %s483, %s486
      %p495 = scmp.eq.s32.totalorder %s46, 3
      %p496 = por %p494, %p495
      %p497 = scmp.ne.s32.totalorder %s486, %s487
      %p498 = scmp.eq.s32.totalorder %s46, 0
      %p499 = por %p497, %p498
      %p500 = scmp.ne.s32.totalorder %s486, %s487
      %p501 = scmp.eq.s32.totalorder %s47, 3
      %p502 = por %p500, %p501
      %p504 = scmp.ne.s32.totalorder %s487, %s503
      %p505 = scmp.eq.s32.totalorder %s47, 0
      %p506 = por %p504, %p505
      %s507 = ssub.s32 %s48, %s60
      %s508 = ssub.s32 %s49, %s56
      %s509 = sor.u32 %s507, %s508
      %p510 = scmp.eq.s32.totalorder %s509, 0
      %s512 = sadd.s32 %s511, 1
      %s513 = scalar_select %p510, %s511, %s512
      %p516 = pneg %p510
      %p517 = scmp.eq.s32.totalorder %s41, 3
      %p518 = por %p516, %p517
      %p519 = scmp.ne.s32.totalorder %s511, %s514
      %p520 = scmp.eq.s32.totalorder %s41, 0
      %p521 = por %p519, %p520
      %p522 = scmp.ne.s32.totalorder %s511, %s514
      %p523 = scmp.eq.s32.totalorder %s46, 3
      %p524 = por %p522, %p523
      %p525 = scmp.ne.s32.totalorder %s514, %s515
      %p526 = scmp.eq.s32.totalorder %s46, 0
      %p527 = por %p525, %p526
      %p528 = scmp.ne.s32.totalorder %s514, %s515
      %p529 = scmp.eq.s32.totalorder %s47, 3
      %p530 = por %p528, %p529
      %p532 = scmp.ne.s32.totalorder %s515, %s531
      %p533 = scmp.eq.s32.totalorder %s47, 0
      %p534 = por %p532, %p533
      %p535 = scmp.le.s32.totalorder 1, %s41
      %p536 = scmp.lt.s32.totalorder %s41, 5
      %p537 = pnand %p535, %p536
      %p538 = pneg %p537
      // Predicated region
      $region9: #{tpu_custom_call.1} parent=5 // pred_check
        _
      $region10: #{tpu_custom_call.1} parent=5 // pred_check_branch
        %540 = sbr.rel (%p537) target = $region12
      $region11: #{tpu_custom_call.1} parent=5 // pred_region
        %s541 = ssub.s32 %s41, 1
        // Predicated region
        $region13: #{tpu_custom_call.1} parent=11 // pred_check
          %p542 = pneg %p128
        $region14: #{tpu_custom_call.1} parent=11 // pred_check_branch
          %544 = sbr.rel (%p542) target = $region16
        $region15: #{tpu_custom_call.1} parent=11 // pred_region
          _
        $region16: #{tpu_custom_call.1} parent=11 // pred_fallthru
          _
        // Predicated region
        $region17: #{tpu_custom_call.1} parent=11 // pred_check
          %p545 = pneg %p149
        $region18: #{tpu_custom_call.1} parent=11 // pred_check_branch
          %547 = sbr.rel (%p545) target = $region20
        $region19: #{tpu_custom_call.1} parent=11 // pred_region
          %s549 = ssub.s32 16, 16
          %550 = vsyncadd [#allocation10], %s549
          %s552 = sshll.u32 [#allocation9], 4
          %s553 = int_to_ptr.vmem [resolvable:$true] %s552
          %555 = dma.hbm_to_vmem [thread:$0]  %s3, 16, %s553, [#allocation10]
        $region20: #{tpu_custom_call.1} parent=11 // pred_fallthru
          _
        // Predicated region
        $region21: #{tpu_custom_call.1} parent=11 // pred_check
          %p556 = pneg %p170
        $region22: #{tpu_custom_call.1} parent=11 // pred_check_branch
          %558 = sbr.rel (%p556) target = $region24
        $region23: #{tpu_custom_call.1} parent=11 // pred_region
          _
        $region24: #{tpu_custom_call.1} parent=11 // pred_fallthru
          _
        // Predicated region
        $region25: #{tpu_custom_call.1} parent=11 // pred_check
          %p559 = pneg %p191
        $region26: #{tpu_custom_call.1} parent=11 // pred_check_branch
          %561 = sbr.rel (%p559) target = $region28
        $region27: #{tpu_custom_call.1} parent=11 // pred_region
          %s563 = ssub.s32 16, 16
          %564 = vsyncadd [#allocation10], %s563
          %s566 = sshll.u32 [#allocation11], 4
          %s567 = int_to_ptr.vmem [resolvable:$true] %s566
          %569 = dma.hbm_to_vmem [thread:$0]  %s5, 16, %s567, [#allocation10]
        $region28: #{tpu_custom_call.1} parent=11 // pred_fallthru
          _
        // Predicated region
        $region29: #{tpu_custom_call.1} parent=11 // pred_check
          %p570 = pneg %p212
        $region30: #{tpu_custom_call.1} parent=11 // pred_check_branch
          %572 = sbr.rel (%p570) target = $region32
        $region31: #{tpu_custom_call.1} parent=11 // pred_region
          %s574 = ssub.s32 256, 256
          %575 = vsyncadd [#allocation13], %s574
          %s576 = sshll.u32 [#allocation12], 4
          %s577 = int_to_ptr.vmem [resolvable:$true] %s576
          %582 = dma.hbm_to_vmem [thread:$0]  %s6, 256, %s577, [#allocation13], 64, 64, 4
        $region32: #{tpu_custom_call.1} parent=11 // pred_fallthru
          _
        // Predicated region
        $region33: #{tpu_custom_call.1} parent=11 // pred_check
          %p583 = pneg %p233
        $region34: #{tpu_custom_call.1} parent=11 // pred_check_branch
          %585 = sbr.rel (%p583) target = $region36
        $region35: #{tpu_custom_call.1} parent=11 // pred_region
          %s587 = ssub.s32 16, 16
          %588 = vsyncadd [#allocation13], %s587
          %s590 = sshll.u32 [#allocation14], 4
          %s591 = int_to_ptr.vmem [resolvable:$true] %s590
          %593 = dma.hbm_to_vmem [thread:$0]  %s7, 16, %s591, [#allocation13]
        $region36: #{tpu_custom_call.1} parent=11 // pred_fallthru
          _
        // Predicated region
        $region37: #{tpu_custom_call.1} parent=11 // pred_check
          %p594 = pneg %p254
        $region38: #{tpu_custom_call.1} parent=11 // pred_check_branch
          %596 = sbr.rel (%p594) target = $region40
        $region39: #{tpu_custom_call.1} parent=11 // pred_region
          %s598 = ssub.s32 256, 256
          %599 = vsyncadd [#allocation16], %s598
          %s600 = sshll.u32 [#allocation15], 4
          %s601 = int_to_ptr.vmem [resolvable:$true] %s600
          %606 = dma.hbm_to_vmem [thread:$0]  %s8, 256, %s601, [#allocation16], 64, 64, 4
        $region40: #{tpu_custom_call.1} parent=11 // pred_fallthru
          _
        // Predicated region
        $region41: #{tpu_custom_call.1} parent=11 // pred_check
          %p607 = pneg %p275
        $region42: #{tpu_custom_call.1} parent=11 // pred_check_branch
          %609 = sbr.rel (%p607) target = $region44
        $region43: #{tpu_custom_call.1} parent=11 // pred_region
          %s611 = ssub.s32 16, 16
          %612 = vsyncadd [#allocation16], %s611
          %s614 = sshll.u32 [#allocation17], 4
          %s615 = int_to_ptr.vmem [resolvable:$true] %s614
          %617 = dma.hbm_to_vmem [thread:$0]  %s9, 16, %s615, [#allocation16]
        $region44: #{tpu_custom_call.1} parent=11 // pred_fallthru
          _
        // Predicated region
        $region45: #{tpu_custom_call.1} parent=11 // pred_check
          %p618 = pneg %p296
        $region46: #{tpu_custom_call.1} parent=11 // pred_check_branch
          %620 = sbr.rel (%p618) target = $region48
        $region47: #{tpu_custom_call.1} parent=11 // pred_region
          _
        $region48: #{tpu_custom_call.1} parent=11 // pred_fallthru
          _
        // Predicated region
        $region49: #{tpu_custom_call.1} parent=11 // pred_check
          %p621 = pneg %p317
        $region50: #{tpu_custom_call.1} parent=11 // pred_check_branch
          %623 = sbr.rel (%p621) target = $region52
        $region51: #{tpu_custom_call.1} parent=11 // pred_region
          %s625 = ssub.s32 16, 16
          %626 = vsyncadd [#allocation19], %s625
          %s628 = sshll.u32 [#allocation18], 4
          %s629 = int_to_ptr.vmem [resolvable:$true] %s628
          %631 = dma.hbm_to_vmem [thread:$0]  %s11, 16, %s629, [#allocation19]
        $region52: #{tpu_custom_call.1} parent=11 // pred_fallthru
          _
        // Predicated region
        $region53: #{tpu_custom_call.1} parent=11 // pred_check
          %p632 = pneg %p338
        $region54: #{tpu_custom_call.1} parent=11 // pred_check_branch
          %634 = sbr.rel (%p632) target = $region56
        $region55: #{tpu_custom_call.1} parent=11 // pred_region
          %s636 = ssub.s32 16, 16
          %637 = vsyncadd [#allocation19], %s636
          %s639 = sshll.u32 [#allocation20], 4
          %s640 = int_to_ptr.vmem [resolvable:$true] %s639
          %642 = dma.hbm_to_vmem [thread:$0]  %s12, 16, %s640, [#allocation19]
        $region56: #{tpu_custom_call.1} parent=11 // pred_fallthru
          _
        // Predicated region
        $region57: #{tpu_custom_call.1} parent=11 // pred_check
          %p643 = pneg %p359
        $region58: #{tpu_custom_call.1} parent=11 // pred_check_branch
          %645 = sbr.rel (%p643) target = $region60
        $region59: #{tpu_custom_call.1} parent=11 // pred_region
          %s647 = ssub.s32 16, 16
          %648 = vsyncadd [#allocation22], %s647
          %s650 = sshll.u32 [#allocation21], 4
          %s651 = int_to_ptr.vmem [resolvable:$true] %s650
          %653 = dma.hbm_to_vmem [thread:$0]  %s13, 16, %s651, [#allocation22]
        $region60: #{tpu_custom_call.1} parent=11 // pred_fallthru
          _
        // Predicated region
        $region61: #{tpu_custom_call.1} parent=11 // pred_check
          %p654 = pneg %p380
        $region62: #{tpu_custom_call.1} parent=11 // pred_check_branch
          %656 = sbr.rel (%p654) target = $region64
        $region63: #{tpu_custom_call.1} parent=11 // pred_region
          _
        $region64: #{tpu_custom_call.1} parent=11 // pred_fallthru
          _
        // Predicated region
        $region65: #{tpu_custom_call.1} parent=11 // pred_check
          %p657 = pneg %p401
        $region66: #{tpu_custom_call.1} parent=11 // pred_check_branch
          %659 = sbr.rel (%p657) target = $region68
        $region67: #{tpu_custom_call.1} parent=11 // pred_region
          _
        $region68: #{tpu_custom_call.1} parent=11 // pred_fallthru
          _
        // Predicated region
        $region69: #{tpu_custom_call.1} parent=11 // pred_check
          %p660 = pneg %p422
        $region70: #{tpu_custom_call.1} parent=11 // pred_check_branch
          %662 = sbr.rel (%p660) target = $region72
        $region71: #{tpu_custom_call.1} parent=11 // pred_region
          _
        $region72: #{tpu_custom_call.1} parent=11 // pred_fallthru
          _
        // Predicated region
        $region73: #{tpu_custom_call.1} parent=11 // pred_check
          %p663 = pneg %p443
        $region74: #{tpu_custom_call.1} parent=11 // pred_check_branch
          %665 = sbr.rel (%p663) target = $region76
        $region75: #{tpu_custom_call.1} parent=11 // pred_region
          _
        $region76: #{tpu_custom_call.1} parent=11 // pred_fallthru
          _
      $region12: #{tpu_custom_call.1} parent=5 // pred_fallthru
        _
      %p666 = scmp.lt.s32.totalorder %s41, 4
      // Predicated region
      $region77: #{tpu_custom_call.1} parent=5 // pred_check
        %p667 = pneg %p666
      $region78: #{tpu_custom_call.1} parent=5 // pred_check_branch
        %669 = sbr.rel (%p667) target = $region80
      $region79: #{tpu_custom_call.1} parent=5 // pred_region
        // Predicated region
        $region81: #{tpu_custom_call.1} parent=79 // pred_check
          %p670 = pneg %p73
        $region82: #{tpu_custom_call.1} parent=79 // pred_check_branch
          %672 = sbr.rel (%p670) target = $region84
        $region83: #{tpu_custom_call.1} parent=79 // pred_region
          %p673 = scmp.lt.s32.totalorder %s48, 1
          %s674 = scalar_select %p673, %s48, 1
          %s675 = smul.addr %s674, 4
          %s676 = smul.addr %s675, 8
          %s677 = scalar_lea.vmem %s0, %s676
        $region84: #{tpu_custom_call.1} parent=79 // pred_fallthru
          _
        // Predicated region
        $region85: #{tpu_custom_call.1} parent=79 // pred_check
          %p678 = pneg %p101
        $region86: #{tpu_custom_call.1} parent=79 // pred_check_branch
          %680 = sbr.rel (%p678) target = $region88
        $region87: #{tpu_custom_call.1} parent=79 // pred_region
          %s681 = sand.u32 %s91, 1
          %s682 = scalar_lea.sflag [#allocation7], %s681
          %s683 = sand.u32 %s91, 1
          %s684 = smul.addr %s683, 16
          %s685 = scalar_lea.vmem [#allocation6], %s684
          %s686 = smul.u32 2, %s49
          %s688 = ssub.s32 256, 256
          %689 = vsyncadd %s682, %s688
          %s690 = smul.addr %s48, 4
          %s691 = sadd.s32 %s686, %s690
          %s692 = smul.addr %s691, 128
          %s693 = scalar_lea.hbm %s1, %s692
          %s694 = sshll.u32 %s685, 4
          %s695 = int_to_ptr.vmem [resolvable:$true] %s694
          %700 = dma.hbm_to_vmem [thread:$0]  %s693, 256, %s695, %s682, 128, 128, 8
        $region88: #{tpu_custom_call.1} parent=79 // pred_fallthru
          _
      $region80: #{tpu_custom_call.1} parent=5 // pred_fallthru
        _
      %p701 = scmp.le.s32.totalorder 1, %s41
      %p702 = scmp.lt.s32.totalorder %s41, 5
      %p703 = pnand %p701, %p702
      %p704 = pneg %p703
      // Predicated region
      $region89: #{tpu_custom_call.1} parent=5 // pred_check
        _
      $region90: #{tpu_custom_call.1} parent=5 // pred_check_branch
        %706 = sbr.rel (%p703) target = $region92
      $region91: #{tpu_custom_call.1} parent=5 // pred_region
        %s707 = ssub.s32 %s41, 1
        %s708 = sand.u32 %s94, 1
        %s709 = scalar_lea.sflag [#allocation7], %s708
        %s710 = sand.u32 %s94, 1
        %s711 = smul.addr %s710, 16
        %s712 = scalar_lea.vmem [#allocation6], %s711
        // Predicated region
        $region93: #{tpu_custom_call.1} parent=91 // pred_check
          %p713 = pneg %p107
        $region94: #{tpu_custom_call.1} parent=91 // pred_check_branch
          %715 = sbr.rel (%p713) target = $region96
        $region95: #{tpu_custom_call.1} parent=91 // pred_region
          %716 = dma.done %s709, 256
        $region96: #{tpu_custom_call.1} parent=91 // pred_fallthru
          _
        // Predicated region
        $region97: #{tpu_custom_call.1} parent=91 // pred_check
          %p717 = pneg %p149
        $region98: #{tpu_custom_call.1} parent=91 // pred_check_branch
          %719 = sbr.rel (%p717) target = $region100
        $region99: #{tpu_custom_call.1} parent=91 // pred_region
          %720 = dma.done [#allocation10], 16
        $region100: #{tpu_custom_call.1} parent=91 // pred_fallthru
          _
        // Predicated region
        $region101: #{tpu_custom_call.1} parent=91 // pred_check
          %p721 = pneg %p191
        $region102: #{tpu_custom_call.1} parent=91 // pred_check_branch
          %723 = sbr.rel (%p721) target = $region104
        $region103: #{tpu_custom_call.1} parent=91 // pred_region
          %724 = dma.done [#allocation10], 16
        $region104: #{tpu_custom_call.1} parent=91 // pred_fallthru
          _
        // Predicated region
        $region105: #{tpu_custom_call.1} parent=91 // pred_check
          %p725 = pneg %p212
        $region106: #{tpu_custom_call.1} parent=91 // pred_check_branch
          %727 = sbr.rel (%p725) target = $region108
        $region107: #{tpu_custom_call.1} parent=91 // pred_region
          %728 = dma.done [#allocation13], 256
        $region108: #{tpu_custom_call.1} parent=91 // pred_fallthru
          _
        // Predicated region
        $region109: #{tpu_custom_call.1} parent=91 // pred_check
          %p729 = pneg %p233
        $region110: #{tpu_custom_call.1} parent=91 // pred_check_branch
          %731 = sbr.rel (%p729) target = $region112
        $region111: #{tpu_custom_call.1} parent=91 // pred_region
          %732 = dma.done [#allocation13], 16
        $region112: #{tpu_custom_call.1} parent=91 // pred_fallthru
          _
        // Predicated region
        $region113: #{tpu_custom_call.1} parent=91 // pred_check
          %p733 = pneg %p254
        $region114: #{tpu_custom_call.1} parent=91 // pred_check_branch
          %735 = sbr.rel (%p733) target = $region116
        $region115: #{tpu_custom_call.1} parent=91 // pred_region
          %736 = dma.done [#allocation16], 256
        $region116: #{tpu_custom_call.1} parent=91 // pred_fallthru
          _
        // Predicated region
        $region117: #{tpu_custom_call.1} parent=91 // pred_check
          %p737 = pneg %p275
        $region118: #{tpu_custom_call.1} parent=91 // pred_check_branch
          %739 = sbr.rel (%p737) target = $region120
        $region119: #{tpu_custom_call.1} parent=91 // pred_region
          %740 = dma.done [#allocation16], 16
        $region120: #{tpu_custom_call.1} parent=91 // pred_fallthru
          _
        // Predicated region
        $region121: #{tpu_custom_call.1} parent=91 // pred_check
          %p741 = pneg %p317
        $region122: #{tpu_custom_call.1} parent=91 // pred_check_branch
          %743 = sbr.rel (%p741) target = $region124
        $region123: #{tpu_custom_call.1} parent=91 // pred_region
          %744 = dma.done [#allocation19], 16
        $region124: #{tpu_custom_call.1} parent=91 // pred_fallthru
          _
        // Predicated region
        $region125: #{tpu_custom_call.1} parent=91 // pred_check
          %p745 = pneg %p338
        $region126: #{tpu_custom_call.1} parent=91 // pred_check_branch
          %747 = sbr.rel (%p745) target = $region128
        $region127: #{tpu_custom_call.1} parent=91 // pred_region
          %748 = dma.done [#allocation19], 16
        $region128: #{tpu_custom_call.1} parent=91 // pred_fallthru
          _
        // Predicated region
        $region129: #{tpu_custom_call.1} parent=91 // pred_check
          %p749 = pneg %p359
        $region130: #{tpu_custom_call.1} parent=91 // pred_check_branch
          %751 = sbr.rel (%p749) target = $region132
        $region131: #{tpu_custom_call.1} parent=91 // pred_region
          %752 = dma.done [#allocation22], 16
        $region132: #{tpu_custom_call.1} parent=91 // pred_fallthru
          _
        %p753 = scmp.lt.s32.totalorder %s50, 1
        %s754 = scalar_select %p753, %s50, 1
        %s755 = smul.addr %s754, 4
        %s756 = smul.addr %s755, 8
        %s757 = scalar_lea.vmem %s0, %s756
        %p758 = pneg %p79
        %p759 = pneg %p76
        %s760 = sand.u32 %s94, 1
        %s761 = scalar_lea.sflag [#allocation7], %s760
        %s762 = sand.u32 %s94, 1
        %s763 = smul.addr %s762, 16
        %s764 = scalar_lea.vmem [#allocation6], %s763
        %p765 = pneg %p107
        %p766 = pneg %p104
        %p767 = pneg %p128
        %p768 = pneg %p125
        %p769 = pneg %p149
        %p770 = pneg %p146
        %p771 = pneg %p170
        %p772 = pneg %p167
        %p773 = pneg %p191
        %p774 = pneg %p188
        %p775 = pneg %p212
        %p776 = pneg %p209
        %p777 = pneg %p233
        %p778 = pneg %p230
        %p779 = pneg %p254
        %p780 = pneg %p251
        %p781 = pneg %p275
        %p782 = pneg %p272
        %p783 = pneg %p296
        %p784 = pneg %p293
        %p785 = pneg %p317
        %p786 = pneg %p314
        %p787 = pneg %p338
        %p788 = pneg %p335
        %p789 = pneg %p359
        %p790 = pneg %p356
        %p791 = pneg %p380
        %p792 = pneg %p377
        %p793 = pneg %p401
        %p794 = pneg %p398
        %p795 = pneg %p422
        %p796 = pneg %p419
        %p797 = pneg %p443
        %p798 = pneg %p440
        %p799 = pneg %p471
        %p800 = pneg %p468
        %s801 = sand.u32 %s458, 1
        %s802 = scalar_lea.sflag [#allocation8], %s801
        %s803 = sand.u32 %s458, 1
        %s804 = smul.addr %s803, 16
        %s805 = scalar_lea.vmem [#allocation23], %s804
        %p806 = pneg %p499
        %p807 = pneg %p496
        %s808 = sand.u32 %s46, 1
        %s809 = scalar_lea.sflag [#allocation25], %s808
        %s810 = sand.u32 %s486, 1
        %s811 = smul.addr %s810, 16
        %s812 = scalar_lea.vmem [#allocation24], %s811
        %p813 = pneg %p527
        %p814 = pneg %p524
        %s815 = sand.u32 %s46, 1
        %s816 = scalar_lea.sflag [#allocation25], %s815
        %s817 = sand.u32 %s514, 1
        %s818 = smul.addr %s817, 16
        %s819 = scalar_lea.vmem [#allocation26], %s818
        %p820 = scmp.lt.s32.totalorder %s50, 1
        %s821 = scalar_select %p820, %s50, 1
        %s822 = smul.addr %s821, 4
        %s823 = smul.addr %s822, 8
        %s824 = scalar_lea.vmem %s0, %s823
        %s825 = smul.u32 2, %s51
        %s826 = smul.u32 2, %s51
        %s827 = smul.u32 2, %s51
        %s828 = smul.u32 2, %s51
        %p830 = scmp.eq.s32.totalorder %s51, 0
        // Predicated region
        $region133: #{tpu_custom_call.1} parent=91 // pred_check
          %p831 = pneg %p830
        $region134: #{tpu_custom_call.1} parent=91 // pred_check_branch
          %833 = sbr.rel (%p831) target = $region136
        $region135: #{tpu_custom_call.1} parent=91 // pred_region
          %v834 = vld [vmem:[%s824] sm:$0xff]
          %v835 = vld [vmem:[%s824 + $0x8] sm:$0xff]
          %v836 = vld [vmem:[%s824 + $0x10] sm:$0xff]
          %v837 = vld [vmem:[%s824 + $0x18] sm:$0xff]
          %v838 = vld [vmem:[%s2] sm:$0x1]
          %v839 = vld [vmem:[#allocation9] sm:$0x1]
          %vm840 = vcmask 261120
          %v841 = vsel %vm840, %v834, 0.0
          %842 = vadd.xlane.f32.xlu0 %v841
          %v843 = vpop.xlane.xlu0 %842
          %v844 = vsel %vm840, %v835, 0.0
          %845 = vadd.xlane.f32.xlu0 %v844
          %v846 = vpop.xlane.xlu0 %845
          %v847 = vsel %vm840, %v836, 0.0
          %848 = vadd.xlane.f32.xlu0 %v847
          %v849 = vpop.xlane.xlu0 %848
          %v850 = vsel %vm840, %v837, 0.0
          %851 = vadd.xlane.f32.xlu0 %v850
          %v852 = vpop.xlane.xlu0 %851
          %v853 = vrcp.pop 32.0
          %v854 = vmul.f32 %v843, %v853
          %v855 = vmul.f32 %v846, %v853
          %v856 = vmul.f32 %v849, %v853
          %v857 = vmul.f32 %v852, %v853
          %v858 = vsub.f32 %v834, %v854
          %v859 = vsub.f32 %v835, %v855
          %v860 = vsub.f32 %v836, %v856
          %v861 = vsub.f32 %v837, %v857
          %v862 = vmul.f32 %v858, %v858
          %v863 = vmul.f32 %v859, %v859
          %v864 = vmul.f32 %v860, %v860
          %v865 = vmul.f32 %v861, %v861
          %v866 = vsel %vm840, %v862, 0.0
          %867 = vadd.xlane.f32.xlu0 %v866
          %v868 = vpop.xlane.xlu0 %867
          %v869 = vsel %vm840, %v863, 0.0
          %870 = vadd.xlane.f32.xlu0 %v869
          %v871 = vpop.xlane.xlu0 %870
          %v872 = vsel %vm840, %v864, 0.0
          %873 = vadd.xlane.f32.xlu0 %v872
          %v874 = vpop.xlane.xlu0 %873
          %v875 = vsel %vm840, %v865, 0.0
          %876 = vadd.xlane.f32.xlu0 %v875
          %v877 = vpop.xlane.xlu0 %876
          %v878 = vmul.f32 %v868, %v853
          %v879 = vmul.f32 %v871, %v853
          %v880 = vmul.f32 %v874, %v853
          %v881 = vmul.f32 %v877, %v853
          %v882 = vadd.f32 %v878, 1e-05
          %v883 = vadd.f32 %v879, 1e-05
          %v884 = vadd.f32 %v880, 1e-05
          %v885 = vadd.f32 %v881, 1e-05
          %v886 = vrsqrt.pop %v882
          %v887 = vrsqrt.pop %v883
          %v888 = vrsqrt.pop %v884
          %v889 = vrsqrt.pop %v885
          %v890 = vmul.f32 %v858, %v886
          %v891 = vmul.f32 %v859, %v887
          %v892 = vmul.f32 %v860, %v888
          %v893 = vmul.f32 %v861, %v889
          %v895 = vlaneseq
          %v896 = vshrl.u32 %v895, 7
          %v897 = vsub.s32 0, %v896
          %v898 = vrot.slane %v838, %v897
          %v900 = vmul.f32 %v890, %v898
          %v901 = vmul.f32 %v891, %v898
          %v902 = vmul.f32 %v892, %v898
          %v903 = vmul.f32 %v893, %v898
          %v905 = vlaneseq
          %v906 = vshrl.u32 %v905, 7
          %v907 = vsub.s32 0, %v906
          %v908 = vrot.slane %v839, %v907
          %v910 = vadd.f32 %v900, %v908
          %v911 = vadd.f32 %v901, %v908
          %v912 = vadd.f32 %v902, %v908
          %v913 = vadd.f32 %v903, %v908
          %v914 = vpack.c.bf16 %v911, %v910
          %v915 = vpack.c.bf16 %v913, %v912
          %916 = vst.msk [vmem:[#allocation2] sm:$0xff] %vm840, %v914
          %917 = vst.msk [vmem:[#allocation2 + $0x8] sm:$0xff] %vm840, %v915
          %v918 = vld [vmem:[#allocation12] sm:$0xf]
          %v919 = vld [vmem:[#allocation12 + $0x4] sm:$0xf]
          %v920 = vld [vmem:[#allocation12 + $0x8] sm:$0xf]
          %v921 = vld [vmem:[#allocation12 + $0xc] sm:$0xf]
          %v922 = vld [vmem:[#allocation14] sm:$0x1]
          %v924 = vlaneseq
          %v925 = vshrl.u32 %v924, 7
          %v926 = vsub.s32 0, %v925
          %v927 = vrot.slane %v922, %v926
          %v933 = vunpack.c.l.b16 %v918
          %v934 = vunpack.c.l.b16 %v919
          %v935 = vunpack.c.l.b16 %v920
          %v936 = vunpack.c.l.b16 %v921
          %v937 = vpack.c.b16 %v934, %v933
          %v938 = vpack.c.b16 %v936, %v935
          %v942 = vsel %vm840, %v914, 0
          %v945 = vsel %vm840, %v915, 0
          %947 = vmatprep.subr.bf16.mxu0 0
          %948 = vmatpush1.bf16.msra.mxu0 %v937
          %949 = vmatprep.subr.bf16.mxu0 0
          %950 = vmatpush1.bf16.msra.mxu0 %v938
          %951 = vmatprep.subr.bf16.mxu0 0
          %952 = vmatpush1.bf16.msra.mxu0 0
          %953 = vmatprep.subr.bf16.mxu0 0
          %954 = vmatpush1.bf16.msra.mxu0 0
          %955 = vmatprep.subr.bf16.mxu0 0
          %956 = vmatpush1.bf16.msra.mxu0 0
          %957 = vmatprep.subr.bf16.mxu0 0
          %958 = vmatpush1.bf16.msra.mxu0 0
          %959 = vmatprep.subr.bf16.mxu0 0
          %960 = vmatpush1.bf16.msra.mxu0 0
          %961 = vmatprep.subr.bf16.mxu0 0
          %962 = vmatpush1.bf16.msra.mxu0 0
          %963 = vmatprep.subr.bf16.mxu0 0
          %964 = vmatpush1.bf16.msra.mxu0 0
          %965 = vmatprep.subr.bf16.mxu0 0
          %966 = vmatpush1.bf16.msra.mxu0 0
          %967 = vmatprep.subr.bf16.mxu0 0
          %968 = vmatpush1.bf16.msra.mxu0 0
          %969 = vmatprep.subr.bf16.mxu0 0
          %970 = vmatpush1.bf16.msra.mxu0 0
          %971 = vmatprep.subr.bf16.mxu0 0
          %972 = vmatpush1.bf16.msra.mxu0 0
          %973 = vmatprep.subr.bf16.mxu0 0
          %974 = vmatpush1.bf16.msra.mxu0 0
          %975 = vmatprep.subr.bf16.mxu0 0
          %976 = vmatpush1.bf16.msra.mxu0 0
          %977 = vmatprep.subr.bf16.mxu0 0
          %978 = vmatpush1.bf16.msra.mxu0 0
          %979 = vmatprep.mubr.bf16.mxu0 0
          %980 = vmatmul.mubr.bf16.gmra.mrb[0].mxu0 %v942
          %v981 = vpop.f32.mrb[0].mxu0
          %v982 = vadd.f32 %v927, %v981
          %v983 = vpop.f32.mrb[0].mxu0
          %v984 = vpop.f32.mrb[0].mxu0
          %v985 = vadd.f32 %v927, %v984
          %v986 = vpop.f32.mrb[0].mxu0
          %987 = vmatprep.mubr.bf16.mxu0 0
          %988 = vmatmul.mubr.bf16.gmra.mrb[0].mxu0 %v945
          %v989 = vpop.f32.mrb[0].mxu0
          %v990 = vadd.f32 %v927, %v989
          %v991 = vpop.f32.mrb[0].mxu0
          %v992 = vpop.f32.mrb[0].mxu0
          %v993 = vadd.f32 %v927, %v992
          %v994 = vpop.f32.mrb[0].mxu0
          %995 = vdwg.mxu0
          %v996 = vld [vmem:[#allocation15] sm:$0xf]
          %v997 = vld [vmem:[#allocation15 + $0x4] sm:$0xf]
          %v998 = vld [vmem:[#allocation15 + $0x8] sm:$0xf]
          %v999 = vld [vmem:[#allocation15 + $0xc] sm:$0xf]
          %v1000 = vld [vmem:[#allocation17] sm:$0x1]
          %v1002 = vlaneseq
          %v1003 = vshrl.u32 %v1002, 7
          %v1004 = vsub.s32 0, %v1003
          %v1005 = vrot.slane %v1000, %v1004
          %v1011 = vunpack.c.l.b16 %v996
          %v1012 = vunpack.c.l.b16 %v997
          %v1013 = vunpack.c.l.b16 %v998
          %v1014 = vunpack.c.l.b16 %v999
          %v1015 = vpack.c.b16 %v1012, %v1011
          %v1016 = vpack.c.b16 %v1014, %v1013
          %1019 = vmatprep.subr.bf16.mxu0 0
          %1020 = vmatpush1.bf16.msra.mxu0 %v1015
          %1021 = vmatprep.subr.bf16.mxu0 0
          %1022 = vmatpush1.bf16.msra.mxu0 %v1016
          %1023 = vmatprep.subr.bf16.mxu0 0
          %1024 = vmatpush1.bf16.msra.mxu0 0
          %1025 = vmatprep.subr.bf16.mxu0 0
          %1026 = vmatpush1.bf16.msra.mxu0 0
          %1027 = vmatprep.subr.bf16.mxu0 0
          %1028 = vmatpush1.bf16.msra.mxu0 0
          %1029 = vmatprep.subr.bf16.mxu0 0
          %1030 = vmatpush1.bf16.msra.mxu0 0
          %1031 = vmatprep.subr.bf16.mxu0 0
          %1032 = vmatpush1.bf16.msra.mxu0 0
          %1033 = vmatprep.subr.bf16.mxu0 0
          %1034 = vmatpush1.bf16.msra.mxu0 0
          %1035 = vmatprep.subr.bf16.mxu0 0
          %1036 = vmatpush1.bf16.msra.mxu0 0
          %1037 = vmatprep.subr.bf16.mxu0 0
          %1038 = vmatpush1.bf16.msra.mxu0 0
          %1039 = vmatprep.subr.bf16.mxu0 0
          %1040 = vmatpush1.bf16.msra.mxu0 0
          %1041 = vmatprep.subr.bf16.mxu0 0
          %1042 = vmatpush1.bf16.msra.mxu0 0
          %1043 = vmatprep.subr.bf16.mxu0 0
          %1044 = vmatpush1.bf16.msra.mxu0 0
          %1045 = vmatprep.subr.bf16.mxu0 0
          %1046 = vmatpush1.bf16.msra.mxu0 0
          %1047 = vmatprep.subr.bf16.mxu0 0
          %1048 = vmatpush1.bf16.msra.mxu0 0
          %1049 = vmatprep.subr.bf16.mxu0 0
          %1050 = vmatpush1.bf16.msra.mxu0 0
          %1051 = vmatprep.mubr.bf16.mxu0 0
          %1052 = vmatmul.mubr.bf16.gmra.mrb[0].mxu0 %v942
          %v1053 = vpop.f32.mrb[0].mxu0
          %v1054 = vadd.f32 %v1005, %v1053
          %v1055 = vpop.f32.mrb[0].mxu0
          %v1056 = vpop.f32.mrb[0].mxu0
          %v1057 = vadd.f32 %v1005, %v1056
          %v1058 = vpop.f32.mrb[0].mxu0
          %1059 = vmatprep.mubr.bf16.mxu0 0
          %1060 = vmatmul.mubr.bf16.gmra.mrb[0].mxu0 %v945
          %v1061 = vpop.f32.mrb[0].mxu0
          %v1062 = vadd.f32 %v1005, %v1061
          %v1063 = vpop.f32.mrb[0].mxu0
          %v1064 = vpop.f32.mrb[0].mxu0
          %v1065 = vadd.f32 %v1005, %v1064
          %v1066 = vpop.f32.mrb[0].mxu0
          %1067 = vdwg.mxu0
          %v1068 = vpack.c.bf16 %v985, %v982
          %v1069 = vpack.c.bf16 %v993, %v990
          %1070 = vst.msk [vmem:[#allocation3] sm:$0xff] %vm840, %v1068
          %1071 = vst.msk [vmem:[#allocation3 + $0x8] sm:$0xff] %vm840, %v1069
          %v1072 = vpack.c.bf16 %v1057, %v1054
          %v1073 = vpack.c.bf16 %v1065, %v1062
          %1074 = vst.msk [vmem:[#allocation4] sm:$0xff] %vm840, %v1072
          %1075 = vst.msk [vmem:[#allocation4 + $0x8] sm:$0xff] %vm840, %v1073
        $region136: #{tpu_custom_call.1} parent=91 // pred_fallthru
          _
        %s1076 = smul.u32 %s51, 16
        %s1077 = sshra.s32 %s1076, 4
        %s1078 = sand.u32 %s1076, 15
        %s1079 = smul.addr %s1077, 8
        %s1080 = scalar_lea.vmem [#allocation3], %s1079
        %v1081 = vld [vmem:[%s1080] sm:$0xff]
        %v1082 = vunpack.c.l.bf16 %v1081
        %v1083 = vunpack.c.h.bf16 %v1081
        %vm1084 = vcmask 261120
        %1085 = vst.msk [vmem:[%s812] sm:$0xff] %vm1084, %v1082
        %1086 = vst.msk [vmem:[%s812 + $0x8] sm:$0xff] %vm1084, %v1083
        %s1087 = smul.addr %s1077, 8
        %s1088 = scalar_lea.vmem [#allocation4], %s1087
        %v1089 = vld [vmem:[%s1088] sm:$0xff]
        %v1090 = vunpack.c.l.bf16 %v1089
        %v1091 = vunpack.c.h.bf16 %v1089
        %1092 = vst.msk [vmem:[%s819] sm:$0xff] %vm1084, %v1090
        %1093 = vst.msk [vmem:[%s819 + $0x8] sm:$0xff] %vm1084, %v1091
        %s1094 = smul.addr %s1077, 8
        %s1095 = scalar_lea.vmem [#allocation2], %s1094
        %v1096 = vld [vmem:[%s1095] sm:$0xff]
        %v1097 = vld [vmem:[%s4] sm:$0xf]
        %v1098 = vld [vmem:[%s4 + $0x4] sm:$0xf]
        %v1099 = vld [vmem:[%s4 + $0x8] sm:$0xf]
        %v1100 = vld [vmem:[%s4 + $0xc] sm:$0xf]
        %v1101 = vld [vmem:[#allocation11] sm:$0x1]
        %v1103 = vlaneseq
        %v1104 = vshrl.u32 %v1103, 7
        %v1105 = vsub.s32 0, %v1104
        %v1106 = vrot.slane %v1101, %v1105
        %v1112 = vunpack.c.l.b16 %v1097
        %v1113 = vunpack.c.l.b16 %v1098
        %v1114 = vunpack.c.l.b16 %v1099
        %v1115 = vunpack.c.l.b16 %v1100
        %v1116 = vpack.c.b16 %v1113, %v1112
        %v1117 = vpack.c.b16 %v1115, %v1114
        %v1121 = vsel %vm1084, %v1096, 0
        %1123 = vmatprep.subr.bf16.mxu0 0
        %1124 = vmatpush1.bf16.msra.mxu0 %v1116
        %1125 = vmatprep.subr.bf16.mxu0 0
        %1126 = vmatpush1.bf16.msra.mxu0 %v1117
        %1127 = vmatprep.subr.bf16.mxu0 0
        %1128 = vmatpush1.bf16.msra.mxu0 0
        %1129 = vmatprep.subr.bf16.mxu0 0
        %1130 = vmatpush1.bf16.msra.mxu0 0
        %1131 = vmatprep.subr.bf16.mxu0 0
        %1132 = vmatpush1.bf16.msra.mxu0 0
        %1133 = vmatprep.subr.bf16.mxu0 0
        %1134 = vmatpush1.bf16.msra.mxu0 0
        %1135 = vmatprep.subr.bf16.mxu0 0
        %1136 = vmatpush1.bf16.msra.mxu0 0
        %1137 = vmatprep.subr.bf16.mxu0 0
        %1138 = vmatpush1.bf16.msra.mxu0 0
        %1139 = vmatprep.subr.bf16.mxu0 0
        %1140 = vmatpush1.bf16.msra.mxu0 0
        %1141 = vmatprep.subr.bf16.mxu0 0
        %1142 = vmatpush1.bf16.msra.mxu0 0
        %1143 = vmatprep.subr.bf16.mxu0 0
        %1144 = vmatpush1.bf16.msra.mxu0 0
        %1145 = vmatprep.subr.bf16.mxu0 0
        %1146 = vmatpush1.bf16.msra.mxu0 0
        %1147 = vmatprep.subr.bf16.mxu0 0
        %1148 = vmatpush1.bf16.msra.mxu0 0
        %1149 = vmatprep.subr.bf16.mxu0 0
        %1150 = vmatpush1.bf16.msra.mxu0 0
        %1151 = vmatprep.subr.bf16.mxu0 0
        %1152 = vmatpush1.bf16.msra.mxu0 0
        %1153 = vmatprep.subr.bf16.mxu0 0
        %1154 = vmatpush1.bf16.msra.mxu0 0
        %1155 = vmatprep.mubr.bf16.mxu0 0
        %1156 = vmatmul.mubr.bf16.gmra.mrb[0].mxu0 %v1121
        %v1157 = vpop.f32.mrb[0].mxu0
        %v1158 = vadd.f32 %v1106, %v1157
        %v1159 = vpop.f32.mrb[0].mxu0
        %v1160 = vpop.f32.mrb[0].mxu0
        %v1161 = vadd.f32 %v1106, %v1160
        %v1162 = vpop.f32.mrb[0].mxu0
        %1163 = vdwg.mxu0
        %v1164 = vpack.c.bf16 %v1161, %v1158
        %v1165 = vlaneseq
        %v1166 = vshrl.u32 %v1165, 7
        %v1167 = vadd.s32 %v1166, 8
        %v1168 = vstv %s1076
        %v1169 = vadd.s32 %v1168, %v1166
        %v1170 = vadd.s32 %v1168, %v1167
        %v1171 = vlaneseq
        %v1172 = vand.u32 %v1171, 127
        %vm1173 = vcmp.le.s32.totalorder %v1172, %v1169
        %vm1174 = vcmp.le.s32.totalorder %v1172, %v1170
        %v1175 = vsel %vm1173, 0.0, -3.4028235e+38
        %v1176 = vsel %vm1174, 0.0, -3.4028235e+38
        %v1177 = vld [vmem:[#allocation3] sm:$0xff]
        %v1178 = vld [vmem:[#allocation3 + $0x8] sm:$0xff]
        %v1179 = vld [vmem:[#allocation4] sm:$0xff]
        %v1180 = vld [vmem:[#allocation4 + $0x8] sm:$0xff]
        %vm1181 = vcmask 64512
        %v1183 = vsel %vm1181, %v1164, 0
        %v1186 = vsel %vm1181, %v1177, 0
        %v1189 = vsel %vm1181, %v1178, 0
        %1191 = vmatprep.subr.bf16.mxu0 0
        %1192 = vmatpush1.bf16.xpose.msra.mxu0 %v1186
        %1193 = vmatprep.subr.bf16.mxu0 0
        %1194 = vmatpush1.bf16.xpose.msra.mxu0 %v1189
        %1195 = vmatprep.subr.bf16.mxu0 0
        %1196 = vmatpush1.bf16.xpose.msra.mxu0 0
        %1197 = vmatprep.subr.bf16.mxu0 0
        %1198 = vmatpush1.bf16.xpose.msra.mxu0 0
        %1199 = vmatprep.subr.bf16.mxu0 0
        %1200 = vmatpush1.bf16.xpose.msra.mxu0 0
        %1201 = vmatprep.subr.bf16.mxu0 0
        %1202 = vmatpush1.bf16.xpose.msra.mxu0 0
        %1203 = vmatprep.subr.bf16.mxu0 0
        %1204 = vmatpush1.bf16.xpose.msra.mxu0 0
        %1205 = vmatprep.subr.bf16.mxu0 0
        %1206 = vmatpush1.bf16.xpose.msra.mxu0 0
        %1207 = vmatprep.subr.bf16.mxu0 0
        %1208 = vmatpush1.bf16.xpose.msra.mxu0 0
        %1209 = vmatprep.subr.bf16.mxu0 0
        %1210 = vmatpush1.bf16.xpose.msra.mxu0 0
        %1211 = vmatprep.subr.bf16.mxu0 0
        %1212 = vmatpush1.bf16.xpose.msra.mxu0 0
        %1213 = vmatprep.subr.bf16.mxu0 0
        %1214 = vmatpush1.bf16.xpose.msra.mxu0 0
        %1215 = vmatprep.subr.bf16.mxu0 0
        %1216 = vmatpush1.bf16.xpose.msra.mxu0 0
        %1217 = vmatprep.subr.bf16.mxu0 0
        %1218 = vmatpush1.bf16.xpose.msra.mxu0 0
        %1219 = vmatprep.subr.bf16.mxu0 0
        %1220 = vmatpush1.bf16.xpose.msra.mxu0 0
        %1221 = vmatprep.subr.bf16.mxu0 0
        %1222 = vmatpush1.bf16.xpose.msra.mxu0 0
        %1223 = vmatprep.mubr.bf16.mxu0 0
        %1224 = vmatmul.mubr.bf16.gmra.mrb[0].mxu0 %v1183
        %v1225 = vpop.f32.mrb[0].mxu0
        %v1226 = vadd.f32 %v1175, %v1225
        %v1227 = vpop.f32.mrb[0].mxu0
        %v1228 = vpop.f32.mrb[0].mxu0
        %v1229 = vadd.f32 %v1176, %v1228
        %v1230 = vpop.f32.mrb[0].mxu0
        %1231 = vdwg.mxu0
        %v1232 = vsel %vm1084, %v1226, -inf
        %1233 = vmax.xlane.f32.xlu0 %v1232
        %v1234 = vpop.xlane.xlu0 %1233
        %v1235 = vsel %vm1084, %v1229, -inf
        %1236 = vmax.xlane.f32.xlu0 %v1235
        %v1237 = vpop.xlane.xlu0 %1236
        %v1238 = vsub.f32 %v1226, %v1234
        %v1239 = vsub.f32 %v1229, %v1237
        %v1240 = vmul.f32 %v1238, 1.442695
        %v1241 = vpow.pop %v1240
        %v1242 = vmul.f32 %v1239, 1.442695
        %v1243 = vpow.pop %v1242
        %v1244 = vsel %vm1084, %v1241, 0.0
        %1245 = vadd.xlane.f32.xlu0 %v1244
        %v1246 = vpop.xlane.xlu0 %1245
        %v1247 = vsel %vm1084, %v1243, 0.0
        %1248 = vadd.xlane.f32.xlu0 %v1247
        %v1249 = vpop.xlane.xlu0 %1248
        %v1250 = vrcp.pop %v1246
        %v1251 = vrcp.pop %v1249
        %v1252 = vmul.f32 %v1246, %v1250
        %v1253 = vmul.f32 %v1249, %v1251
        %v1254 = vsub.f32 2.0, %v1252
        %v1255 = vsub.f32 2.0, %v1253
        %v1256 = vmul.f32 %v1250, %v1254
        %v1257 = vmul.f32 %v1251, %v1255
        %v1258 = vmul.f32 %v1241, %v1256
        %v1259 = vmul.f32 %v1243, %v1257
        %v1260 = vpack.c.bf16 %v1259, %v1258
        %v1262 = vsel %vm1084, %v1260, 0
        %1264 = vmatprep.subr.bf16.mxu0 0
        %1265 = vmatpush1.bf16.msra.mxu0 %v1179
        %1266 = vmatprep.subr.bf16.mxu0 0
        %1267 = vmatpush1.bf16.msra.mxu0 %v1180
        %1268 = vmatprep.subr.bf16.mxu0 0
        %1269 = vmatpush1.bf16.msra.mxu0 0
        %1270 = vmatprep.subr.bf16.mxu0 0
        %1271 = vmatpush1.bf16.msra.mxu0 0
        %1272 = vmatprep.subr.bf16.mxu0 0
        %1273 = vmatpush1.bf16.msra.mxu0 0
        %1274 = vmatprep.subr.bf16.mxu0 0
        %1275 = vmatpush1.bf16.msra.mxu0 0
        %1276 = vmatprep.subr.bf16.mxu0 0
        %1277 = vmatpush1.bf16.msra.mxu0 0
        %1278 = vmatprep.subr.bf16.mxu0 0
        %1279 = vmatpush1.bf16.msra.mxu0 0
        %1280 = vmatprep.subr.bf16.mxu0 0
        %1281 = vmatpush1.bf16.msra.mxu0 0
        %1282 = vmatprep.subr.bf16.mxu0 0
        %1283 = vmatpush1.bf16.msra.mxu0 0
        %1284 = vmatprep.subr.bf16.mxu0 0
        %1285 = vmatpush1.bf16.msra.mxu0 0
        %1286 = vmatprep.subr.bf16.mxu0 0
        %1287 = vmatpush1.bf16.msra.mxu0 0
        %1288 = vmatprep.subr.bf16.mxu0 0
        %1289 = vmatpush1.bf16.msra.mxu0 0
        %1290 = vmatprep.subr.bf16.mxu0 0
        %1291 = vmatpush1.bf16.msra.mxu0 0
        %1292 = vmatprep.subr.bf16.mxu0 0
        %1293 = vmatpush1.bf16.msra.mxu0 0
        %1294 = vmatprep.subr.bf16.mxu0 0
        %1295 = vmatpush1.bf16.msra.mxu0 0
        %1296 = vmatprep.mubr.bf16.mxu0 0
        %1297 = vmatmul.mubr.bf16.gmra.mrb[0].mxu0 %v1262
        %v1298 = vpop.f32.mrb[0].mxu0
        %v1299 = vadd.f32 0.0, %v1298
        %v1300 = vpop.f32.mrb[0].mxu0
        %v1301 = vpop.f32.mrb[0].mxu0
        %v1302 = vadd.f32 0.0, %v1301
        %v1303 = vpop.f32.mrb[0].mxu0
        %1304 = vdwg.mxu0
        %v1305 = vpack.c.bf16 %v1302, %v1299
        %1306 = vst.msk [vmem:[#allocation5] sm:$0xff] %vm1181, %v1305
        %v1307 = vld [vmem:[#allocation3] sm:$0xff]
        %v1308 = vld [vmem:[#allocation3 + $0x8] sm:$0xff]
        %v1309 = vld [vmem:[#allocation4] sm:$0xff]
        %v1310 = vld [vmem:[#allocation4 + $0x8] sm:$0xff]
        %1312 = vrot.lane.b32.xlu0 %v1164, 120
        %v1313 = vpop.permute.xlu0 %1312
        %1316 = vrot.lane.b32.xlu0 %v1307, 120
        %v1317 = vpop.permute.xlu0 %1316
        %1318 = vrot.lane.b32.xlu0 %v1308, 120
        %v1319 = vpop.permute.xlu0 %1318
        %v1321 = vsel %vm1181, %v1313, 0
        %v1324 = vsel %vm1181, %v1317, 0
        %v1327 = vsel %vm1181, %v1319, 0
        %1329 = vmatprep.subr.bf16.mxu0 0
        %1330 = vmatpush1.bf16.xpose.msra.mxu0 %v1324
        %1331 = vmatprep.subr.bf16.mxu0 0
        %1332 = vmatpush1.bf16.xpose.msra.mxu0 %v1327
        %1333 = vmatprep.subr.bf16.mxu0 0
        %1334 = vmatpush1.bf16.xpose.msra.mxu0 0
        %1335 = vmatprep.subr.bf16.mxu0 0
        %1336 = vmatpush1.bf16.xpose.msra.mxu0 0
        %1337 = vmatprep.subr.bf16.mxu0 0
        %1338 = vmatpush1.bf16.xpose.msra.mxu0 0
        %1339 = vmatprep.subr.bf16.mxu0 0
        %1340 = vmatpush1.bf16.xpose.msra.mxu0 0
        %1341 = vmatprep.subr.bf16.mxu0 0
        %1342 = vmatpush1.bf16.xpose.msra.mxu0 0
        %1343 = vmatprep.subr.bf16.mxu0 0
        %1344 = vmatpush1.bf16.xpose.msra.mxu0 0
        %1345 = vmatprep.subr.bf16.mxu0 0
        %1346 = vmatpush1.bf16.xpose.msra.mxu0 0
        %1347 = vmatprep.subr.bf16.mxu0 0
        %1348 = vmatpush1.bf16.xpose.msra.mxu0 0
        %1349 = vmatprep.subr.bf16.mxu0 0
        %1350 = vmatpush1.bf16.xpose.msra.mxu0 0
        %1351 = vmatprep.subr.bf16.mxu0 0
        %1352 = vmatpush1.bf16.xpose.msra.mxu0 0
        %1353 = vmatprep.subr.bf16.mxu0 0
        %1354 = vmatpush1.bf16.xpose.msra.mxu0 0
        %1355 = vmatprep.subr.bf16.mxu0 0
        %1356 = vmatpush1.bf16.xpose.msra.mxu0 0
        %1357 = vmatprep.subr.bf16.mxu0 0
        %1358 = vmatpush1.bf16.xpose.msra.mxu0 0
        %1359 = vmatprep.subr.bf16.mxu0 0
        %1360 = vmatpush1.bf16.xpose.msra.mxu0 0
        %1361 = vmatprep.mubr.bf16.mxu0 0
        %1362 = vmatmul.mubr.bf16.gmra.mrb[0].mxu0 %v1321
        %v1363 = vpop.f32.mrb[0].mxu0
        %v1364 = vadd.f32 %v1175, %v1363
        %v1365 = vpop.f32.mrb[0].mxu0
        %v1366 = vpop.f32.mrb[0].mxu0
        %v1367 = vadd.f32 %v1176, %v1366
        %v1368 = vpop.f32.mrb[0].mxu0
        %1369 = vdwg.mxu0
        %v1370 = vsel %vm1084, %v1364, -inf
        %1371 = vmax.xlane.f32.xlu0 %v1370
        %v1372 = vpop.xlane.xlu0 %1371
        %v1373 = vsel %vm1084, %v1367, -inf
        %1374 = vmax.xlane.f32.xlu0 %v1373
        %v1375 = vpop.xlane.xlu0 %1374
        %v1376 = vsub.f32 %v1364, %v1372
        %v1377 = vsub.f32 %v1367, %v1375
        %v1378 = vmul.f32 %v1376, 1.442695
        %v1379 = vpow.pop %v1378
        %v1380 = vmul.f32 %v1377, 1.442695
        %v1381 = vpow.pop %v1380
        %v1382 = vsel %vm1084, %v1379, 0.0
        %1383 = vadd.xlane.f32.xlu0 %v1382
        %v1384 = vpop.xlane.xlu0 %1383
        %v1385 = vsel %vm1084, %v1381, 0.0
        %1386 = vadd.xlane.f32.xlu0 %v1385
        %v1387 = vpop.xlane.xlu0 %1386
        %v1388 = vrcp.pop %v1384
        %v1389 = vrcp.pop %v1387
        %v1390 = vmul.f32 %v1384, %v1388
        %v1391 = vmul.f32 %v1387, %v1389
        %v1392 = vsub.f32 2.0, %v1390
        %v1393 = vsub.f32 2.0, %v1391
        %v1394 = vmul.f32 %v1388, %v1392
        %v1395 = vmul.f32 %v1389, %v1393
        %v1396 = vmul.f32 %v1379, %v1394
        %v1397 = vmul.f32 %v1381, %v1395
        %v1398 = vpack.c.bf16 %v1397, %v1396
        %1401 = vrot.lane.b32.xlu0 %v1309, 120
        %v1402 = vpop.permute.xlu0 %1401
        %1403 = vrot.lane.b32.xlu0 %v1310, 120
        %v1404 = vpop.permute.xlu0 %1403
        %v1408 = vsel %vm1084, %v1398, 0
        %1410 = vmatprep.subr.bf16.mxu0 0
        %1411 = vmatpush1.bf16.msra.mxu0 %v1402
        %1412 = vmatprep.subr.bf16.mxu0 0
        %1413 = vmatpush1.bf16.msra.mxu0 %v1404
        %1414 = vmatprep.subr.bf16.mxu0 0
        %1415 = vmatpush1.bf16.msra.mxu0 0
        %1416 = vmatprep.subr.bf16.mxu0 0
        %1417 = vmatpush1.bf16.msra.mxu0 0
        %1418 = vmatprep.subr.bf16.mxu0 0
        %1419 = vmatpush1.bf16.msra.mxu0 0
        %1420 = vmatprep.subr.bf16.mxu0 0
        %1421 = vmatpush1.bf16.msra.mxu0 0
        %1422 = vmatprep.subr.bf16.mxu0 0
        %1423 = vmatpush1.bf16.msra.mxu0 0
        %1424 = vmatprep.subr.bf16.mxu0 0
        %1425 = vmatpush1.bf16.msra.mxu0 0
        %1426 = vmatprep.subr.bf16.mxu0 0
        %1427 = vmatpush1.bf16.msra.mxu0 0
        %1428 = vmatprep.subr.bf16.mxu0 0
        %1429 = vmatpush1.bf16.msra.mxu0 0
        %1430 = vmatprep.subr.bf16.mxu0 0
        %1431 = vmatpush1.bf16.msra.mxu0 0
        %1432 = vmatprep.subr.bf16.mxu0 0
        %1433 = vmatpush1.bf16.msra.mxu0 0
        %1434 = vmatprep.subr.bf16.mxu0 0
        %1435 = vmatpush1.bf16.msra.mxu0 0
        %1436 = vmatprep.subr.bf16.mxu0 0
        %1437 = vmatpush1.bf16.msra.mxu0 0
        %1438 = vmatprep.subr.bf16.mxu0 0
        %1439 = vmatpush1.bf16.msra.mxu0 0
        %1440 = vmatprep.subr.bf16.mxu0 0
        %1441 = vmatpush1.bf16.msra.mxu0 0
        %1442 = vmatprep.mubr.bf16.mxu0 0
        %1443 = vmatmul.mubr.bf16.gmra.mrb[0].mxu0 %v1408
        %v1444 = vpop.f32.mrb[0].mxu0
        %v1445 = vadd.f32 0.0, %v1444
        %v1446 = vpop.f32.mrb[0].mxu0
        %v1447 = vpop.f32.mrb[0].mxu0
        %v1448 = vadd.f32 0.0, %v1447
        %v1449 = vpop.f32.mrb[0].mxu0
        %1450 = vdwg.mxu0
        %v1451 = vpack.c.bf16 %v1448, %v1445
        %1453 = vrot.lane.b32.xlu0 %v1451, 8
        %v1454 = vpop.permute.xlu0 %1453
        %vm1456 = vcmask 130112
        %1457 = vst.msk [vmem:[#allocation5] sm:$0xff] %vm1456, %v1454
        %v1458 = vld [vmem:[#allocation3] sm:$0xff]
        %v1459 = vld [vmem:[#allocation3 + $0x8] sm:$0xff]
        %v1460 = vld [vmem:[#allocation4] sm:$0xff]
        %v1461 = vld [vmem:[#allocation4 + $0x8] sm:$0xff]
        %1462 = vrot.lane.b32.xlu0 %v1164, 112
        %v1463 = vpop.permute.xlu0 %1462
        %1466 = vrot.lane.b32.xlu0 %v1458, 112
        %v1467 = vpop.permute.xlu0 %1466
        %1468 = vrot.lane.b32.xlu0 %v1459, 112
        %v1469 = vpop.permute.xlu0 %1468
        %v1471 = vsel %vm1181, %v1463, 0
        %v1474 = vsel %vm1181, %v1467, 0
        %v1477 = vsel %vm1181, %v1469, 0
        %1479 = vmatprep.subr.bf16.mxu0 0
        %1480 = vmatpush1.bf16.xpose.msra.mxu0 %v1474
        %1481 = vmatprep.subr.bf16.mxu0 0
        %1482 = vmatpush1.bf16.xpose.msra.mxu0 %v1477
        %1483 = vmatprep.subr.bf16.mxu0 0
        %1484 = vmatpush1.bf16.xpose.msra.mxu0 0
        %1485 = vmatprep.subr.bf16.mxu0 0
        %1486 = vmatpush1.bf16.xpose.msra.mxu0 0
        %1487 = vmatprep.subr.bf16.mxu0 0
        %1488 = vmatpush1.bf16.xpose.msra.mxu0 0
        %1489 = vmatprep.subr.bf16.mxu0 0
        %1490 = vmatpush1.bf16.xpose.msra.mxu0 0
        %1491 = vmatprep.subr.bf16.mxu0 0
        %1492 = vmatpush1.bf16.xpose.msra.mxu0 0
        %1493 = vmatprep.subr.bf16.mxu0 0
        %1494 = vmatpush1.bf16.xpose.msra.mxu0 0
        %1495 = vmatprep.subr.bf16.mxu0 0
        %1496 = vmatpush1.bf16.xpose.msra.mxu0 0
        %1497 = vmatprep.subr.bf16.mxu0 0
        %1498 = vmatpush1.bf16.xpose.msra.mxu0 0
        %1499 = vmatprep.subr.bf16.mxu0 0
        %1500 = vmatpush1.bf16.xpose.msra.mxu0 0
        %1501 = vmatprep.subr.bf16.mxu0 0
        %1502 = vmatpush1.bf16.xpose.msra.mxu0 0
        %1503 = vmatprep.subr.bf16.mxu0 0
        %1504 = vmatpush1.bf16.xpose.msra.mxu0 0
        %1505 = vmatprep.subr.bf16.mxu0 0
        %1506 = vmatpush1.bf16.xpose.msra.mxu0 0
        %1507 = vmatprep.subr.bf16.mxu0 0
        %1508 = vmatpush1.bf16.xpose.msra.mxu0 0
        %1509 = vmatprep.subr.bf16.mxu0 0
        %1510 = vmatpush1.bf16.xpose.msra.mxu0 0
        %1511 = vmatprep.mubr.bf16.mxu0 0
        %1512 = vmatmul.mubr.bf16.gmra.mrb[0].mxu0 %v1471
        %v1513 = vpop.f32.mrb[0].mxu0
        %v1514 = vadd.f32 %v1175, %v1513
        %v1515 = vpop.f32.mrb[0].mxu0
        %v1516 = vpop.f32.mrb[0].mxu0
        %v1517 = vadd.f32 %v1176, %v1516
        %v1518 = vpop.f32.mrb[0].mxu0
        %1519 = vdwg.mxu0
        %v1520 = vsel %vm1084, %v1514, -inf
        %1521 = vmax.xlane.f32.xlu0 %v1520
        %v1522 = vpop.xlane.xlu0 %1521
        %v1523 = vsel %vm1084, %v1517, -inf
        %1524 = vmax.xlane.f32.xlu0 %v1523
        %v1525 = vpop.xlane.xlu0 %1524
        %v1526 = vsub.f32 %v1514, %v1522
        %v1527 = vsub.f32 %v1517, %v1525
        %v1528 = vmul.f32 %v1526, 1.442695
        %v1529 = vpow.pop %v1528
        %v1530 = vmul.f32 %v1527, 1.442695
        %v1531 = vpow.pop %v1530
        %v1532 = vsel %vm1084, %v1529, 0.0
        %1533 = vadd.xlane.f32.xlu0 %v1532
        %v1534 = vpop.xlane.xlu0 %1533
        %v1535 = vsel %vm1084, %v1531, 0.0
        %1536 = vadd.xlane.f32.xlu0 %v1535
        %v1537 = vpop.xlane.xlu0 %1536
        %v1538 = vrcp.pop %v1534
        %v1539 = vrcp.pop %v1537
        %v1540 = vmul.f32 %v1534, %v1538
        %v1541 = vmul.f32 %v1537, %v1539
        %v1542 = vsub.f32 2.0, %v1540
        %v1543 = vsub.f32 2.0, %v1541
        %v1544 = vmul.f32 %v1538, %v1542
        %v1545 = vmul.f32 %v1539, %v1543
        %v1546 = vmul.f32 %v1529, %v1544
        %v1547 = vmul.f32 %v1531, %v1545
        %v1548 = vpack.c.bf16 %v1547, %v1546
        %1551 = vrot.lane.b32.xlu0 %v1460, 112
        %v1552 = vpop.permute.xlu0 %1551
        %1553 = vrot.lane.b32.xlu0 %v1461, 112
        %v1554 = vpop.permute.xlu0 %1553
        %v1558 = vsel %vm1084, %v1548, 0
        %1560 = vmatprep.subr.bf16.mxu0 0
        %1561 = vmatpush1.bf16.msra.mxu0 %v1552
        %1562 = vmatprep.subr.bf16.mxu0 0
        %1563 = vmatpush1.bf16.msra.mxu0 %v1554
        %1564 = vmatprep.subr.bf16.mxu0 0
        %1565 = vmatpush1.bf16.msra.mxu0 0
        %1566 = vmatprep.subr.bf16.mxu0 0
        %1567 = vmatpush1.bf16.msra.mxu0 0
        %1568 = vmatprep.subr.bf16.mxu0 0
        %1569 = vmatpush1.bf16.msra.mxu0 0
        %1570 = vmatprep.subr.bf16.mxu0 0
        %1571 = vmatpush1.bf16.msra.mxu0 0
        %1572 = vmatprep.subr.bf16.mxu0 0
        %1573 = vmatpush1.bf16.msra.mxu0 0
        %1574 = vmatprep.subr.bf16.mxu0 0
        %1575 = vmatpush1.bf16.msra.mxu0 0
        %1576 = vmatprep.subr.bf16.mxu0 0
        %1577 = vmatpush1.bf16.msra.mxu0 0
        %1578 = vmatprep.subr.bf16.mxu0 0
        %1579 = vmatpush1.bf16.msra.mxu0 0
        %1580 = vmatprep.subr.bf16.mxu0 0
        %1581 = vmatpush1.bf16.msra.mxu0 0
        %1582 = vmatprep.subr.bf16.mxu0 0
        %1583 = vmatpush1.bf16.msra.mxu0 0
        %1584 = vmatprep.subr.bf16.mxu0 0
        %1585 = vmatpush1.bf16.msra.mxu0 0
        %1586 = vmatprep.subr.bf16.mxu0 0
        %1587 = vmatpush1.bf16.msra.mxu0 0
        %1588 = vmatprep.subr.bf16.mxu0 0
        %1589 = vmatpush1.bf16.msra.mxu0 0
        %1590 = vmatprep.subr.bf16.mxu0 0
        %1591 = vmatpush1.bf16.msra.mxu0 0
        %1592 = vmatprep.mubr.bf16.mxu0 0
        %1593 = vmatmul.mubr.bf16.gmra.mrb[0].mxu0 %v1558
        %v1594 = vpop.f32.mrb[0].mxu0
        %v1595 = vadd.f32 0.0, %v1594
        %v1596 = vpop.f32.mrb[0].mxu0
        %v1597 = vpop.f32.mrb[0].mxu0
        %v1598 = vadd.f32 0.0, %v1597
        %v1599 = vpop.f32.mrb[0].mxu0
        %1600 = vdwg.mxu0
        %v1601 = vpack.c.bf16 %v1598, %v1595
        %1603 = vrot.lane.b32.xlu0 %v1601, 16
        %v1604 = vpop.permute.xlu0 %1603
        %vm1606 = vcmask 195712
        %1607 = vst.msk [vmem:[#allocation5] sm:$0xff] %vm1606, %v1604
        %v1608 = vld [vmem:[#allocation3] sm:$0xff]
        %v1609 = vld [vmem:[#allocation3 + $0x8] sm:$0xff]
        %v1610 = vld [vmem:[#allocation4] sm:$0xff]
        %v1611 = vld [vmem:[#allocation4 + $0x8] sm:$0xff]
        %1612 = vrot.lane.b32.xlu0 %v1164, 104
        %v1613 = vpop.permute.xlu0 %1612
        %1616 = vrot.lane.b32.xlu0 %v1608, 104
        %v1617 = vpop.permute.xlu0 %1616
        %1618 = vrot.lane.b32.xlu0 %v1609, 104
        %v1619 = vpop.permute.xlu0 %1618
        %v1621 = vsel %vm1181, %v1613, 0
        %v1624 = vsel %vm1181, %v1617, 0
        %v1627 = vsel %vm1181, %v1619, 0
        %1629 = vmatprep.subr.bf16.mxu0 0
        %1630 = vmatpush1.bf16.xpose.msra.mxu0 %v1624
        %1631 = vmatprep.subr.bf16.mxu0 0
        %1632 = vmatpush1.bf16.xpose.msra.mxu0 %v1627
        %1633 = vmatprep.subr.bf16.mxu0 0
        %1634 = vmatpush1.bf16.xpose.msra.mxu0 0
        %1635 = vmatprep.subr.bf16.mxu0 0
        %1636 = vmatpush1.bf16.xpose.msra.mxu0 0
        %1637 = vmatprep.subr.bf16.mxu0 0
        %1638 = vmatpush1.bf16.xpose.msra.mxu0 0
        %1639 = vmatprep.subr.bf16.mxu0 0
        %1640 = vmatpush1.bf16.xpose.msra.mxu0 0
        %1641 = vmatprep.subr.bf16.mxu0 0
        %1642 = vmatpush1.bf16.xpose.msra.mxu0 0
        %1643 = vmatprep.subr.bf16.mxu0 0
        %1644 = vmatpush1.bf16.xpose.msra.mxu0 0
        %1645 = vmatprep.subr.bf16.mxu0 0
        %1646 = vmatpush1.bf16.xpose.msra.mxu0 0
        %1647 = vmatprep.subr.bf16.mxu0 0
        %1648 = vmatpush1.bf16.xpose.msra.mxu0 0
        %1649 = vmatprep.subr.bf16.mxu0 0
        %1650 = vmatpush1.bf16.xpose.msra.mxu0 0
        %1651 = vmatprep.subr.bf16.mxu0 0
        %1652 = vmatpush1.bf16.xpose.msra.mxu0 0
        %1653 = vmatprep.subr.bf16.mxu0 0
        %1654 = vmatpush1.bf16.xpose.msra.mxu0 0
        %1655 = vmatprep.subr.bf16.mxu0 0
        %1656 = vmatpush1.bf16.xpose.msra.mxu0 0
        %1657 = vmatprep.subr.bf16.mxu0 0
        %1658 = vmatpush1.bf16.xpose.msra.mxu0 0
        %1659 = vmatprep.subr.bf16.mxu0 0
        %1660 = vmatpush1.bf16.xpose.msra.mxu0 0
        %1661 = vmatprep.mubr.bf16.mxu0 0
        %1662 = vmatmul.mubr.bf16.gmra.mrb[0].mxu0 %v1621
        %v1663 = vpop.f32.mrb[0].mxu0
        %v1664 = vadd.f32 %v1175, %v1663
        %v1665 = vpop.f32.mrb[0].mxu0
        %v1666 = vpop.f32.mrb[0].mxu0
        %v1667 = vadd.f32 %v1176, %v1666
        %v1668 = vpop.f32.mrb[0].mxu0
        %1669 = vdwg.mxu0
        %v1670 = vsel %vm1084, %v1664, -inf
        %1671 = vmax.xlane.f32.xlu0 %v1670
        %v1672 = vpop.xlane.xlu0 %1671
        %v1673 = vsel %vm1084, %v1667, -inf
        %1674 = vmax.xlane.f32.xlu0 %v1673
        %v1675 = vpop.xlane.xlu0 %1674
        %v1676 = vsub.f32 %v1664, %v1672
        %v1677 = vsub.f32 %v1667, %v1675
        %v1678 = vmul.f32 %v1676, 1.442695
        %v1679 = vpow.pop %v1678
        %v1680 = vmul.f32 %v1677, 1.442695
        %v1681 = vpow.pop %v1680
        %v1682 = vsel %vm1084, %v1679, 0.0
        %1683 = vadd.xlane.f32.xlu0 %v1682
        %v1684 = vpop.xlane.xlu0 %1683
        %v1685 = vsel %vm1084, %v1681, 0.0
        %1686 = vadd.xlane.f32.xlu0 %v1685
        %v1687 = vpop.xlane.xlu0 %1686
        %v1688 = vrcp.pop %v1684
        %v1689 = vrcp.pop %v1687
        %v1690 = vmul.f32 %v1684, %v1688
        %v1691 = vmul.f32 %v1687, %v1689
        %v1692 = vsub.f32 2.0, %v1690
        %v1693 = vsub.f32 2.0, %v1691
        %v1694 = vmul.f32 %v1688, %v1692
        %v1695 = vmul.f32 %v1689, %v1693
        %v1696 = vmul.f32 %v1679, %v1694
        %v1697 = vmul.f32 %v1681, %v1695
        %v1698 = vpack.c.bf16 %v1697, %v1696
        %1701 = vrot.lane.b32.xlu0 %v1610, 104
        %v1702 = vpop.permute.xlu0 %1701
        %1703 = vrot.lane.b32.xlu0 %v1611, 104
        %v1704 = vpop.permute.xlu0 %1703
        %v1708 = vsel %vm1084, %v1698, 0
        %1710 = vmatprep.subr.bf16.mxu0 0
        %1711 = vmatpush1.bf16.msra.mxu0 %v1702
        %1712 = vmatprep.subr.bf16.mxu0 0
        %1713 = vmatpush1.bf16.msra.mxu0 %v1704
        %1714 = vmatprep.subr.bf16.mxu0 0
        %1715 = vmatpush1.bf16.msra.mxu0 0
        %1716 = vmatprep.subr.bf16.mxu0 0
        %1717 = vmatpush1.bf16.msra.mxu0 0
        %1718 = vmatprep.subr.bf16.mxu0 0
        %1719 = vmatpush1.bf16.msra.mxu0 0
        %1720 = vmatprep.subr.bf16.mxu0 0
        %1721 = vmatpush1.bf16.msra.mxu0 0
        %1722 = vmatprep.subr.bf16.mxu0 0
        %1723 = vmatpush1.bf16.msra.mxu0 0
        %1724 = vmatprep.subr.bf16.mxu0 0
        %1725 = vmatpush1.bf16.msra.mxu0 0
        %1726 = vmatprep.subr.bf16.mxu0 0
        %1727 = vmatpush1.bf16.msra.mxu0 0
        %1728 = vmatprep.subr.bf16.mxu0 0
        %1729 = vmatpush1.bf16.msra.mxu0 0
        %1730 = vmatprep.subr.bf16.mxu0 0
        %1731 = vmatpush1.bf16.msra.mxu0 0
        %1732 = vmatprep.subr.bf16.mxu0 0
        %1733 = vmatpush1.bf16.msra.mxu0 0
        %1734 = vmatprep.subr.bf16.mxu0 0
        %1735 = vmatpush1.bf16.msra.mxu0 0
        %1736 = vmatprep.subr.bf16.mxu0 0
        %1737 = vmatpush1.bf16.msra.mxu0 0
        %1738 = vmatprep.subr.bf16.mxu0 0
        %1739 = vmatpush1.bf16.msra.mxu0 0
        %1740 = vmatprep.subr.bf16.mxu0 0
        %1741 = vmatpush1.bf16.msra.mxu0 0
        %1742 = vmatprep.mubr.bf16.mxu0 0
        %1743 = vmatmul.mubr.bf16.gmra.mrb[0].mxu0 %v1708
        %v1744 = vpop.f32.mrb[0].mxu0
        %v1745 = vadd.f32 0.0, %v1744
        %v1746 = vpop.f32.mrb[0].mxu0
        %v1747 = vpop.f32.mrb[0].mxu0
        %v1748 = vadd.f32 0.0, %v1747
        %v1749 = vpop.f32.mrb[0].mxu0
        %1750 = vdwg.mxu0
        %v1751 = vpack.c.bf16 %v1748, %v1745
        %1753 = vrot.lane.b32.xlu0 %v1751, 24
        %v1754 = vpop.permute.xlu0 %1753
        %vm1756 = vcmask 261312
        %1757 = vst.msk [vmem:[#allocation5] sm:$0xff] %vm1756, %v1754
        %v1758 = vld [vmem:[#allocation5] sm:$0xff]
        %v1759 = vld [vmem:[%s10] sm:$0xf]
        %v1760 = vld [vmem:[%s10 + $0x4] sm:$0xf]
        %v1761 = vld [vmem:[%s10 + $0x8] sm:$0xf]
        %v1762 = vld [vmem:[%s10 + $0xc] sm:$0xf]
        %v1763 = vld [vmem:[#allocation18] sm:$0x1]
        %v1765 = vlaneseq
        %v1766 = vshrl.u32 %v1765, 7
        %v1767 = vsub.s32 0, %v1766
        %v1768 = vrot.slane %v1763, %v1767
        %v1774 = vunpack.c.l.b16 %v1759
        %v1775 = vunpack.c.l.b16 %v1760
        %v1776 = vunpack.c.l.b16 %v1761
        %v1777 = vunpack.c.l.b16 %v1762
        %v1778 = vpack.c.b16 %v1775, %v1774
        %v1779 = vpack.c.b16 %v1777, %v1776
        %v1783 = vsel %vm1084, %v1758, 0
        %1785 = vmatprep.subr.bf16.mxu0 0
        %1786 = vmatpush1.bf16.msra.mxu0 %v1778
        %1787 = vmatprep.subr.bf16.mxu0 0
        %1788 = vmatpush1.bf16.msra.mxu0 %v1779
        %1789 = vmatprep.subr.bf16.mxu0 0
        %1790 = vmatpush1.bf16.msra.mxu0 0
        %1791 = vmatprep.subr.bf16.mxu0 0
        %1792 = vmatpush1.bf16.msra.mxu0 0
        %1793 = vmatprep.subr.bf16.mxu0 0
        %1794 = vmatpush1.bf16.msra.mxu0 0
        %1795 = vmatprep.subr.bf16.mxu0 0
        %1796 = vmatpush1.bf16.msra.mxu0 0
        %1797 = vmatprep.subr.bf16.mxu0 0
        %1798 = vmatpush1.bf16.msra.mxu0 0
        %1799 = vmatprep.subr.bf16.mxu0 0
        %1800 = vmatpush1.bf16.msra.mxu0 0
        %1801 = vmatprep.subr.bf16.mxu0 0
        %1802 = vmatpush1.bf16.msra.mxu0 0
        %1803 = vmatprep.subr.bf16.mxu0 0
        %1804 = vmatpush1.bf16.msra.mxu0 0
        %1805 = vmatprep.subr.bf16.mxu0 0
        %1806 = vmatpush1.bf16.msra.mxu0 0
        %1807 = vmatprep.subr.bf16.mxu0 0
        %1808 = vmatpush1.bf16.msra.mxu0 0
        %1809 = vmatprep.subr.bf16.mxu0 0
        %1810 = vmatpush1.bf16.msra.mxu0 0
        %1811 = vmatprep.subr.bf16.mxu0 0
        %1812 = vmatpush1.bf16.msra.mxu0 0
        %1813 = vmatprep.subr.bf16.mxu0 0
        %1814 = vmatpush1.bf16.msra.mxu0 0
        %1815 = vmatprep.subr.bf16.mxu0 0
        %1816 = vmatpush1.bf16.msra.mxu0 0
        %1817 = vmatprep.mubr.bf16.mxu0 0
        %1818 = vmatmul.mubr.bf16.gmra.mrb[0].mxu0 %v1783
        %v1819 = vpop.f32.mrb[0].mxu0
        %v1820 = vadd.f32 %v1768, %v1819
        %v1821 = vpop.f32.mrb[0].mxu0
        %v1822 = vpop.f32.mrb[0].mxu0
        %v1823 = vadd.f32 %v1768, %v1822
        %v1824 = vpop.f32.mrb[0].mxu0
        %1825 = vdwg.mxu0
        %v1826 = vld [vmem:[%s712] sm:$0xff]
        %v1827 = vld [vmem:[%s712 + $0x8] sm:$0xff]
        %v1828 = vadd.f32 %v1826, %v1820
        %v1829 = vadd.f32 %v1827, %v1823
        %v1830 = vld [vmem:[#allocation20] sm:$0x1]
        %v1831 = vld [vmem:[#allocation21] sm:$0x1]
        %v1832 = vsel %vm1084, %v1828, 0.0
        %1833 = vadd.xlane.f32.xlu0 %v1832
        %v1834 = vpop.xlane.xlu0 %1833
        %v1835 = vsel %vm1084, %v1829, 0.0
        %1836 = vadd.xlane.f32.xlu0 %v1835
        %v1837 = vpop.xlane.xlu0 %1836
        %v1838 = vrcp.pop 32.0
        %v1839 = vmul.f32 %v1834, %v1838
        %v1840 = vmul.f32 %v1837, %v1838
        %v1841 = vsub.f32 %v1828, %v1839
        %v1842 = vsub.f32 %v1829, %v1840
        %v1843 = vmul.f32 %v1841, %v1841
        %v1844 = vmul.f32 %v1842, %v1842
        %v1845 = vsel %vm1084, %v1843, 0.0
        %1846 = vadd.xlane.f32.xlu0 %v1845
        %v1847 = vpop.xlane.xlu0 %1846
        %v1848 = vsel %vm1084, %v1844, 0.0
        %1849 = vadd.xlane.f32.xlu0 %v1848
        %v1850 = vpop.xlane.xlu0 %1849
        %v1851 = vmul.f32 %v1847, %v1838
        %v1852 = vmul.f32 %v1850, %v1838
        %v1853 = vadd.f32 %v1851, 1e-05
        %v1854 = vadd.f32 %v1852, 1e-05
        %v1855 = vrsqrt.pop %v1853
        %v1856 = vrsqrt.pop %v1854
        %v1857 = vmul.f32 %v1841, %v1855
        %v1858 = vmul.f32 %v1842, %v1856
        %v1860 = vlaneseq
        %v1861 = vshrl.u32 %v1860, 7
        %v1862 = vsub.s32 0, %v1861
        %v1863 = vrot.slane %v1830, %v1862
        %v1865 = vmul.f32 %v1857, %v1863
        %v1866 = vmul.f32 %v1858, %v1863
        %v1868 = vlaneseq
        %v1869 = vshrl.u32 %v1868, 7
        %v1870 = vsub.s32 0, %v1869
        %v1871 = vrot.slane %v1831, %v1870
        %v1873 = vadd.f32 %v1865, %v1871
        %v1874 = vadd.f32 %v1866, %v1871
        %v1875 = vpack.c.bf16 %v1874, %v1873
        %v1876 = vld [vmem:[%s14] sm:$0xf]
        %v1877 = vld [vmem:[%s14 + $0x4] sm:$0xf]
        %v1878 = vld [vmem:[%s14 + $0x8] sm:$0xf]
        %v1879 = vld [vmem:[%s14 + $0xc] sm:$0xf]
        %v1880 = vld [vmem:[%s15] sm:$0x1]
        %v1882 = vlaneseq
        %v1883 = vshrl.u32 %v1882, 7
        %v1884 = vsub.s32 0, %v1883
        %v1885 = vrot.slane %v1880, %v1884
        %v1891 = vunpack.c.l.b16 %v1876
        %v1892 = vunpack.c.l.b16 %v1877
        %v1893 = vunpack.c.l.b16 %v1878
        %v1894 = vunpack.c.l.b16 %v1879
        %v1895 = vpack.c.b16 %v1892, %v1891
        %v1896 = vpack.c.b16 %v1894, %v1893
        %v1900 = vsel %vm1084, %v1875, 0
        %1902 = vmatprep.subr.bf16.mxu0 0
        %1903 = vmatpush1.bf16.msra.mxu0 %v1895
        %1904 = vmatprep.subr.bf16.mxu0 0
        %1905 = vmatpush1.bf16.msra.mxu0 %v1896
        %1906 = vmatprep.subr.bf16.mxu0 0
        %1907 = vmatpush1.bf16.msra.mxu0 0
        %1908 = vmatprep.subr.bf16.mxu0 0
        %1909 = vmatpush1.bf16.msra.mxu0 0
        %1910 = vmatprep.subr.bf16.mxu0 0
        %1911 = vmatpush1.bf16.msra.mxu0 0
        %1912 = vmatprep.subr.bf16.mxu0 0
        %1913 = vmatpush1.bf16.msra.mxu0 0
        %1914 = vmatprep.subr.bf16.mxu0 0
        %1915 = vmatpush1.bf16.msra.mxu0 0
        %1916 = vmatprep.subr.bf16.mxu0 0
        %1917 = vmatpush1.bf16.msra.mxu0 0
        %1918 = vmatprep.subr.bf16.mxu0 0
        %1919 = vmatpush1.bf16.msra.mxu0 0
        %1920 = vmatprep.subr.bf16.mxu0 0
        %1921 = vmatpush1.bf16.msra.mxu0 0
        %1922 = vmatprep.subr.bf16.mxu0 0
        %1923 = vmatpush1.bf16.msra.mxu0 0
        %1924 = vmatprep.subr.bf16.mxu0 0
        %1925 = vmatpush1.bf16.msra.mxu0 0
        %1926 = vmatprep.subr.bf16.mxu0 0
        %1927 = vmatpush1.bf16.msra.mxu0 0
        %1928 = vmatprep.subr.bf16.mxu0 0
        %1929 = vmatpush1.bf16.msra.mxu0 0
        %1930 = vmatprep.subr.bf16.mxu0 0
        %1931 = vmatpush1.bf16.msra.mxu0 0
        %1932 = vmatprep.subr.bf16.mxu0 0
        %1933 = vmatpush1.bf16.msra.mxu0 0
        %1934 = vmatprep.mubr.bf16.mxu0 0
        %1935 = vmatmul.mubr.bf16.gmra.mrb[0].mxu0 %v1900
        %v1936 = vpop.f32.mrb[0].mxu0
        %v1937 = vadd.f32 %v1885, %v1936
        %v1938 = vpop.f32.mrb[0].mxu0
        %v1939 = vpop.f32.mrb[0].mxu0
        %v1940 = vadd.f32 %v1885, %v1939
        %v1941 = vpop.f32.mrb[0].mxu0
        %1942 = vdwg.mxu0
        %v1943 = vmul.f32 %v1937, 0.5
        %v1944 = vmul.f32 %v1940, 0.5
        %v1945 = vmul.f32 %v1937, 0.70710677
        %v1946 = vmul.f32 %v1940, 0.70710677
        %vm1947 = vcmp.ge.f32.partialorder %v1945, 0.0
        %vm1948 = vcmp.ge.f32.partialorder %v1946, 0.0
        %v1949 = vsel %vm1947, 1.0, -1.0
        %v1950 = vsel %vm1948, 1.0, -1.0
        %v1951 = vand.u32 2147483647, %v1945
        %v1952 = vand.u32 2147483647, %v1946
        %v1953 = vmul.f32 %v1951, 0.3275911
        %v1954 = vmul.f32 %v1952, 0.3275911
        %v1955 = vadd.f32 %v1953, 1.0
        %v1956 = vadd.f32 %v1954, 1.0
        %v1957 = vrcp.pop %v1955
        %v1958 = vrcp.pop %v1956
        %v1959 = vmul.f32 %v1957, 1.0614054
        %v1960 = vmul.f32 %v1958, 1.0614054
        %v1961 = vadd.f32 %v1959, -1.4531521
        %v1962 = vadd.f32 %v1960, -1.4531521
        %v1963 = vmul.f32 %v1961, %v1957
        %v1964 = vmul.f32 %v1962, %v1958
        %v1965 = vadd.f32 %v1963, 1.4214138
        %v1966 = vadd.f32 %v1964, 1.4214138
        %v1967 = vmul.f32 %v1965, %v1957
        %v1968 = vmul.f32 %v1966, %v1958
        %v1969 = vadd.f32 %v1967, -0.28449672
        %v1970 = vadd.f32 %v1968, -0.28449672
        %v1971 = vmul.f32 %v1969, %v1957
        %v1972 = vmul.f32 %v1970, %v1958
        %v1973 = vadd.f32 %v1971, 0.2548296
        %v1974 = vadd.f32 %v1972, 0.2548296
        %v1975 = vmul.f32 %v1973, %v1957
        %v1976 = vmul.f32 %v1974, %v1958
        %v1977 = vsub.f32 0.0, %v1951
        %v1978 = vsub.f32 0.0, %v1952
        %v1979 = vmul.f32 %v1977, %v1951
        %v1980 = vmul.f32 %v1978, %v1952
        %v1981 = vmul.f32 %v1979, 1.442695
        %v1982 = vpow.pop %v1981
        %v1983 = vmul.f32 %v1980, 1.442695
        %v1984 = vpow.pop %v1983
        %v1985 = vmul.f32 %v1975, %v1982
        %v1986 = vmul.f32 %v1976, %v1984
        %v1987 = vsub.f32 1.0, %v1985
        %v1988 = vsub.f32 1.0, %v1986
        %v1989 = vmul.f32 %v1949, %v1987
        %v1990 = vmul.f32 %v1950, %v1988
        %v1991 = vadd.f32 %v1989, 1.0
        %v1992 = vadd.f32 %v1990, 1.0
        %v1993 = vmul.f32 %v1943, %v1991
        %v1994 = vmul.f32 %v1944, %v1992
        %v1995 = vpack.c.bf16 %v1994, %v1993
        %v1996 = vld [vmem:[%s16] sm:$0xf]
        %v1997 = vld [vmem:[%s16 + $0x4] sm:$0xf]
        %v1998 = vld [vmem:[%s16 + $0x8] sm:$0xf]
        %v1999 = vld [vmem:[%s16 + $0xc] sm:$0xf]
        %v2000 = vld [vmem:[%s16 + $0x10] sm:$0xf]
        %v2001 = vld [vmem:[%s16 + $0x14] sm:$0xf]
        %v2002 = vld [vmem:[%s16 + $0x18] sm:$0xf]
        %v2003 = vld [vmem:[%s16 + $0x1c] sm:$0xf]
        %v2004 = vld [vmem:[%s16 + $0x20] sm:$0xf]
        %v2005 = vld [vmem:[%s16 + $0x24] sm:$0xf]
        %v2006 = vld [vmem:[%s16 + $0x28] sm:$0xf]
        %v2007 = vld [vmem:[%s16 + $0x2c] sm:$0xf]
        %v2008 = vld [vmem:[%s16 + $0x30] sm:$0xf]
        %v2009 = vld [vmem:[%s16 + $0x34] sm:$0xf]
        %v2010 = vld [vmem:[%s16 + $0x38] sm:$0xf]
        %v2011 = vld [vmem:[%s16 + $0x3c] sm:$0xf]
        %v2012 = vld [vmem:[%s17] sm:$0x1]
        %v2014 = vlaneseq
        %v2015 = vshrl.u32 %v2014, 7
        %v2016 = vsub.s32 0, %v2015
        %v2017 = vrot.slane %v2012, %v2016
        %v2035 = vunpack.c.l.b16 %v1996
        %v2036 = vunpack.c.l.b16 %v1997
        %v2037 = vunpack.c.l.b16 %v1998
        %v2038 = vunpack.c.l.b16 %v1999
        %v2039 = vunpack.c.l.b16 %v2000
        %v2040 = vunpack.c.l.b16 %v2001
        %v2041 = vunpack.c.l.b16 %v2002
        %v2042 = vunpack.c.l.b16 %v2003
        %v2043 = vunpack.c.l.b16 %v2004
        %v2044 = vunpack.c.l.b16 %v2005
        %v2045 = vunpack.c.l.b16 %v2006
        %v2046 = vunpack.c.l.b16 %v2007
        %v2047 = vunpack.c.l.b16 %v2008
        %v2048 = vunpack.c.l.b16 %v2009
        %v2049 = vunpack.c.l.b16 %v2010
        %v2050 = vunpack.c.l.b16 %v2011
        %v2051 = vpack.c.b16 %v2036, %v2035
        %v2052 = vpack.c.b16 %v2038, %v2037
        %v2053 = vpack.c.b16 %v2040, %v2039
        %v2054 = vpack.c.b16 %v2042, %v2041
        %v2055 = vpack.c.b16 %v2044, %v2043
        %v2056 = vpack.c.b16 %v2046, %v2045
        %v2057 = vpack.c.b16 %v2048, %v2047
        %v2058 = vpack.c.b16 %v2050, %v2049
        %2067 = vmatprep.subr.bf16.mxu0 0
        %2068 = vmatpush1.bf16.msra.mxu0 %v2051
        %2069 = vmatprep.subr.bf16.mxu0 0
        %2070 = vmatpush1.bf16.msra.mxu0 %v2052
        %2071 = vmatprep.subr.bf16.mxu0 0
        %2072 = vmatpush1.bf16.msra.mxu0 %v2053
        %2073 = vmatprep.subr.bf16.mxu0 0
        %2074 = vmatpush1.bf16.msra.mxu0 %v2054
        %2075 = vmatprep.subr.bf16.mxu0 0
        %2076 = vmatpush1.bf16.msra.mxu0 %v2055
        %2077 = vmatprep.subr.bf16.mxu0 0
        %2078 = vmatpush1.bf16.msra.mxu0 %v2056
        %2079 = vmatprep.subr.bf16.mxu0 0
        %2080 = vmatpush1.bf16.msra.mxu0 %v2057
        %2081 = vmatprep.subr.bf16.mxu0 0
        %2082 = vmatpush1.bf16.msra.mxu0 %v2058
        %2083 = vmatprep.subr.bf16.mxu0 0
        %2084 = vmatpush1.bf16.msra.mxu0 0
        %2085 = vmatprep.subr.bf16.mxu0 0
        %2086 = vmatpush1.bf16.msra.mxu0 0
        %2087 = vmatprep.subr.bf16.mxu0 0
        %2088 = vmatpush1.bf16.msra.mxu0 0
        %2089 = vmatprep.subr.bf16.mxu0 0
        %2090 = vmatpush1.bf16.msra.mxu0 0
        %2091 = vmatprep.subr.bf16.mxu0 0
        %2092 = vmatpush1.bf16.msra.mxu0 0
        %2093 = vmatprep.subr.bf16.mxu0 0
        %2094 = vmatpush1.bf16.msra.mxu0 0
        %2095 = vmatprep.subr.bf16.mxu0 0
        %2096 = vmatpush1.bf16.msra.mxu0 0
        %2097 = vmatprep.subr.bf16.mxu0 0
        %2098 = vmatpush1.bf16.msra.mxu0 0
        %2099 = vmatprep.mubr.bf16.mxu0 0
        %2100 = vmatmul.mubr.bf16.gmra.mrb[0].mxu0 %v1995
        %v2101 = vpop.f32.mrb[0].mxu0
        %v2102 = vadd.f32 %v2017, %v2101
        %v2103 = vpop.f32.mrb[0].mxu0
        %v2104 = vpop.f32.mrb[0].mxu0
        %v2105 = vadd.f32 %v2017, %v2104
        %v2106 = vpop.f32.mrb[0].mxu0
        %2107 = vdwg.mxu0
        %v2108 = vadd.f32 %v1828, %v2102
        %v2109 = vadd.f32 %v1829, %v2105
        %2110 = vst.msk [vmem:[%s805] sm:$0xff] %vm1084, %v2108
        %2111 = vst.msk [vmem:[%s805 + $0x8] sm:$0xff] %vm1084, %v2109
        %s2112 = sand.u32 %s458, 1
        %s2113 = scalar_lea.sflag [#allocation8], %s2112
        %s2114 = sand.u32 %s458, 1
        %s2115 = smul.addr %s2114, 16
        %s2116 = scalar_lea.vmem [#allocation23], %s2115
        %s2117 = sand.u32 %s46, 1
        %s2118 = scalar_lea.sflag [#allocation25], %s2117
        %s2119 = sand.u32 %s486, 1
        %s2120 = smul.addr %s2119, 16
        %s2121 = scalar_lea.vmem [#allocation24], %s2120
        %s2122 = sand.u32 %s46, 1
        %s2123 = scalar_lea.sflag [#allocation25], %s2122
        %s2124 = sand.u32 %s514, 1
        %s2125 = smul.addr %s2124, 16
        %s2126 = scalar_lea.vmem [#allocation26], %s2125
        // Predicated region
        $region137: #{tpu_custom_call.1} parent=91 // pred_check
          %p2127 = pneg %p468
        $region138: #{tpu_custom_call.1} parent=91 // pred_check_branch
          %2129 = sbr.rel (%p2127) target = $region140
        $region139: #{tpu_custom_call.1} parent=91 // pred_region
          %s2130 = smul.u32 2, %s51
          %s2132 = ssub.s32 256, 256
          %2133 = vsyncadd %s2113, %s2132
          %s2134 = smul.addr %s50, 4
          %s2135 = sadd.s32 %s2130, %s2134
          %s2136 = smul.addr %s2135, 128
          %s2137 = scalar_lea.hbm %s18, %s2136
          %s2138 = sshll.u32 %s2116, 4
          %s2139 = int_to_ptr.vmem [resolvable:$true] %s2138
          %2144 = dma.vmem_to_hbm [thread:$0]  %s2139, 256, %s2137, %s2113, 128, 128, 8
        $region140: #{tpu_custom_call.1} parent=91 // pred_fallthru
          _
        // Predicated region
        $region141: #{tpu_custom_call.1} parent=91 // pred_check
          %p2145 = pneg %p496
        $region142: #{tpu_custom_call.1} parent=91 // pred_check_branch
          %2147 = sbr.rel (%p2145) target = $region144
        $region143: #{tpu_custom_call.1} parent=91 // pred_region
          %s2148 = smul.u32 2, %s51
          %s2150 = ssub.s32 256, 256
          %2151 = vsyncadd %s2118, %s2150
          %s2152 = smul.addr %s50, 4
          %s2153 = sadd.s32 %s2148, %s2152
          %s2154 = smul.addr %s2153, 128
          %s2155 = scalar_lea.hbm %s19, %s2154
          %s2156 = sshll.u32 %s2121, 4
          %s2157 = int_to_ptr.vmem [resolvable:$true] %s2156
          %2162 = dma.vmem_to_hbm [thread:$0]  %s2157, 256, %s2155, %s2118, 128, 128, 8
        $region144: #{tpu_custom_call.1} parent=91 // pred_fallthru
          _
        // Predicated region
        $region145: #{tpu_custom_call.1} parent=91 // pred_check
          %p2163 = pneg %p524
        $region146: #{tpu_custom_call.1} parent=91 // pred_check_branch
          %2165 = sbr.rel (%p2163) target = $region148
        $region147: #{tpu_custom_call.1} parent=91 // pred_region
          %s2166 = smul.u32 2, %s51
          %s2168 = ssub.s32 256, 256
          %2169 = vsyncadd %s2123, %s2168
          %s2170 = smul.addr %s50, 4
          %s2171 = sadd.s32 %s2166, %s2170
          %s2172 = smul.addr %s2171, 128
          %s2173 = scalar_lea.hbm %s20, %s2172
          %s2174 = sshll.u32 %s2126, 4
          %s2175 = int_to_ptr.vmem [resolvable:$true] %s2174
          %2180 = dma.vmem_to_hbm [thread:$0]  %s2175, 256, %s2173, %s2123, 128, 128, 8
        $region148: #{tpu_custom_call.1} parent=91 // pred_fallthru
          _
      $region92: #{tpu_custom_call.1} parent=5 // pred_fallthru
        _
      %p2181 = scmp.le.s32.totalorder 2, %s41
      // Predicated region
      $region149: #{tpu_custom_call.1} parent=5 // pred_check
        %p2182 = pneg %p2181
      $region150: #{tpu_custom_call.1} parent=5 // pred_check_branch
        %2184 = sbr.rel (%p2182) target = $region152
      $region151: #{tpu_custom_call.1} parent=5 // pred_region
        %s2185 = ssub.s32 %s41, 2
        // Predicated region
        $region153: #{tpu_custom_call.1} parent=151 // pred_check
          %p2186 = pneg %p474
        $region154: #{tpu_custom_call.1} parent=151 // pred_check_branch
          %2188 = sbr.rel (%p2186) target = $region156
        $region155: #{tpu_custom_call.1} parent=151 // pred_region
          %s2189 = sand.u32 %s459, 1
          %s2190 = scalar_lea.sflag [#allocation8], %s2189
          %s2191 = sand.u32 %s459, 1
          %s2192 = smul.addr %s2191, 16
          %s2193 = scalar_lea.vmem [#allocation23], %s2192
          %2194 = dma.done %s2190, 256
        $region156: #{tpu_custom_call.1} parent=151 // pred_fallthru
          _
        // Predicated region
        $region157: #{tpu_custom_call.1} parent=151 // pred_check
          %p2195 = pneg %p502
        $region158: #{tpu_custom_call.1} parent=151 // pred_check_branch
          %2197 = sbr.rel (%p2195) target = $region160
        $region159: #{tpu_custom_call.1} parent=151 // pred_region
          %s2198 = sand.u32 %s47, 1
          %s2199 = scalar_lea.sflag [#allocation25], %s2198
          %s2200 = sand.u32 %s487, 1
          %s2201 = smul.addr %s2200, 16
          %s2202 = scalar_lea.vmem [#allocation24], %s2201
          %2203 = dma.done %s2199, 256
        $region160: #{tpu_custom_call.1} parent=151 // pred_fallthru
          _
        // Predicated region
        $region161: #{tpu_custom_call.1} parent=151 // pred_check
          %p2204 = pneg %p530
        $region162: #{tpu_custom_call.1} parent=151 // pred_check_branch
          %2206 = sbr.rel (%p2204) target = $region164
        $region163: #{tpu_custom_call.1} parent=151 // pred_region
          %s2207 = sand.u32 %s47, 1
          %s2208 = scalar_lea.sflag [#allocation25], %s2207
          %s2209 = sand.u32 %s515, 1
          %s2210 = smul.addr %s2209, 16
          %s2211 = scalar_lea.vmem [#allocation26], %s2210
          %2212 = dma.done %s2208, 256
        $region164: #{tpu_custom_call.1} parent=151 // pred_fallthru
          _
      $region152: #{tpu_custom_call.1} parent=5 // pred_fallthru
        _
    $region6: #{tpu_custom_call.1} parent=1 // loop_footer
      %s45 = sadd.s32 1, %s41
    $region7: #{tpu_custom_call.1} parent=1 // loop_footer_branch
      %40 = sbr.rel target = $region3
    $region8: #{tpu_custom_call.1} parent=1 // loop_exit
      _
    %2213 = vsyncpa [#allocation7], 1
    %s2214 = scalar_lea.sflag [#allocation7], 1
    %2215 = vsyncpa %s2214, 1
    %2216 = vsyncpa [#allocation10], 1
    %2217 = vsyncpa [#allocation13], 1
    %2218 = vsyncpa [#allocation16], 1
    %2219 = vsyncpa [#allocation19], 1
    %2220 = vsyncpa [#allocation22], 1
    %2221 = vsyncpa [#allocation8], 1
    %s2222 = scalar_lea.sflag [#allocation8], 1
    %2223 = vsyncpa %s2222, 1
    %2224 = vsyncpa [#allocation25], 1
    %s2225 = scalar_lea.sflag [#allocation25], 1
    %2226 = vsyncpa %s2225, 1

// kernel: tpu_custom_call.1
$region0: #{tpu_custom_call.1}
  #allocation0 [shape = 'u32[]', space=smem, size = 0x4, offset = 0x4, fixed_abs, tag = 'smem constant byte address 0x4 - core index']
  #allocation1 [shape = 'u32[144,128]{1,0:T(1,128)}', space=vmem, size = 0x12000, scoped, tag = 'internal scratch']
  #allocation2 [shape = 'bf16[32,32]{1,0:T(16,128)(2,1)}', space=vmem, size = 0x2000, scoped, tag = 'scratch operand']
  #allocation3 [shape = 'bf16[32,32]{1,0:T(16,128)(2,1)}', space=vmem, size = 0x2000, scoped, tag = 'scratch operand']
  #allocation4 [shape = 'bf16[32,32]{1,0:T(16,128)(2,1)}', space=vmem, size = 0x2000, scoped, tag = 'scratch operand']
  #allocation5 [shape = 'bf16[16,32]{1,0:T(16,128)(2,1)}', space=vmem, size = 0x1000, scoped, tag = 'scratch operand']
  %s0 = inlined_call_operand.vmem [shape: f32[2,32,32], index: 0, kind: input, shape index: {}]
  %s1 = inlined_call_operand.hbm [shape: f32[2,32,32], index: 1, kind: input, shape index: {}]
  %s2 = inlined_call_operand.vmem [shape: f32[1,32], index: 2, kind: input, shape index: {}]
  %s3 = inlined_call_operand.hbm [shape: f32[1,32], index: 3, kind: input, shape index: {}]
  %s4 = inlined_call_operand.vmem [shape: bf16[32,32], index: 4, kind: input, shape index: {}]
  %s5 = inlined_call_operand.hbm [shape: f32[1,32], index: 5, kind: input, shape index: {}]
  %s6 = inlined_call_operand.hbm [shape: bf16[32,32], index: 6, kind: input, shape index: {}]
  %s7 = inlined_call_operand.hbm [shape: f32[1,32], index: 7, kind: input, shape index: {}]
  %s8 = inlined_call_operand.hbm [shape: bf16[32,32], index: 8, kind: input, shape index: {}]
  %s9 = inlined_call_operand.hbm [shape: f32[1,32], index: 9, kind: input, shape index: {}]
  %s10 = inlined_call_operand.vmem [shape: bf16[32,32], index: 10, kind: input, shape index: {}]
  %s11 = inlined_call_operand.hbm [shape: f32[1,32], index: 11, kind: input, shape index: {}]
  %s12 = inlined_call_operand.hbm [shape: f32[1,32], index: 12, kind: input, shape index: {}]
  %s13 = inlined_call_operand.hbm [shape: f32[1,32], index: 13, kind: input, shape index: {}]
  %s14 = inlined_call_operand.vmem [shape: bf16[32,128], index: 14, kind: input, shape index: {}]
  %s15 = inlined_call_operand.vmem [shape: f32[1,128], index: 15, kind: input, shape index: {}]
  %s16 = inlined_call_operand.vmem [shape: bf16[128,32], index: 16, kind: input, shape index: {}]
  %s17 = inlined_call_operand.vmem [shape: f32[1,32], index: 17, kind: input, shape index: {}]
  %s18 = inlined_call_operand.hbm [shape: f32[2,32,32], index: 18, kind: output, shape index: {0}]
  %s19 = inlined_call_operand.hbm [shape: f32[2,32,32], index: 19, kind: output, shape index: {1}]
  %s20 = inlined_call_operand.hbm [shape: f32[2,32,32], index: 20, kind: output, shape index: {2}]
  %21 = xla_tuple %s18, %s19, %s20
  %s22 = sld [smem:[#allocation0]]
  $region165: #{tpu_custom_call.1} parent=0
    _
  %s24 = ssub.s32 1, %s22
  %s25 = scalar_select 0, %s24, %s22
  $region1: #{tpu_custom_call.1} parent=0
    #allocation6 [shape = 'u8[16384]{0}', space=vmem, size = 0x4000, scoped, tag = 'input window, operand 1']
    #allocation7 [shape = 's32[2]{0}', space=sflag, size = 0x8, scoped, tag = 'scoped memory for tpu_custom_call.1']
    #allocation8 [shape = 's32[2]{0}', space=sflag, size = 0x8, scoped, tag = 'scoped memory for tpu_custom_call.1']
    #allocation9 [shape = 'u8[512]{0}', space=vmem, size = 0x400, scoped, tag = 'input window, operand 3, single buffered']
    #allocation10 [shape = 's32[1]{0}', space=sflag, size = 0x4, scoped, tag = 'scoped memory for tpu_custom_call.1']
    #allocation11 [shape = 'u8[512]{0}', space=vmem, size = 0x400, scoped, tag = 'input window, operand 5, single buffered']
    #allocation12 [shape = 'u8[8192]{0}', space=vmem, size = 0x2000, scoped, tag = 'input window, operand 6, single buffered']
    #allocation13 [shape = 's32[1]{0}', space=sflag, size = 0x4, scoped, tag = 'scoped memory for tpu_custom_call.1']
    #allocation14 [shape = 'u8[512]{0}', space=vmem, size = 0x400, scoped, tag = 'input window, operand 7, single buffered']
    #allocation15 [shape = 'u8[8192]{0}', space=vmem, size = 0x2000, scoped, tag = 'input window, operand 8, single buffered']
    #allocation16 [shape = 's32[1]{0}', space=sflag, size = 0x4, scoped, tag = 'scoped memory for tpu_custom_call.1']
    #allocation17 [shape = 'u8[512]{0}', space=vmem, size = 0x400, scoped, tag = 'input window, operand 9, single buffered']
    #allocation18 [shape = 'u8[512]{0}', space=vmem, size = 0x400, scoped, tag = 'input window, operand 11, single buffered']
    #allocation19 [shape = 's32[1]{0}', space=sflag, size = 0x4, scoped, tag = 'scoped memory for tpu_custom_call.1']
    #allocation20 [shape = 'u8[512]{0}', space=vmem, size = 0x400, scoped, tag = 'input window, operand 12, single buffered']
    #allocation21 [shape = 'u8[512]{0}', space=vmem, size = 0x400, scoped, tag = 'input window, operand 13, single buffered']
    #allocation22 [shape = 's32[1]{0}', space=sflag, size = 0x4, scoped, tag = 'scoped memory for tpu_custom_call.1']
    #allocation23 [shape = 'u8[16384]{0}', space=vmem, size = 0x4000, scoped, tag = 'output window, operand 0']
    #allocation24 [shape = 'u8[16384]{0}', space=vmem, size = 0x4000, scoped, tag = 'output window, operand 1']
    #allocation25 [shape = 's32[2]{0}', space=sflag, size = 0x8, scoped, tag = 'scoped memory for tpu_custom_call.1']
    #allocation26 [shape = 'u8[16384]{0}', space=vmem, size = 0x4000, scoped, tag = 'output window, operand 2']
    %26 = vsyncpa [#allocation7], 0
    %s27 = scalar_lea.sflag [#allocation7], 1
    %28 = vsyncpa %s27, 0
    %29 = vsyncpa [#allocation10], 0
    %30 = vsyncpa [#allocation13], 0
    %31 = vsyncpa [#allocation16], 0
    %32 = vsyncpa [#allocation19], 0
    %33 = vsyncpa [#allocation22], 0
    %34 = vsyncpa [#allocation8], 0
    %s35 = scalar_lea.sflag [#allocation8], 1
    %36 = vsyncpa %s35, 0
    %37 = vsyncpa [#allocation25], 0
    %s38 = scalar_lea.sflag [#allocation25], 1
    %39 = vsyncpa %s38, 0
    loop: start=0, step=1, limit=6
    $region2: #{tpu_custom_call.1} parent=1 // loop_pre_header
      _
    $region3: #{tpu_custom_call.1} parent=1 // loop_header
      %s41 = sphi 0, %s45
      %p42 = scmp.ge.s32.totalorder %s41, 6
      %s48 = sphi 0, %s60
      %s49 = sphi 0, %s56
      %s50 = sphi 0, %s48
      %s51 = sphi 0, %s49
      %s52 = sphi 0, %s50
      %s53 = sphi 0, %s51
      %s63 = sphi 0, %s65
      %s66 = sphi 0, %s63
      %s67 = sphi 0, %s66
      %s83 = sphi 0, %s67
      %s91 = sphi 0, %s93
      %s94 = sphi 0, %s91
      %s95 = sphi 0, %s94
      %s111 = sphi 0, %s95
      %s115 = sphi 0, %s115
      %s117 = sphi 0, %s115
      %s118 = sphi 0, %s117
      %s132 = sphi 0, %s118
      %s136 = sphi 0, %s136
      %s138 = sphi 0, %s136
      %s139 = sphi 0, %s138
      %s153 = sphi 0, %s139
      %s157 = sphi 0, %s157
      %s159 = sphi 0, %s157
      %s160 = sphi 0, %s159
      %s174 = sphi 0, %s160
      %s178 = sphi 0, %s178
      %s180 = sphi 0, %s178
      %s181 = sphi 0, %s180
      %s195 = sphi 0, %s181
      %s199 = sphi 0, %s199
      %s201 = sphi 0, %s199
      %s202 = sphi 0, %s201
      %s216 = sphi 0, %s202
      %s220 = sphi 0, %s220
      %s222 = sphi 0, %s220
      %s223 = sphi 0, %s222
      %s237 = sphi 0, %s223
      %s241 = sphi 0, %s241
      %s243 = sphi 0, %s241
      %s244 = sphi 0, %s243
      %s258 = sphi 0, %s244
      %s262 = sphi 0, %s262
      %s264 = sphi 0, %s262
      %s265 = sphi 0, %s264
      %s279 = sphi 0, %s265
      %s283 = sphi 0, %s283
      %s285 = sphi 0, %s283
      %s286 = sphi 0, %s285
      %s300 = sphi 0, %s286
      %s304 = sphi 0, %s304
      %s306 = sphi 0, %s304
      %s307 = sphi 0, %s306
      %s321 = sphi 0, %s307
      %s325 = sphi 0, %s325
      %s327 = sphi 0, %s325
      %s328 = sphi 0, %s327
      %s342 = sphi 0, %s328
      %s346 = sphi 0, %s346
      %s348 = sphi 0, %s346
      %s349 = sphi 0, %s348
      %s363 = sphi 0, %s349
      %s367 = sphi 0, %s367
      %s369 = sphi 0, %s367
      %s370 = sphi 0, %s369
      %s384 = sphi 0, %s370
      %s388 = sphi 0, %s388
      %s390 = sphi 0, %s388
      %s391 = sphi 0, %s390
      %s405 = sphi 0, %s391
      %s409 = sphi 0, %s409
      %s411 = sphi 0, %s409
      %s412 = sphi 0, %s411
      %s426 = sphi 0, %s412
      %s430 = sphi 0, %s430
      %s432 = sphi 0, %s430
      %s433 = sphi 0, %s432
      %s447 = sphi 0, %s433
      %s455 = sphi 0, %s457
      %s458 = sphi 0, %s455
      %s459 = sphi 0, %s458
      %s475 = sphi 0, %s459
      %s483 = sphi 0, %s485
      %s486 = sphi 0, %s483
      %s487 = sphi 0, %s486
      %s503 = sphi 0, %s487
      %s511 = sphi 0, %s513
      %s514 = sphi 0, %s511
      %s515 = sphi 0, %s514
      %s531 = sphi 0, %s515
    $region4: #{tpu_custom_call.1} parent=1 // loop_header_branch
      %44 = sbr.rel (%p42) target = $region8
    $region5: #{tpu_custom_call.1} parent=1 // loop_body
      %s46 = ssub.s32 %s41, 1
      %s47 = ssub.s32 %s41, 2
      %s54 = sadd.s32 1, %s49
      %p55 = scmp.ge.s32.totalorder %s54, 2
      %s56 = scalar_select %p55, 0, %s54
      %s57 = sadd.s32 1, %s48
      %s58 = scalar_select %p55, %s57, %s48
      %p59 = scmp.ge.s32.totalorder %s58, 2
      %s60 = scalar_select %p59, 0, %s58
      %s61 = ssub.s32 %s48, %s60
      %p62 = scmp.eq.s32.totalorder %s61, 0
      %s64 = sadd.s32 %s63, 1
      %s65 = scalar_select %p62, %s63, %s64
      %p68 = pneg %p62
      %p69 = scmp.eq.s32.totalorder %s41, 3
      %p70 = por %p68, %p69
      %p71 = scmp.ne.s32.totalorder %s63, %s66
      %p72 = scmp.eq.s32.totalorder %s41, 0
      %p73 = por %p71, %p72
      %p74 = scmp.ne.s32.totalorder %s63, %s66
      %p75 = scmp.eq.s32.totalorder %s46, 3
      %p76 = por %p74, %p75
      %p77 = scmp.ne.s32.totalorder %s66, %s67
      %p78 = scmp.eq.s32.totalorder %s46, 0
      %p79 = por %p77, %p78
      %p80 = scmp.ne.s32.totalorder %s66, %s67
      %p81 = scmp.eq.s32.totalorder %s47, 3
      %p82 = por %p80, %p81
      %p84 = scmp.ne.s32.totalorder %s67, %s83
      %p85 = scmp.eq.s32.totalorder %s47, 0
      %p86 = por %p84, %p85
      %s87 = ssub.s32 %s48, %s60
      %s88 = ssub.s32 %s49, %s56
      %s89 = sor.u32 %s87, %s88
      %p90 = scmp.eq.s32.totalorder %s89, 0
      %s92 = sadd.s32 %s91, 1
      %s93 = scalar_select %p90, %s91, %s92
      %p96 = pneg %p90
      %p97 = scmp.eq.s32.totalorder %s41, 3
      %p98 = por %p96, %p97
      %p99 = scmp.ne.s32.totalorder %s91, %s94
      %p100 = scmp.eq.s32.totalorder %s41, 0
      %p101 = por %p99, %p100
      %p102 = scmp.ne.s32.totalorder %s91, %s94
      %p103 = scmp.eq.s32.totalorder %s46, 3
      %p104 = por %p102, %p103
      %p105 = scmp.ne.s32.totalorder %s94, %s95
      %p106 = scmp.eq.s32.totalorder %s46, 0
      %p107 = por %p105, %p106
      %p108 = scmp.ne.s32.totalorder %s94, %s95
      %p109 = scmp.eq.s32.totalorder %s47, 3
      %p110 = por %p108, %p109
      %p112 = scmp.ne.s32.totalorder %s95, %s111
      %p113 = scmp.eq.s32.totalorder %s47, 0
      %p114 = por %p112, %p113
      %s116 = sadd.s32 %s115, 1
      %p119 = scmp.eq.s32.totalorder %s41, 3
      %p120 = scmp.ne.s32.totalorder %s115, %s117
      %p121 = scmp.eq.s32.totalorder %s41, 0
      %p122 = por %p120, %p121
      %p123 = scmp.ne.s32.totalorder %s115, %s117
      %p124 = scmp.eq.s32.totalorder %s46, 3
      %p125 = por %p123, %p124
      %p126 = scmp.ne.s32.totalorder %s117, %s118
      %p127 = scmp.eq.s32.totalorder %s46, 0
      %p128 = por %p126, %p127
      %p129 = scmp.ne.s32.totalorder %s117, %s118
      %p130 = scmp.eq.s32.totalorder %s47, 3
      %p131 = por %p129, %p130
      %p133 = scmp.ne.s32.totalorder %s118, %s132
      %p134 = scmp.eq.s32.totalorder %s47, 0
      %p135 = por %p133, %p134
      %s137 = sadd.s32 %s136, 1
      %p140 = scmp.eq.s32.totalorder %s41, 3
      %p141 = scmp.ne.s32.totalorder %s136, %s138
      %p142 = scmp.eq.s32.totalorder %s41, 0
      %p143 = por %p141, %p142
      %p144 = scmp.ne.s32.totalorder %s136, %s138
      %p145 = scmp.eq.s32.totalorder %s46, 3
      %p146 = por %p144, %p145
      %p147 = scmp.ne.s32.totalorder %s138, %s139
      %p148 = scmp.eq.s32.totalorder %s46, 0
      %p149 = por %p147, %p148
      %p150 = scmp.ne.s32.totalorder %s138, %s139
      %p151 = scmp.eq.s32.totalorder %s47, 3
      %p152 = por %p150, %p151
      %p154 = scmp.ne.s32.totalorder %s139, %s153
      %p155 = scmp.eq.s32.totalorder %s47, 0
      %p156 = por %p154, %p155
      %s158 = sadd.s32 %s157, 1
      %p161 = scmp.eq.s32.totalorder %s41, 3
      %p162 = scmp.ne.s32.totalorder %s157, %s159
      %p163 = scmp.eq.s32.totalorder %s41, 0
      %p164 = por %p162, %p163
      %p165 = scmp.ne.s32.totalorder %s157, %s159
      %p166 = scmp.eq.s32.totalorder %s46, 3
      %p167 = por %p165, %p166
      %p168 = scmp.ne.s32.totalorder %s159, %s160
      %p169 = scmp.eq.s32.totalorder %s46, 0
      %p170 = por %p168, %p169
      %p171 = scmp.ne.s32.totalorder %s159, %s160
      %p172 = scmp.eq.s32.totalorder %s47, 3
      %p173 = por %p171, %p172
      %p175 = scmp.ne.s32.totalorder %s160, %s174
      %p176 = scmp.eq.s32.totalorder %s47, 0
      %p177 = por %p175, %p176
      %s179 = sadd.s32 %s178, 1
      %p182 = scmp.eq.s32.totalorder %s41, 3
      %p183 = scmp.ne.s32.totalorder %s178, %s180
      %p184 = scmp.eq.s32.totalorder %s41, 0
      %p185 = por %p183, %p184
      %p186 = scmp.ne.s32.totalorder %s178, %s180
      %p187 = scmp.eq.s32.totalorder %s46, 3
      %p188 = por %p186, %p187
      %p189 = scmp.ne.s32.totalorder %s180, %s181
      %p190 = scmp.eq.s32.totalorder %s46, 0
      %p191 = por %p189, %p190
      %p192 = scmp.ne.s32.totalorder %s180, %s181
      %p193 = scmp.eq.s32.totalorder %s47, 3
      %p194 = por %p192, %p193
      %p196 = scmp.ne.s32.totalorder %s181, %s195
      %p197 = scmp.eq.s32.totalorder %s47, 0
      %p198 = por %p196, %p197
      %s200 = sadd.s32 %s199, 1
      %p203 = scmp.eq.s32.totalorder %s41, 3
      %p204 = scmp.ne.s32.totalorder %s199, %s201
      %p205 = scmp.eq.s32.totalorder %s41, 0
      %p206 = por %p204, %p205
      %p207 = scmp.ne.s32.totalorder %s199, %s201
      %p208 = scmp.eq.s32.totalorder %s46, 3
      %p209 = por %p207, %p208
      %p210 = scmp.ne.s32.totalorder %s201, %s202
      %p211 = scmp.eq.s32.totalorder %s46, 0
      %p212 = por %p210, %p211
      %p213 = scmp.ne.s32.totalorder %s201, %s202
      %p214 = scmp.eq.s32.totalorder %s47, 3
      %p215 = por %p213, %p214
      %p217 = scmp.ne.s32.totalorder %s202, %s216
      %p218 = scmp.eq.s32.totalorder %s47, 0
      %p219 = por %p217, %p218
      %s221 = sadd.s32 %s220, 1
      %p224 = scmp.eq.s32.totalorder %s41, 3
      %p225 = scmp.ne.s32.totalorder %s220, %s222
      %p226 = scmp.eq.s32.totalorder %s41, 0
      %p227 = por %p225, %p226
      %p228 = scmp.ne.s32.totalorder %s220, %s222
      %p229 = scmp.eq.s32.totalorder %s46, 3
      %p230 = por %p228, %p229
      %p231 = scmp.ne.s32.totalorder %s222, %s223
      %p232 = scmp.eq.s32.totalorder %s46, 0
      %p233 = por %p231, %p232
      %p234 = scmp.ne.s32.totalorder %s222, %s223
      %p235 = scmp.eq.s32.totalorder %s47, 3
      %p236 = por %p234, %p235
      %p238 = scmp.ne.s32.totalorder %s223, %s237
      %p239 = scmp.eq.s32.totalorder %s47, 0
      %p240 = por %p238, %p239
      %s242 = sadd.s32 %s241, 1
      %p245 = scmp.eq.s32.totalorder %s41, 3
      %p246 = scmp.ne.s32.totalorder %s241, %s243
      %p247 = scmp.eq.s32.totalorder %s41, 0
      %p248 = por %p246, %p247
      %p249 = scmp.ne.s32.totalorder %s241, %s243
      %p250 = scmp.eq.s32.totalorder %s46, 3
      %p251 = por %p249, %p250
      %p252 = scmp.ne.s32.totalorder %s243, %s244
      %p253 = scmp.eq.s32.totalorder %s46, 0
      %p254 = por %p252, %p253
      %p255 = scmp.ne.s32.totalorder %s243, %s244
      %p256 = scmp.eq.s32.totalorder %s47, 3
      %p257 = por %p255, %p256
      %p259 = scmp.ne.s32.totalorder %s244, %s258
      %p260 = scmp.eq.s32.totalorder %s47, 0
      %p261 = por %p259, %p260
      %s263 = sadd.s32 %s262, 1
      %p266 = scmp.eq.s32.totalorder %s41, 3
      %p267 = scmp.ne.s32.totalorder %s262, %s264
      %p268 = scmp.eq.s32.totalorder %s41, 0
      %p269 = por %p267, %p268
      %p270 = scmp.ne.s32.totalorder %s262, %s264
      %p271 = scmp.eq.s32.totalorder %s46, 3
      %p272 = por %p270, %p271
      %p273 = scmp.ne.s32.totalorder %s264, %s265
      %p274 = scmp.eq.s32.totalorder %s46, 0
      %p275 = por %p273, %p274
      %p276 = scmp.ne.s32.totalorder %s264, %s265
      %p277 = scmp.eq.s32.totalorder %s47, 3
      %p278 = por %p276, %p277
      %p280 = scmp.ne.s32.totalorder %s265, %s279
      %p281 = scmp.eq.s32.totalorder %s47, 0
      %p282 = por %p280, %p281
      %s284 = sadd.s32 %s283, 1
      %p287 = scmp.eq.s32.totalorder %s41, 3
      %p288 = scmp.ne.s32.totalorder %s283, %s285
      %p289 = scmp.eq.s32.totalorder %s41, 0
      %p290 = por %p288, %p289
      %p291 = scmp.ne.s32.totalorder %s283, %s285
      %p292 = scmp.eq.s32.totalorder %s46, 3
      %p293 = por %p291, %p292
      %p294 = scmp.ne.s32.totalorder %s285, %s286
      %p295 = scmp.eq.s32.totalorder %s46, 0
      %p296 = por %p294, %p295
      %p297 = scmp.ne.s32.totalorder %s285, %s286
      %p298 = scmp.eq.s32.totalorder %s47, 3
      %p299 = por %p297, %p298
      %p301 = scmp.ne.s32.totalorder %s286, %s300
      %p302 = scmp.eq.s32.totalorder %s47, 0
      %p303 = por %p301, %p302
      %s305 = sadd.s32 %s304, 1
      %p308 = scmp.eq.s32.totalorder %s41, 3
      %p309 = scmp.ne.s32.totalorder %s304, %s306
      %p310 = scmp.eq.s32.totalorder %s41, 0
      %p311 = por %p309, %p310
      %p312 = scmp.ne.s32.totalorder %s304, %s306
      %p313 = scmp.eq.s32.totalorder %s46, 3
      %p314 = por %p312, %p313
      %p315 = scmp.ne.s32.totalorder %s306, %s307
      %p316 = scmp.eq.s32.totalorder %s46, 0
      %p317 = por %p315, %p316
      %p318 = scmp.ne.s32.totalorder %s306, %s307
      %p319 = scmp.eq.s32.totalorder %s47, 3
      %p320 = por %p318, %p319
      %p322 = scmp.ne.s32.totalorder %s307, %s321
      %p323 = scmp.eq.s32.totalorder %s47, 0
      %p324 = por %p322, %p323
      %s326 = sadd.s32 %s325, 1
      %p329 = scmp.eq.s32.totalorder %s41, 3
      %p330 = scmp.ne.s32.totalorder %s325, %s327
      %p331 = scmp.eq.s32.totalorder %s41, 0
      %p332 = por %p330, %p331
      %p333 = scmp.ne.s32.totalorder %s325, %s327
      %p334 = scmp.eq.s32.totalorder %s46, 3
      %p335 = por %p333, %p334
      %p336 = scmp.ne.s32.totalorder %s327, %s328
      %p337 = scmp.eq.s32.totalorder %s46, 0
      %p338 = por %p336, %p337
      %p339 = scmp.ne.s32.totalorder %s327, %s328
      %p340 = scmp.eq.s32.totalorder %s47, 3
      %p341 = por %p339, %p340
      %p343 = scmp.ne.s32.totalorder %s328, %s342
      %p344 = scmp.eq.s32.totalorder %s47, 0
      %p345 = por %p343, %p344
      %s347 = sadd.s32 %s346, 1
      %p350 = scmp.eq.s32.totalorder %s41, 3
      %p351 = scmp.ne.s32.totalorder %s346, %s348
      %p352 = scmp.eq.s32.totalorder %s41, 0
      %p353 = por %p351, %p352
      %p354 = scmp.ne.s32.totalorder %s346, %s348
      %p355 = scmp.eq.s32.totalorder %s46, 3
      %p356 = por %p354, %p355
      %p357 = scmp.ne.s32.totalorder %s348, %s349
      %p358 = scmp.eq.s32.totalorder %s46, 0
      %p359 = por %p357, %p358
      %p360 = scmp.ne.s32.totalorder %s348, %s349
      %p361 = scmp.eq.s32.totalorder %s47, 3
      %p362 = por %p360, %p361
      %p364 = scmp.ne.s32.totalorder %s349, %s363
      %p365 = scmp.eq.s32.totalorder %s47, 0
      %p366 = por %p364, %p365
      %s368 = sadd.s32 %s367, 1
      %p371 = scmp.eq.s32.totalorder %s41, 3
      %p372 = scmp.ne.s32.totalorder %s367, %s369
      %p373 = scmp.eq.s32.totalorder %s41, 0
      %p374 = por %p372, %p373
      %p375 = scmp.ne.s32.totalorder %s367, %s369
      %p376 = scmp.eq.s32.totalorder %s46, 3
      %p377 = por %p375, %p376
      %p378 = scmp.ne.s32.totalorder %s369, %s370
      %p379 = scmp.eq.s32.totalorder %s46, 0
      %p380 = por %p378, %p379
      %p381 = scmp.ne.s32.totalorder %s369, %s370
      %p382 = scmp.eq.s32.totalorder %s47, 3
      %p383 = por %p381, %p382
      %p385 = scmp.ne.s32.totalorder %s370, %s384
      %p386 = scmp.eq.s32.totalorder %s47, 0
      %p387 = por %p385, %p386
      %s389 = sadd.s32 %s388, 1
      %p392 = scmp.eq.s32.totalorder %s41, 3
      %p393 = scmp.ne.s32.totalorder %s388, %s390
      %p394 = scmp.eq.s32.totalorder %s41, 0
      %p395 = por %p393, %p394
      %p396 = scmp.ne.s32.totalorder %s388, %s390
      %p397 = scmp.eq.s32.totalorder %s46, 3
      %p398 = por %p396, %p397
      %p399 = scmp.ne.s32.totalorder %s390, %s391
      %p400 = scmp.eq.s32.totalorder %s46, 0
      %p401 = por %p399, %p400
      %p402 = scmp.ne.s32.totalorder %s390, %s391
      %p403 = scmp.eq.s32.totalorder %s47, 3
      %p404 = por %p402, %p403
      %p406 = scmp.ne.s32.totalorder %s391, %s405
      %p407 = scmp.eq.s32.totalorder %s47, 0
      %p408 = por %p406, %p407
      %s410 = sadd.s32 %s409, 1
      %p413 = scmp.eq.s32.totalorder %s41, 3
      %p414 = scmp.ne.s32.totalorder %s409, %s411
      %p415 = scmp.eq.s32.totalorder %s41, 0
      %p416 = por %p414, %p415
      %p417 = scmp.ne.s32.totalorder %s409, %s411
      %p418 = scmp.eq.s32.totalorder %s46, 3
      %p419 = por %p417, %p418
      %p420 = scmp.ne.s32.totalorder %s411, %s412
      %p421 = scmp.eq.s32.totalorder %s46, 0
      %p422 = por %p420, %p421
      %p423 = scmp.ne.s32.totalorder %s411, %s412
      %p424 = scmp.eq.s32.totalorder %s47, 3
      %p425 = por %p423, %p424
      %p427 = scmp.ne.s32.totalorder %s412, %s426
      %p428 = scmp.eq.s32.totalorder %s47, 0
      %p429 = por %p427, %p428
      %s431 = sadd.s32 %s430, 1
      %p434 = scmp.eq.s32.totalorder %s41, 3
      %p435 = scmp.ne.s32.totalorder %s430, %s432
      %p436 = scmp.eq.s32.totalorder %s41, 0
      %p437 = por %p435, %p436
      %p438 = scmp.ne.s32.totalorder %s430, %s432
      %p439 = scmp.eq.s32.totalorder %s46, 3
      %p440 = por %p438, %p439
      %p441 = scmp.ne.s32.totalorder %s432, %s433
      %p442 = scmp.eq.s32.totalorder %s46, 0
      %p443 = por %p441, %p442
      %p444 = scmp.ne.s32.totalorder %s432, %s433
      %p445 = scmp.eq.s32.totalorder %s47, 3
      %p446 = por %p444, %p445
      %p448 = scmp.ne.s32.totalorder %s433, %s447
      %p449 = scmp.eq.s32.totalorder %s47, 0
      %p450 = por %p448, %p449
      %s451 = ssub.s32 %s48, %s60
      %s452 = ssub.s32 %s49, %s56
      %s453 = sor.u32 %s451, %s452
      %p454 = scmp.eq.s32.totalorder %s453, 0
      %s456 = sadd.s32 %s455, 1
      %s457 = scalar_select %p454, %s455, %s456
      %p460 = pneg %p454
      %p461 = scmp.eq.s32.totalorder %s41, 3
      %p462 = por %p460, %p461
      %p463 = scmp.ne.s32.totalorder %s455, %s458
      %p464 = scmp.eq.s32.totalorder %s41, 0
      %p465 = por %p463, %p464
      %p466 = scmp.ne.s32.totalorder %s455, %s458
      %p467 = scmp.eq.s32.totalorder %s46, 3
      %p468 = por %p466, %p467
      %p469 = scmp.ne.s32.totalorder %s458, %s459
      %p470 = scmp.eq.s32.totalorder %s46, 0
      %p471 = por %p469, %p470
      %p472 = scmp.ne.s32.totalorder %s458, %s459
      %p473 = scmp.eq.s32.totalorder %s47, 3
      %p474 = por %p472, %p473
      %p476 = scmp.ne.s32.totalorder %s459, %s475
      %p477 = scmp.eq.s32.totalorder %s47, 0
      %p478 = por %p476, %p477
      %s479 = ssub.s32 %s48, %s60
      %s480 = ssub.s32 %s49, %s56
      %s481 = sor.u32 %s479, %s480
      %p482 = scmp.eq.s32.totalorder %s481, 0
      %s484 = sadd.s32 %s483, 1
      %s485 = scalar_select %p482, %s483, %s484
      %p488 = pneg %p482
      %p489 = scmp.eq.s32.totalorder %s41, 3
      %p490 = por %p488, %p489
      %p491 = scmp.ne.s32.totalorder %s483, %s486
      %p492 = scmp.eq.s32.totalorder %s41, 0
      %p493 = por %p491, %p492
      %p494 = scmp.ne.s32.totalorder %s483, %s486
      %p495 = scmp.eq.s32.totalorder %s46, 3
      %p496 = por %p494, %p495
      %p497 = scmp.ne.s32.totalorder %s486, %s487
      %p498 = scmp.eq.s32.totalorder %s46, 0
      %p499 = por %p497, %p498
      %p500 = scmp.ne.s32.totalorder %s486, %s487
      %p501 = scmp.eq.s32.totalorder %s47, 3
      %p502 = por %p500, %p501
      %p504 = scmp.ne.s32.totalorder %s487, %s503
      %p505 = scmp.eq.s32.totalorder %s47, 0
      %p506 = por %p504, %p505
      %s507 = ssub.s32 %s48, %s60
      %s508 = ssub.s32 %s49, %s56
      %s509 = sor.u32 %s507, %s508
      %p510 = scmp.eq.s32.totalorder %s509, 0
      %s512 = sadd.s32 %s511, 1
      %s513 = scalar_select %p510, %s511, %s512
      %p516 = pneg %p510
      %p517 = scmp.eq.s32.totalorder %s41, 3
      %p518 = por %p516, %p517
      %p519 = scmp.ne.s32.totalorder %s511, %s514
      %p520 = scmp.eq.s32.totalorder %s41, 0
      %p521 = por %p519, %p520
      %p522 = scmp.ne.s32.totalorder %s511, %s514
      %p523 = scmp.eq.s32.totalorder %s46, 3
      %p524 = por %p522, %p523
      %p525 = scmp.ne.s32.totalorder %s514, %s515
      %p526 = scmp.eq.s32.totalorder %s46, 0
      %p527 = por %p525, %p526
      %p528 = scmp.ne.s32.totalorder %s514, %s515
      %p529 = scmp.eq.s32.totalorder %s47, 3
      %p530 = por %p528, %p529
      %p532 = scmp.ne.s32.totalorder %s515, %s531
      %p533 = scmp.eq.s32.totalorder %s47, 0
      %p534 = por %p532, %p533
      %p535 = scmp.le.s32.totalorder 1, %s41
      %p536 = scmp.lt.s32.totalorder %s41, 5
      %p537 = pnand %p535, %p536
      %p538 = pneg %p537
      // Predicated region
      $region9: #{tpu_custom_call.1} parent=5 // pred_check
        _
      $region10: #{tpu_custom_call.1} parent=5 // pred_check_branch
        %540 = sbr.rel (%p537) target = $region12
      $region11: #{tpu_custom_call.1} parent=5 // pred_region
        %s541 = ssub.s32 %s41, 1
        // Predicated region
        $region13: #{tpu_custom_call.1} parent=11 // pred_check
          %p542 = pneg %p128
        $region14: #{tpu_custom_call.1} parent=11 // pred_check_branch
          %544 = sbr.rel (%p542) target = $region16
        $region15: #{tpu_custom_call.1} parent=11 // pred_region
          _
        $region16: #{tpu_custom_call.1} parent=11 // pred_fallthru
          _
        // Predicated region
        $region17: #{tpu_custom_call.1} parent=11 // pred_check
          %p545 = pneg %p149
        $region18: #{tpu_custom_call.1} parent=11 // pred_check_branch
          %547 = sbr.rel (%p545) target = $region20
        $region19: #{tpu_custom_call.1} parent=11 // pred_region
          %s549 = ssub.s32 16, 16
          %550 = vsyncadd [#allocation10], %s549
          %s552 = sshll.u32 [#allocation9], 4
          %s553 = int_to_ptr.vmem [resolvable:$true] %s552
          %555 = dma.hbm_to_vmem [thread:$0]  %s3, 16, %s553, [#allocation10]
        $region20: #{tpu_custom_call.1} parent=11 // pred_fallthru
          _
        // Predicated region
        $region21: #{tpu_custom_call.1} parent=11 // pred_check
          %p556 = pneg %p170
        $region22: #{tpu_custom_call.1} parent=11 // pred_check_branch
          %558 = sbr.rel (%p556) target = $region24
        $region23: #{tpu_custom_call.1} parent=11 // pred_region
          _
        $region24: #{tpu_custom_call.1} parent=11 // pred_fallthru
          _
        // Predicated region
        $region25: #{tpu_custom_call.1} parent=11 // pred_check
          %p559 = pneg %p191
        $region26: #{tpu_custom_call.1} parent=11 // pred_check_branch
          %561 = sbr.rel (%p559) target = $region28
        $region27: #{tpu_custom_call.1} parent=11 // pred_region
          %s563 = ssub.s32 16, 16
          %564 = vsyncadd [#allocation10], %s563
          %s566 = sshll.u32 [#allocation11], 4
          %s567 = int_to_ptr.vmem [resolvable:$true] %s566
          %569 = dma.hbm_to_vmem [thread:$0]  %s5, 16, %s567, [#allocation10]
        $region28: #{tpu_custom_call.1} parent=11 // pred_fallthru
          _
        // Predicated region
        $region29: #{tpu_custom_call.1} parent=11 // pred_check
          %p570 = pneg %p212
        $region30: #{tpu_custom_call.1} parent=11 // pred_check_branch
          %572 = sbr.rel (%p570) target = $region32
        $region31: #{tpu_custom_call.1} parent=11 // pred_region
          %s574 = ssub.s32 256, 256
          %575 = vsyncadd [#allocation13], %s574
          %s576 = sshll.u32 [#allocation12], 4
          %s577 = int_to_ptr.vmem [resolvable:$true] %s576
          %582 = dma.hbm_to_vmem [thread:$0]  %s6, 256, %s577, [#allocation13], 64, 64, 4
        $region32: #{tpu_custom_call.1} parent=11 // pred_fallthru
          _
        // Predicated region
        $region33: #{tpu_custom_call.1} parent=11 // pred_check
          %p583 = pneg %p233
        $region34: #{tpu_custom_call.1} parent=11 // pred_check_branch
          %585 = sbr.rel (%p583) target = $region36
        $region35: #{tpu_custom_call.1} parent=11 // pred_region
          %s587 = ssub.s32 16, 16
          %588 = vsyncadd [#allocation13], %s587
          %s590 = sshll.u32 [#allocation14], 4
          %s591 = int_to_ptr.vmem [resolvable:$true] %s590
          %593 = dma.hbm_to_vmem [thread:$0]  %s7, 16, %s591, [#allocation13]
        $region36: #{tpu_custom_call.1} parent=11 // pred_fallthru
          _
        // Predicated region
        $region37: #{tpu_custom_call.1} parent=11 // pred_check
          %p594 = pneg %p254
        $region38: #{tpu_custom_call.1} parent=11 // pred_check_branch
          %596 = sbr.rel (%p594) target = $region40
        $region39: #{tpu_custom_call.1} parent=11 // pred_region
          %s598 = ssub.s32 256, 256
          %599 = vsyncadd [#allocation16], %s598
          %s600 = sshll.u32 [#allocation15], 4
          %s601 = int_to_ptr.vmem [resolvable:$true] %s600
          %606 = dma.hbm_to_vmem [thread:$0]  %s8, 256, %s601, [#allocation16], 64, 64, 4
        $region40: #{tpu_custom_call.1} parent=11 // pred_fallthru
          _
        // Predicated region
        $region41: #{tpu_custom_call.1} parent=11 // pred_check
          %p607 = pneg %p275
        $region42: #{tpu_custom_call.1} parent=11 // pred_check_branch
          %609 = sbr.rel (%p607) target = $region44
        $region43: #{tpu_custom_call.1} parent=11 // pred_region
          %s611 = ssub.s32 16, 16
          %612 = vsyncadd [#allocation16], %s611
          %s614 = sshll.u32 [#allocation17], 4
          %s615 = int_to_ptr.vmem [resolvable:$true] %s614
          %617 = dma.hbm_to_vmem [thread:$0]  %s9, 16, %s615, [#allocation16]
        $region44: #{tpu_custom_call.1} parent=11 // pred_fallthru
          _
        // Predicated region
        $region45: #{tpu_custom_call.1} parent=11 // pred_check
          %p618 = pneg %p296
        $region46: #{tpu_custom_call.1} parent=11 // pred_check_branch
          %620 = sbr.rel (%p618) target = $region48
        $region47: #{tpu_custom_call.1} parent=11 // pred_region
          _
        $region48: #{tpu_custom_call.1} parent=11 // pred_fallthru
          _
        // Predicated region
        $region49: #{tpu_custom_call.1} parent=11 // pred_check
          %p621 = pneg %p317
        $region50: #{tpu_custom_call.1} parent=11 // pred_check_branch
          %623 = sbr.rel (%p621) target = $region52
        $region51: #{tpu_custom_call.1} parent=11 // pred_region
          %s625 = ssub.s32 16, 16
          %626 = vsyncadd [#allocation19], %s625
          %s628 = sshll.u32 [#allocation18], 4
          %s629 = int_to_ptr.vmem [resolvable:$true] %s628
          %631 = dma.hbm_to_vmem [thread:$0]  %s11, 16, %s629, [#allocation19]
        $region52: #{tpu_custom_call.1} parent=11 // pred_fallthru
          _
        // Predicated region
        $region53: #{tpu_custom_call.1} parent=11 // pred_check
          %p632 = pneg %p338
        $region54: #{tpu_custom_call.1} parent=11 // pred_check_branch
          %634 = sbr.rel (%p632) target = $region56
        $region55: #{tpu_custom_call.1} parent=11 // pred_region
          %s636 = ssub.s32 16, 16
          %637 = vsyncadd [#allocation19], %s636
          %s639 = sshll.u32 [#allocation20], 4
          %s640 = int_to_ptr.vmem [resolvable:$true] %s639
          %642 = dma.hbm_to_vmem [thread:$0]  %s12, 16, %s640, [#allocation19]
        $region56: #{tpu_custom_call.1} parent=11 // pred_fallthru
          _
        // Predicated region
        $region57: #{tpu_custom_call.1} parent=11 // pred_check
          %p643 = pneg %p359
        $region58: #{tpu_custom_call.1} parent=11 // pred_check_branch
          %645 = sbr.rel (%p643) target = $region60
        $region59: #{tpu_custom_call.1} parent=11 // pred_region
          %s647 = ssub.s32 16, 16
          %648 = vsyncadd [#allocation22], %s647
          %s650 = sshll.u32 [#allocation21], 4
          %s651 = int_to_ptr.vmem [resolvable:$true] %s650
          %653 = dma.hbm_to_vmem [thread:$0]  %s13, 16, %s651, [#allocation22]
        $region60: #{tpu_custom_call.1} parent=11 // pred_fallthru
          _
        // Predicated region
        $region61: #{tpu_custom_call.1} parent=11 // pred_check
          %p654 = pneg %p380
        $region62: #{tpu_custom_call.1} parent=11 // pred_check_branch
          %656 = sbr.rel (%p654) target = $region64
        $region63: #{tpu_custom_call.1} parent=11 // pred_region
          _
        $region64: #{tpu_custom_call.1} parent=11 // pred_fallthru
          _
        // Predicated region
        $region65: #{tpu_custom_call.1} parent=11 // pred_check
          %p657 = pneg %p401
        $region66: #{tpu_custom_call.1} parent=11 // pred_check_branch
          %659 = sbr.rel (%p657) target = $region68
        $region67: #{tpu_custom_call.1} parent=11 // pred_region
          _
        $region68: #{tpu_custom_call.1} parent=11 // pred_fallthru
          _
        // Predicated region
        $region69: #{tpu_custom_call.1} parent=11 // pred_check
          %p660 = pneg %p422
        $region70: #{tpu_custom_call.1} parent=11 // pred_check_branch
          %662 = sbr.rel (%p660) target = $region72
        $region71: #{tpu_custom_call.1} parent=11 // pred_region
          _
        $region72: #{tpu_custom_call.1} parent=11 // pred_fallthru
          _
        // Predicated region
        $region73: #{tpu_custom_call.1} parent=11 // pred_check
          %p663 = pneg %p443
        $region74: #{tpu_custom_call.1} parent=11 // pred_check_branch
          %665 = sbr.rel (%p663) target = $region76
        $region75: #{tpu_custom_call.1} parent=11 // pred_region
          _
        $region76: #{tpu_custom_call.1} parent=11 // pred_fallthru
          _
      $region12: #{tpu_custom_call.1} parent=5 // pred_fallthru
        _
      %p666 = scmp.lt.s32.totalorder %s41, 4
      // Predicated region
      $region77: #{tpu_custom_call.1} parent=5 // pred_check
        %p667 = pneg %p666
      $region78: #{tpu_custom_call.1} parent=5 // pred_check_branch
        %669 = sbr.rel (%p667) target = $region80
      $region79: #{tpu_custom_call.1} parent=5 // pred_region
        // Predicated region
        $region81: #{tpu_custom_call.1} parent=79 // pred_check
          %p670 = pneg %p73
        $region82: #{tpu_custom_call.1} parent=79 // pred_check_branch
          %672 = sbr.rel (%p670) target = $region84
        $region83: #{tpu_custom_call.1} parent=79 // pred_region
          %p673 = scmp.lt.s32.totalorder %s48, 1
          %s674 = scalar_select %p673, %s48, 1
          %s675 = smul.addr %s674, 4
          %s676 = smul.addr %s675, 8
          %s677 = scalar_lea.vmem %s0, %s676
        $region84: #{tpu_custom_call.1} parent=79 // pred_fallthru
          _
        // Predicated region
        $region85: #{tpu_custom_call.1} parent=79 // pred_check
          %p678 = pneg %p101
        $region86: #{tpu_custom_call.1} parent=79 // pred_check_branch
          %680 = sbr.rel (%p678) target = $region88
        $region87: #{tpu_custom_call.1} parent=79 // pred_region
          %s681 = sand.u32 %s91, 1
          %s682 = scalar_lea.sflag [#allocation7], %s681
          %s683 = sand.u32 %s91, 1
          %s684 = smul.addr %s683, 16
          %s685 = scalar_lea.vmem [#allocation6], %s684
          %s686 = smul.u32 2, %s49
          %s688 = ssub.s32 256, 256
          %689 = vsyncadd %s682, %s688
          %s690 = smul.addr %s48, 4
          %s691 = sadd.s32 %s686, %s690
          %s692 = smul.addr %s691, 128
          %s693 = scalar_lea.hbm %s1, %s692
          %s694 = sshll.u32 %s685, 4
          %s695 = int_to_ptr.vmem [resolvable:$true] %s694
          %700 = dma.hbm_to_vmem [thread:$0]  %s693, 256, %s695, %s682, 128, 128, 8
        $region88: #{tpu_custom_call.1} parent=79 // pred_fallthru
          _
      $region80: #{tpu_custom_call.1} parent=5 // pred_fallthru
        _
      %p701 = scmp.le.s32.totalorder 1, %s41
      %p702 = scmp.lt.s32.totalorder %s41, 5
      %p703 = pnand %p701, %p702
      %p704 = pneg %p703
      // Predicated region
      $region89: #{tpu_custom_call.1} parent=5 // pred_check
        _
      $region90: #{tpu_custom_call.1} parent=5 // pred_check_branch
        %706 = sbr.rel (%p703) target = $region92
      $region91: #{tpu_custom_call.1} parent=5 // pred_region
        %s707 = ssub.s32 %s41, 1
        %s708 = sand.u32 %s94, 1
        %s709 = scalar_lea.sflag [#allocation7], %s708
        %s710 = sand.u32 %s94, 1
        %s711 = smul.addr %s710, 16
        %s712 = scalar_lea.vmem [#allocation6], %s711
        // Predicated region
        $region93: #{tpu_custom_call.1} parent=91 // pred_check
          %p713 = pneg %p107
        $region94: #{tpu_custom_call.1} parent=91 // pred_check_branch
          %715 = sbr.rel (%p713) target = $region96
        $region95: #{tpu_custom_call.1} parent=91 // pred_region
          %716 = dma.done %s709, 256
        $region96: #{tpu_custom_call.1} parent=91 // pred_fallthru
          _
        // Predicated region
        $region97: #{tpu_custom_call.1} parent=91 // pred_check
          %p717 = pneg %p149
        $region98: #{tpu_custom_call.1} parent=91 // pred_check_branch
          %719 = sbr.rel (%p717) target = $region100
        $region99: #{tpu_custom_call.1} parent=91 // pred_region
          %720 = dma.done [#allocation10], 16
        $region100: #{tpu_custom_call.1} parent=91 // pred_fallthru
          _
        // Predicated region
        $region101: #{tpu_custom_call.1} parent=91 // pred_check
          %p721 = pneg %p191
        $region102: #{tpu_custom_call.1} parent=91 // pred_check_branch
          %723 = sbr.rel (%p721) target = $region104
        $region103: #{tpu_custom_call.1} parent=91 // pred_region
          %724 = dma.done [#allocation10], 16
        $region104: #{tpu_custom_call.1} parent=91 // pred_fallthru
          _
        // Predicated region
        $region105: #{tpu_custom_call.1} parent=91 // pred_check
          %p725 = pneg %p212
        $region106: #{tpu_custom_call.1} parent=91 // pred_check_branch
          %727 = sbr.rel (%p725) target = $region108
        $region107: #{tpu_custom_call.1} parent=91 // pred_region
          %728 = dma.done [#allocation13], 256
        $region108: #{tpu_custom_call.1} parent=91 // pred_fallthru
          _
        // Predicated region
        $region109: #{tpu_custom_call.1} parent=91 // pred_check
          %p729 = pneg %p233
        $region110: #{tpu_custom_call.1} parent=91 // pred_check_branch
          %731 = sbr.rel (%p729) target = $region112
        $region111: #{tpu_custom_call.1} parent=91 // pred_region
          %732 = dma.done [#allocation13], 16
        $region112: #{tpu_custom_call.1} parent=91 // pred_fallthru
          _
        // Predicated region
        $region113: #{tpu_custom_call.1} parent=91 // pred_check
          %p733 = pneg %p254
        $region114: #{tpu_custom_call.1} parent=91 // pred_check_branch
          %735 = sbr.rel (%p733) target = $region116
        $region115: #{tpu_custom_call.1} parent=91 // pred_region
          %736 = dma.done [#allocation16], 256
        $region116: #{tpu_custom_call.1} parent=91 // pred_fallthru
          _
        // Predicated region
        $region117: #{tpu_custom_call.1} parent=91 // pred_check
          %p737 = pneg %p275
        $region118: #{tpu_custom_call.1} parent=91 // pred_check_branch
          %739 = sbr.rel (%p737) target = $region120
        $region119: #{tpu_custom_call.1} parent=91 // pred_region
          %740 = dma.done [#allocation16], 16
        $region120: #{tpu_custom_call.1} parent=91 // pred_fallthru
          _
        // Predicated region
        $region121: #{tpu_custom_call.1} parent=91 // pred_check
          %p741 = pneg %p317
        $region122: #{tpu_custom_call.1} parent=91 // pred_check_branch
          %743 = sbr.rel (%p741) target = $region124
        $region123: #{tpu_custom_call.1} parent=91 // pred_region
          %744 = dma.done [#allocation19], 16
        $region124: #{tpu_custom_call.1} parent=91 // pred_fallthru
          _
        // Predicated region
        $region125: #{tpu_custom_call.1} parent=91 // pred_check
          %p745 = pneg %p338
        $region126: #{tpu_custom_call.1} parent=91 // pred_check_branch
          %747 = sbr.rel (%p745) target = $region128
        $region127: #{tpu_custom_call.1} parent=91 // pred_region
          %748 = dma.done [#allocation19], 16
        $region128: #{tpu_custom_call.1} parent=91 // pred_fallthru
          _
        // Predicated region
        $region129: #{tpu_custom_call.1} parent=91 // pred_check
          %p749 = pneg %p359
        $region130: #{tpu_custom_call.1} parent=91 // pred_check_branch
          %751 = sbr.rel (%p749) target = $region132
        $region131: #{tpu_custom_call.1} parent=91 // pred_region
          %752 = dma.done [#allocation22], 16
        $region132: #{tpu_custom_call.1} parent=91 // pred_fallthru
          _
        %p753 = scmp.lt.s32.totalorder %s50, 1
        %s754 = scalar_select %p753, %s50, 1
        %s755 = smul.addr %s754, 4
        %s756 = smul.addr %s755, 8
        %s757 = scalar_lea.vmem %s0, %s756
        %p758 = pneg %p79
        %p759 = pneg %p76
        %s760 = sand.u32 %s94, 1
        %s761 = scalar_lea.sflag [#allocation7], %s760
        %s762 = sand.u32 %s94, 1
        %s763 = smul.addr %s762, 16
        %s764 = scalar_lea.vmem [#allocation6], %s763
        %p765 = pneg %p107
        %p766 = pneg %p104
        %p767 = pneg %p128
        %p768 = pneg %p125
        %p769 = pneg %p149
        %p770 = pneg %p146
        %p771 = pneg %p170
        %p772 = pneg %p167
        %p773 = pneg %p191
        %p774 = pneg %p188
        %p775 = pneg %p212
        %p776 = pneg %p209
        %p777 = pneg %p233
        %p778 = pneg %p230
        %p779 = pneg %p254
        %p780 = pneg %p251
        %p781 = pneg %p275
        %p782 = pneg %p272
        %p783 = pneg %p296
        %p784 = pneg %p293
        %p785 = pneg %p317
        %p786 = pneg %p314
        %p787 = pneg %p338
        %p788 = pneg %p335
        %p789 = pneg %p359
        %p790 = pneg %p356
        %p791 = pneg %p380
        %p792 = pneg %p377
        %p793 = pneg %p401
        %p794 = pneg %p398
        %p795 = pneg %p422
        %p796 = pneg %p419
        %p797 = pneg %p443
        %p798 = pneg %p440
        %p799 = pneg %p471
        %p800 = pneg %p468
        %s801 = sand.u32 %s458, 1
        %s802 = scalar_lea.sflag [#allocation8], %s801
        %s803 = sand.u32 %s458, 1
        %s804 = smul.addr %s803, 16
        %s805 = scalar_lea.vmem [#allocation23], %s804
        %p806 = pneg %p499
        %p807 = pneg %p496
        %s808 = sand.u32 %s46, 1
        %s809 = scalar_lea.sflag [#allocation25], %s808
        %s810 = sand.u32 %s486, 1
        %s811 = smul.addr %s810, 16
        %s812 = scalar_lea.vmem [#allocation24], %s811
        %p813 = pneg %p527
        %p814 = pneg %p524
        %s815 = sand.u32 %s46, 1
        %s816 = scalar_lea.sflag [#allocation25], %s815
        %s817 = sand.u32 %s514, 1
        %s818 = smul.addr %s817, 16
        %s819 = scalar_lea.vmem [#allocation26], %s818
        %p820 = scmp.lt.s32.totalorder %s50, 1
        %s821 = scalar_select %p820, %s50, 1
        %s822 = smul.addr %s821, 4
        %s823 = smul.addr %s822, 8
        %s824 = scalar_lea.vmem %s0, %s823
        %s825 = smul.u32 2, %s51
        %s826 = smul.u32 2, %s51
        %s827 = smul.u32 2, %s51
        %s828 = smul.u32 2, %s51
        %p830 = scmp.eq.s32.totalorder %s51, 0
        // Predicated region
        $region133: #{tpu_custom_call.1} parent=91 // pred_check
          %p831 = pneg %p830
        $region134: #{tpu_custom_call.1} parent=91 // pred_check_branch
          %833 = sbr.rel (%p831) target = $region136
        $region135: #{tpu_custom_call.1} parent=91 // pred_region
          %v834 = vld [vmem:[%s824] sm:$0xff]
          %v835 = vld [vmem:[%s824 + $0x8] sm:$0xff]
          %v836 = vld [vmem:[%s824 + $0x10] sm:$0xff]
          %v837 = vld [vmem:[%s824 + $0x18] sm:$0xff]
          %v838 = vld [vmem:[%s2] sm:$0x1]
          %v839 = vld [vmem:[#allocation9] sm:$0x1]
          %vm840 = vcmask 261120
          %v841 = vsel %vm840, %v834, 0.0
          %842 = vadd.xlane.f32.xlu0 %v841
          %v843 = vpop.xlane.xlu0 %842
          %v844 = vsel %vm840, %v835, 0.0
          %845 = vadd.xlane.f32.xlu0 %v844
          %v846 = vpop.xlane.xlu0 %845
          %v847 = vsel %vm840, %v836, 0.0
          %848 = vadd.xlane.f32.xlu0 %v847
          %v849 = vpop.xlane.xlu0 %848
          %v850 = vsel %vm840, %v837, 0.0
          %851 = vadd.xlane.f32.xlu0 %v850
          %v852 = vpop.xlane.xlu0 %851
          %v853 = vrcp.pop 32.0
          %v854 = vmul.f32 %v843, %v853
          %v855 = vmul.f32 %v846, %v853
          %v856 = vmul.f32 %v849, %v853
          %v857 = vmul.f32 %v852, %v853
          %v858 = vsub.f32 %v834, %v854
          %v859 = vsub.f32 %v835, %v855
          %v860 = vsub.f32 %v836, %v856
          %v861 = vsub.f32 %v837, %v857
          %v862 = vmul.f32 %v858, %v858
          %v863 = vmul.f32 %v859, %v859
          %v864 = vmul.f32 %v860, %v860
          %v865 = vmul.f32 %v861, %v861
          %v866 = vsel %vm840, %v862, 0.0
          %867 = vadd.xlane.f32.xlu0 %v866
          %v868 = vpop.xlane.xlu0 %867
          %v869 = vsel %vm840, %v863, 0.0
          %870 = vadd.xlane.f32.xlu0 %v869
          %v871 = vpop.xlane.xlu0 %870
          %v872 = vsel %vm840, %v864, 0.0
          %873 = vadd.xlane.f32.xlu0 %v872
          %v874 = vpop.xlane.xlu0 %873
          %v875 = vsel %vm840, %v865, 0.0
          %876 = vadd.xlane.f32.xlu0 %v875
          %v877 = vpop.xlane.xlu0 %876
          %v878 = vmul.f32 %v868, %v853
          %v879 = vmul.f32 %v871, %v853
          %v880 = vmul.f32 %v874, %v853
          %v881 = vmul.f32 %v877, %v853
          %v882 = vadd.f32 %v878, 1e-05
          %v883 = vadd.f32 %v879, 1e-05
          %v884 = vadd.f32 %v880, 1e-05
          %v885 = vadd.f32 %v881, 1e-05
          %v886 = vrsqrt.pop %v882
          %v887 = vrsqrt.pop %v883
          %v888 = vrsqrt.pop %v884
          %v889 = vrsqrt.pop %v885
          %v890 = vmul.f32 %v858, %v886
          %v891 = vmul.f32 %v859, %v887
          %v892 = vmul.f32 %v860, %v888
          %v893 = vmul.f32 %v861, %v889
          %v895 = vlaneseq
          %v896 = vshrl.u32 %v895, 7
          %v897 = vsub.s32 0, %v896
          %v898 = vrot.slane %v838, %v897
          %v900 = vmul.f32 %v890, %v898
          %v901 = vmul.f32 %v891, %v898
          %v902 = vmul.f32 %v892, %v898
          %v903 = vmul.f32 %v893, %v898
          %v905 = vlaneseq
          %v906 = vshrl.u32 %v905, 7
          %v907 = vsub.s32 0, %v906
          %v908 = vrot.slane %v839, %v907
          %v910 = vadd.f32 %v900, %v908
          %v911 = vadd.f32 %v901, %v908
          %v912 = vadd.f32 %v902, %v908
          %v913 = vadd.f32 %v903, %v908
          %v914 = vpack.c.bf16 %v911, %v910
          %v915 = vpack.c.bf16 %v913, %v912
          %916 = vst.msk [vmem:[#allocation2] sm:$0xff] %vm840, %v914
          %917 = vst.msk [vmem:[#allocation2 + $0x8] sm:$0xff] %vm840, %v915
          %v918 = vld [vmem:[#allocation12] sm:$0xf]
          %v919 = vld [vmem:[#allocation12 + $0x4] sm:$0xf]
          %v920 = vld [vmem:[#allocation12 + $0x8] sm:$0xf]
          %v921 = vld [vmem:[#allocation12 + $0xc] sm:$0xf]
          %v922 = vld [vmem:[#allocation14] sm:$0x1]
          %v924 = vlaneseq
          %v925 = vshrl.u32 %v924, 7
          %v926 = vsub.s32 0, %v925
          %v927 = vrot.slane %v922, %v926
          %v933 = vunpack.c.l.b16 %v918
          %v934 = vunpack.c.l.b16 %v919
          %v935 = vunpack.c.l.b16 %v920
          %v936 = vunpack.c.l.b16 %v921
          %v937 = vpack.c.b16 %v934, %v933
          %v938 = vpack.c.b16 %v936, %v935
          %v942 = vsel %vm840, %v914, 0
          %v945 = vsel %vm840, %v915, 0
          %947 = vmatprep.subr.bf16.mxu0 0
          %948 = vmatpush1.bf16.msra.mxu0 %v937
          %949 = vmatprep.subr.bf16.mxu0 0
          %950 = vmatpush1.bf16.msra.mxu0 %v938
          %951 = vmatprep.subr.bf16.mxu0 0
          %952 = vmatpush1.bf16.msra.mxu0 0
          %953 = vmatprep.subr.bf16.mxu0 0
          %954 = vmatpush1.bf16.msra.mxu0 0
          %955 = vmatprep.subr.bf16.mxu0 0
          %956 = vmatpush1.bf16.msra.mxu0 0
          %957 = vmatprep.subr.bf16.mxu0 0
          %958 = vmatpush1.bf16.msra.mxu0 0
          %959 = vmatprep.subr.bf16.mxu0 0
          %960 = vmatpush1.bf16.msra.mxu0 0
          %961 = vmatprep.subr.bf16.mxu0 0
          %962 = vmatpush1.bf16.msra.mxu0 0
          %963 = vmatprep.subr.bf16.mxu0 0
          %964 = vmatpush1.bf16.msra.mxu0 0
          %965 = vmatprep.subr.bf16.mxu0 0
          %966 = vmatpush1.bf16.msra.mxu0 0
          %967 = vmatprep.subr.bf16.mxu0 0
          %968 = vmatpush1.bf16.msra.mxu0 0
          %969 = vmatprep.subr.bf16.mxu0 0
          %970 = vmatpush1.bf16.msra.mxu0 0
          %971 = vmatprep.subr.bf16.mxu0 0
          %972 = vmatpush1.bf16.msra.mxu0 0
          %973 = vmatprep.subr.bf16.mxu0 0
          %974 = vmatpush1.bf16.msra.mxu0 0
          %975 = vmatprep.subr.bf16.mxu0 0
          %976 = vmatpush1.bf16.msra.mxu0 0
          %977 = vmatprep.subr.bf16.mxu0 0
          %978 = vmatpush1.bf16.msra.mxu0 0
          %979 = vmatprep.mubr.bf16.mxu0 0
          %980 = vmatmul.mubr.bf16.gmra.mrb[0].mxu0 %v942
          %v981 = vpop.f32.mrb[0].mxu0
          %v982 = vadd.f32 %v927, %v981
          %v983 = vpop.f32.mrb[0].mxu0
          %v984 = vpop.f32.mrb[0].mxu0
          %v985 = vadd.f32 %v927, %v984
          %v986 = vpop.f32.mrb[0].mxu0
          %987 = vmatprep.mubr.bf16.mxu0 0
          %988 = vmatmul.mubr.bf16.gmra.mrb[0].mxu0 %v945
          %v989 = vpop.f32.mrb[0].mxu0
          %v990 = vadd.f32 %v927, %v989
          %v991 = vpop.f32.mrb[0].mxu0
          %v992 = vpop.f32.mrb[0].mxu0
          %v993 = vadd.f32 %v927, %v992
          %v994 = vpop.f32.mrb[0].mxu0
          %995 = vdwg.mxu0
          %v996 = vld [vmem:[#allocation15] sm:$0xf]
          %v997 = vld [vmem:[#allocation15 + $0x4] sm:$0xf]
          %v998 = vld [vmem:[#allocation15 + $0x8] sm:$0xf]
          %v999 = vld [vmem:[#allocation15 + $0xc] sm:$0xf]
          %v1000 = vld [vmem:[#allocation17] sm:$0x1]
          %v1002 = vlaneseq
          %v1003 = vshrl.u32 %v1002, 7
          %v1004 = vsub.s32 0, %v1003
          %v1005 = vrot.slane %v1000, %v1004
          %v1011 = vunpack.c.l.b16 %v996
          %v1012 = vunpack.c.l.b16 %v997
          %v1013 = vunpack.c.l.b16 %v998
          %v1014 = vunpack.c.l.b16 %v999
          %v1015 = vpack.c.b16 %v1012, %v1011
          %v1016 = vpack.c.b16 %v1014, %v1013
          %1019 = vmatprep.subr.bf16.mxu0 0
          %1020 = vmatpush1.bf16.msra.mxu0 %v1015
          %1021 = vmatprep.subr.bf16.mxu0 0
          %1022 = vmatpush1.bf16.msra.mxu0 %v1016
          %1023 = vmatprep.subr.bf16.mxu0 0
          %1024 = vmatpush1.bf16.msra.mxu0 0
          %1025 = vmatprep.subr.bf16.mxu0 0
          %1026 = vmatpush1.bf16.msra.mxu0 0
          %1027 = vmatprep.subr.bf16.mxu0 0
          %1028 = vmatpush1.bf16.msra.mxu0 0
          %1029 = vmatprep.subr.bf16.mxu0 0
          %1030 = vmatpush1.bf16.msra.mxu0 0
          %1031 = vmatprep.subr.bf16.mxu0 0
          %1032 = vmatpush1.bf16.msra.mxu0 0
          %1033 = vmatprep.subr.bf16.mxu0 0
          %1034 = vmatpush1.bf16.msra.mxu0 0
          %1035 = vmatprep.subr.bf16.mxu0 0
          %1036 = vmatpush1.bf16.msra.mxu0 0
          %1037 = vmatprep.subr.bf16.mxu0 0
          %1038 = vmatpush1.bf16.msra.mxu0 0
          %1039 = vmatprep.subr.bf16.mxu0 0
          %1040 = vmatpush1.bf16.msra.mxu0 0
          %1041 = vmatprep.subr.bf16.mxu0 0
          %1042 = vmatpush1.bf16.msra.mxu0 0
          %1043 = vmatprep.subr.bf16.mxu0 0
          %1044 = vmatpush1.bf16.msra.mxu0 0
          %1045 = vmatprep.subr.bf16.mxu0 0
          %1046 = vmatpush1.bf16.msra.mxu0 0
          %1047 = vmatprep.subr.bf16.mxu0 0
          %1048 = vmatpush1.bf16.msra.mxu0 0
          %1049 = vmatprep.subr.bf16.mxu0 0
          %1050 = vmatpush1.bf16.msra.mxu0 0
          %1051 = vmatprep.mubr.bf16.mxu0 0
          %1052 = vmatmul.mubr.bf16.gmra.mrb[0].mxu0 %v942
          %v1053 = vpop.f32.mrb[0].mxu0
          %v1054 = vadd.f32 %v1005, %v1053
          %v1055 = vpop.f32.mrb[0].mxu0
          %v1056 = vpop.f32.mrb[0].mxu0
          %v1057 = vadd.f32 %v1005, %v1056
          %v1058 = vpop.f32.mrb[0].mxu0
          %1059 = vmatprep.mubr.bf16.mxu0 0
          %1060 = vmatmul.mubr.bf16.gmra.mrb[0].mxu0 %v945
          %v1061 = vpop.f32.mrb[0].mxu0
          %v1062 = vadd.f32 %v1005, %v1061
          %v1063 = vpop.f32.mrb[0].mxu0
          %v1064 = vpop.f32.mrb[0].mxu0
          %v1065 = vadd.f32 %v1005, %v1064
          %v1066 = vpop.f32.mrb[0].mxu0
          %1067 = vdwg.mxu0
          %v1068 = vpack.c.bf16 %v985, %v982
          %v1069 = vpack.c.bf16 %v993, %v990
          %1070 = vst.msk [vmem:[#allocation3] sm:$0xff] %vm840, %v1068
          %1071 = vst.msk [vmem:[#allocation3 + $0x8] sm:$0xff] %vm840, %v1069
          %v1072 = vpack.c.bf16 %v1057, %v1054
          %v1073 = vpack.c.bf16 %v1065, %v1062
          %1074 = vst.msk [vmem:[#allocation4] sm:$0xff] %vm840, %v1072
          %1075 = vst.msk [vmem:[#allocation4 + $0x8] sm:$0xff] %vm840, %v1073
        $region136: #{tpu_custom_call.1} parent=91 // pred_fallthru
          _
        %s1076 = smul.u32 %s51, 16
        %s1077 = sshra.s32 %s1076, 4
        %s1078 = sand.u32 %s1076, 15
        %s1079 = smul.addr %s1077, 8
        %s1080 = scalar_lea.vmem [#allocation3], %s1079
        %v1081 = vld [vmem:[%s1080] sm:$0xff]
        %v1082 = vunpack.c.l.bf16 %v1081
        %v1083 = vunpack.c.h.bf16 %v1081
        %vm1084 = vcmask 261120
        %1085 = vst.msk [vmem:[%s812] sm:$0xff] %vm1084, %v1082
        %1086 = vst.msk [vmem:[%s812 + $0x8] sm:$0xff] %vm1084, %v1083
        %s1087 = smul.addr %s1077, 8
        %s1088 = scalar_lea.vmem [#allocation4], %s1087
        %v1089 = vld [vmem:[%s1088] sm:$0xff]
        %v1090 = vunpack.c.l.bf16 %v1089
        %v1091 = vunpack.c.h.bf16 %v1089
        %1092 = vst.msk [vmem:[%s819] sm:$0xff] %vm1084, %v1090
        %1093 = vst.msk [vmem:[%s819 + $0x8] sm:$0xff] %vm1084, %v1091
        %s1094 = smul.addr %s1077, 8
        %s1095 = scalar_lea.vmem [#allocation2], %s1094
        %v1096 = vld [vmem:[%s1095] sm:$0xff]
        %v1097 = vld [vmem:[%s4] sm:$0xf]
        %v1098 = vld [vmem:[%s4 + $0x4] sm:$0xf]
        %v1099 = vld [vmem:[%s4 + $0x8] sm:$0xf]
        %v1100 = vld [vmem:[%s4 + $0xc] sm:$0xf]
        %v1101 = vld [vmem:[#allocation11] sm:$0x1]
        %v1103 = vlaneseq
        %v1104 = vshrl.u32 %v1103, 7
        %v1105 = vsub.s32 0, %v1104
        %v1106 = vrot.slane %v1101, %v1105
        %v1112 = vunpack.c.l.b16 %v1097
        %v1113 = vunpack.c.l.b16 %v1098
        %v1114 = vunpack.c.l.b16 %v1099
        %v1115 = vunpack.c.l.b16 %v1100
        %v1116 = vpack.c.b16 %v1113, %v1112
        %v1117 = vpack.c.b16 %v1115, %v1114
        %v1121 = vsel %vm1084, %v1096, 0
        %1123 = vmatprep.subr.bf16.mxu0 0
        %1124 = vmatpush1.bf16.msra.mxu0 %v1116
        %1125 = vmatprep.subr.bf16.mxu0 0
        %1126 = vmatpush1.bf16.msra.mxu0 %v1117
        %1127 = vmatprep.subr.bf16.mxu0 0
        %1128 = vmatpush1.bf16.msra.mxu0 0
        %1129 = vmatprep.subr.bf16.mxu0 0
        %1130 = vmatpush1.bf16.msra.mxu0 0
        %1131 = vmatprep.subr.bf16.mxu0 0
        %1132 = vmatpush1.bf16.msra.mxu0 0
        %1133 = vmatprep.subr.bf16.mxu0 0
        %1134 = vmatpush1.bf16.msra.mxu0 0
        %1135 = vmatprep.subr.bf16.mxu0 0
        %1136 = vmatpush1.bf16.msra.mxu0 0
        %1137 = vmatprep.subr.bf16.mxu0 0
        %1138 = vmatpush1.bf16.msra.mxu0 0
        %1139 = vmatprep.subr.bf16.mxu0 0
        %1140 = vmatpush1.bf16.msra.mxu0 0
        %1141 = vmatprep.subr.bf16.mxu0 0
        %1142 = vmatpush1.bf16.msra.mxu0 0
        %1143 = vmatprep.subr.bf16.mxu0 0
        %1144 = vmatpush1.bf16.msra.mxu0 0
        %1145 = vmatprep.subr.bf16.mxu0 0
        %1146 = vmatpush1.bf16.msra.mxu0 0
        %1147 = vmatprep.subr.bf16.mxu0 0
        %1148 = vmatpush1.bf16.msra.mxu0 0
        %1149 = vmatprep.subr.bf16.mxu0 0
        %1150 = vmatpush1.bf16.msra.mxu0 0
        %1151 = vmatprep.subr.bf16.mxu0 0
        %1152 = vmatpush1.bf16.msra.mxu0 0
        %1153 = vmatprep.subr.bf16.mxu0 0
        %1154 = vmatpush1.bf16.msra.mxu0 0
        %1155 = vmatprep.mubr.bf16.mxu0 0
        %1156 = vmatmul.mubr.bf16.gmra.mrb[0].mxu0 %v1121
        %v1157 = vpop.f32.mrb[0].mxu0
        %v1158 = vadd.f32 %v1106, %v1157
        %v1159 = vpop.f32.mrb[0].mxu0
        %v1160 = vpop.f32.mrb[0].mxu0
        %v1161 = vadd.f32 %v1106, %v1160
        %v1162 = vpop.f32.mrb[0].mxu0
        %1163 = vdwg.mxu0
        %v1164 = vpack.c.bf16 %v1161, %v1158
        %v1165 = vlaneseq
        %v1166 = vshrl.u32 %v1165, 7
        %v1167 = vadd.s32 %v1166, 8
        %v1168 = vstv %s1076
        %v1169 = vadd.s32 %v1168, %v1166
        %v1170 = vadd.s32 %v1168, %v1167
        %v1171 = vlaneseq
        %v1172 = vand.u32 %v1171, 127
        %vm1173 = vcmp.le.s32.totalorder %v1172, %v1169
        %vm1174 = vcmp.le.s32.totalorder %v1172, %v1170
        %v1175 = vsel %vm1173, 0.0, -3.4028235e+38
        %v1176 = vsel %vm1174, 0.0, -3.4028235e+38
        %v1177 = vld [vmem:[#allocation3] sm:$0xff]
        %v1178 = vld [vmem:[#allocation3 + $0x8] sm:$0xff]
        %v1179 = vld [vmem:[#allocation4] sm:$0xff]
        %v1180 = vld [vmem:[#allocation4 + $0x8] sm:$0xff]
        %vm1181 = vcmask 64512
        %v1183 = vsel %vm1181, %v1164, 0
        %v1186 = vsel %vm1181, %v1177, 0
        %v1189 = vsel %vm1181, %v1178, 0
        %1191 = vmatprep.subr.bf16.mxu0 0
        %1192 = vmatpush1.bf16.xpose.msra.mxu0 %v1186
        %1193 = vmatprep.subr.bf16.mxu0 0
        %1194 = vmatpush1.bf16.xpose.msra.mxu0 %v1189
        %1195 = vmatprep.subr.bf16.mxu0 0
        %1196 = vmatpush1.bf16.xpose.msra.mxu0 0
        %1197 = vmatprep.subr.bf16.mxu0 0
        %1198 = vmatpush1.bf16.xpose.msra.mxu0 0
        %1199 = vmatprep.subr.bf16.mxu0 0
        %1200 = vmatpush1.bf16.xpose.msra.mxu0 0
        %1201 = vmatprep.subr.bf16.mxu0 0
        %1202 = vmatpush1.bf16.xpose.msra.mxu0 0
        %1203 = vmatprep.subr.bf16.mxu0 0
        %1204 = vmatpush1.bf16.xpose.msra.mxu0 0
        %1205 = vmatprep.subr.bf16.mxu0 0
        %1206 = vmatpush1.bf16.xpose.msra.mxu0 0
        %1207 = vmatprep.subr.bf16.mxu0 0
        %1208 = vmatpush1.bf16.xpose.msra.mxu0 0
        %1209 = vmatprep.subr.bf16.mxu0 0
        %1210 = vmatpush1.bf16.xpose.msra.mxu0 0
        %1211 = vmatprep.subr.bf16.mxu0 0
        %1212 = vmatpush1.bf16.xpose.msra.mxu0 0
        %1213 = vmatprep.subr.bf16.mxu0 0
        %1214 = vmatpush1.bf16.xpose.msra.mxu0 0
        %1215 = vmatprep.subr.bf16.mxu0 0
        %1216 = vmatpush1.bf16.xpose.msra.mxu0 0
        %1217 = vmatprep.subr.bf16.mxu0 0
        %1218 = vmatpush1.bf16.xpose.msra.mxu0 0
        %1219 = vmatprep.subr.bf16.mxu0 0
        %1220 = vmatpush1.bf16.xpose.msra.mxu0 0
        %1221 = vmatprep.subr.bf16.mxu0 0
        %1222 = vmatpush1.bf16.xpose.msra.mxu0 0
        %1223 = vmatprep.mubr.bf16.mxu0 0
        %1224 = vmatmul.mubr.bf16.gmra.mrb[0].mxu0 %v1183
        %v1225 = vpop.f32.mrb[0].mxu0
        %v1226 = vadd.f32 %v1175, %v1225
        %v1227 = vpop.f32.mrb[0].mxu0
        %v1228 = vpop.f32.mrb[0].mxu0
        %v1229 = vadd.f32 %v1176, %v1228
        %v1230 = vpop.f32.mrb[0].mxu0
        %1231 = vdwg.mxu0
        %v1232 = vsel %vm1084, %v1226, -inf
        %1233 = vmax.xlane.f32.xlu0 %v1232
        %v1234 = vpop.xlane.xlu0 %1233
        %v1235 = vsel %vm1084, %v1229, -inf
        %1236 = vmax.xlane.f32.xlu0 %v1235
        %v1237 = vpop.xlane.xlu0 %1236
        %v1238 = vsub.f32 %v1226, %v1234
        %v1239 = vsub.f32 %v1229, %v1237
        %v1240 = vmul.f32 %v1238, 1.442695
        %v1241 = vpow.pop %v1240
        %v1242 = vmul.f32 %v1239, 1.442695
        %v1243 = vpow.pop %v1242
        %v1244 = vsel %vm1084, %v1241, 0.0
        %1245 = vadd.xlane.f32.xlu0 %v1244
        %v1246 = vpop.xlane.xlu0 %1245
        %v1247 = vsel %vm1084, %v1243, 0.0
        %1248 = vadd.xlane.f32.xlu0 %v1247
        %v1249 = vpop.xlane.xlu0 %1248
        %v1250 = vrcp.pop %v1246
        %v1251 = vrcp.pop %v1249
        %v1252 = vmul.f32 %v1246, %v1250
        %v1253 = vmul.f32 %v1249, %v1251
        %v1254 = vsub.f32 2.0, %v1252
        %v1255 = vsub.f32 2.0, %v1253
        %v1256 = vmul.f32 %v1250, %v1254
        %v1257 = vmul.f32 %v1251, %v1255
        %v1258 = vmul.f32 %v1241, %v1256
        %v1259 = vmul.f32 %v1243, %v1257
        %v1260 = vpack.c.bf16 %v1259, %v1258
        %v1262 = vsel %vm1084, %v1260, 0
        %1264 = vmatprep.subr.bf16.mxu0 0
        %1265 = vmatpush1.bf16.msra.mxu0 %v1179
        %1266 = vmatprep.subr.bf16.mxu0 0
        %1267 = vmatpush1.bf16.msra.mxu0 %v1180
        %1268 = vmatprep.subr.bf16.mxu0 0
        %1269 = vmatpush1.bf16.msra.mxu0 0
        %1270 = vmatprep.subr.bf16.mxu0 0
        %1271 = vmatpush1.bf16.msra.mxu0 0
        %1272 = vmatprep.subr.bf16.mxu0 0
        %1273 = vmatpush1.bf16.msra.mxu0 0
        %1274 = vmatprep.subr.bf16.mxu0 0
        %1275 = vmatpush1.bf16.msra.mxu0 0
        %1276 = vmatprep.subr.bf16.mxu0 0
        %1277 = vmatpush1.bf16.msra.mxu0 0
        %1278 = vmatprep.subr.bf16.mxu0 0
        %1279 = vmatpush1.bf16.msra.mxu0 0
        %1280 = vmatprep.subr.bf16.mxu0 0
        %1281 = vmatpush1.bf16.msra.mxu0 0
        %1282 = vmatprep.subr.bf16.mxu0 0
        %1283 = vmatpush1.bf16.msra.mxu0 0
        %1284 = vmatprep.subr.bf16.mxu0 0
        %1285 = vmatpush1.bf16.msra.mxu0 0
        %1286 = vmatprep.subr.bf16.mxu0 0
        %1287 = vmatpush1.bf16.msra.mxu0 0
        %1288 = vmatprep.subr.bf16.mxu0 0
        %1289 = vmatpush1.bf16.msra.mxu0 0
        %1290 = vmatprep.subr.bf16.mxu0 0
        %1291 = vmatpush1.bf16.msra.mxu0 0
        %1292 = vmatprep.subr.bf16.mxu0 0
        %1293 = vmatpush1.bf16.msra.mxu0 0
        %1294 = vmatprep.subr.bf16.mxu0 0
        %1295 = vmatpush1.bf16.msra.mxu0 0
        %1296 = vmatprep.mubr.bf16.mxu0 0
        %1297 = vmatmul.mubr.bf16.gmra.mrb[0].mxu0 %v1262
        %v1298 = vpop.f32.mrb[0].mxu0
        %v1299 = vadd.f32 0.0, %v1298
        %v1300 = vpop.f32.mrb[0].mxu0
        %v1301 = vpop.f32.mrb[0].mxu0
        %v1302 = vadd.f32 0.0, %v1301
        %v1303 = vpop.f32.mrb[0].mxu0
        %1304 = vdwg.mxu0
        %v1305 = vpack.c.bf16 %v1302, %v1299
        %1306 = vst.msk [vmem:[#allocation5] sm:$0xff] %vm1181, %v1305
        %v1307 = vld [vmem:[#allocation3] sm:$0xff]
        %v1308 = vld [vmem:[#allocation3 + $0x8] sm:$0xff]
        %v1309 = vld [vmem:[#allocation4] sm:$0xff]
        %v1310 = vld [vmem:[#allocation4 + $0x8] sm:$0xff]
        %1312 = vrot.lane.b32.xlu0 %v1164, 120
        %v1313 = vpop.permute.xlu0 %1312
        %1316 = vrot.lane.b32.xlu0 %v1307, 120
        %v1317 = vpop.permute.xlu0 %1316
        %1318 = vrot.lane.b32.xlu0 %v1308, 120
        %v1319 = vpop.permute.xlu0 %1318
        %v1321 = vsel %vm1181, %v1313, 0
        %v1324 = vsel %vm1181, %v1317, 0
        %v1327 = vsel %vm1181, %v1319, 0
        %1329 = vmatprep.subr.bf16.mxu0 0
        %1330 = vmatpush1.bf16.xpose.msra.mxu0 %v1324
        %1331 = vmatprep.subr.bf16.mxu0 0
        %1332 = vmatpush1.bf16.xpose.msra.mxu0 %v1327
        %1333 = vmatprep.subr.bf16.mxu0 0
        %1334 = vmatpush1.bf16.xpose.msra.mxu0 0
        %1335 = vmatprep.subr.bf16.mxu0 0
        %1336 = vmatpush1.bf16.xpose.msra.mxu0 0
        %1337 = vmatprep.subr.bf16.mxu0 0
        %1338 = vmatpush1.bf16.xpose.msra.mxu0 0
        %1339 = vmatprep.subr.bf16.mxu0 0
        %1340 = vmatpush1.bf16.xpose.msra.mxu0 0
        %1341 = vmatprep.subr.bf16.mxu0 0
        %1342 = vmatpush1.bf16.xpose.msra.mxu0 0
        %1343 = vmatprep.subr.bf16.mxu0 0
        %1344 = vmatpush1.bf16.xpose.msra.mxu0 0
        %1345 = vmatprep.subr.bf16.mxu0 0
        %1346 = vmatpush1.bf16.xpose.msra.mxu0 0
        %1347 = vmatprep.subr.bf16.mxu0 0
        %1348 = vmatpush1.bf16.xpose.msra.mxu0 0
        %1349 = vmatprep.subr.bf16.mxu0 0
        %1350 = vmatpush1.bf16.xpose.msra.mxu0 0
        %1351 = vmatprep.subr.bf16.mxu0 0
        %1352 = vmatpush1.bf16.xpose.msra.mxu0 0
        %1353 = vmatprep.subr.bf16.mxu0 0
        %1354 = vmatpush1.bf16.xpose.msra.mxu0 0
        %1355 = vmatprep.subr.bf16.mxu0 0
        %1356 = vmatpush1.bf16.xpose.msra.mxu0 0
        %1357 = vmatprep.subr.bf16.mxu0 0
        %1358 = vmatpush1.bf16.xpose.msra.mxu0 0
        %1359 = vmatprep.subr.bf16.mxu0 0
        %1360 = vmatpush1.bf16.xpose.msra.mxu0 0
        %1361 = vmatprep.mubr.bf16.mxu0 0
        %1362 = vmatmul.mubr.bf16.gmra.mrb[0].mxu0 %v1321
        %v1363 = vpop.f32.mrb[0].mxu0
        %v1364 = vadd.f32 %v1175, %v1363
        %v1365 = vpop.f32.mrb[0].mxu0
        %v1366 = vpop.f32.mrb[0].mxu0
        %v1367 = vadd.f32 %v1176, %v1366
        %v1368 = vpop.f32.mrb[0].mxu0
        %1369 = vdwg.mxu0
        %v1370 = vsel %vm1084, %v1364, -inf
        %1371 = vmax.xlane.f32.xlu0 %v1370
        %v1372 = vpop.xlane.xlu0 %1371
        %v1373 = vsel %vm1084, %v1367, -inf
        %1374 = vmax.xlane.f32.xlu0 %v1373
        %v1375 = vpop.xlane.xlu0 %1374
        %v1376 = vsub.f32 %v1364, %v1372
        %v1377 = vsub.f32 %v1367, %v1375
        %v1378 = vmul.f32 %v1376, 1.442695
        %v1379 = vpow.pop %v1378
        %v1380 = vmul.f32 %v1377, 1.442695
        %v1381 = vpow.pop %v1380
        %v1382 = vsel %vm1084, %v1379, 0.0
        %1383 = vadd.xlane.f32.xlu0 %v1382
        %v1384 = vpop.xlane.xlu0 %1383
        %v1385 = vsel %vm1084, %v1381, 0.0
        %1386 = vadd.xlane.f32.xlu0 %v1385
        %v1387 = vpop.xlane.xlu0 %1386
        %v1388 = vrcp.pop %v1384
        %v1389 = vrcp.pop %v1387
        %v1390 = vmul.f32 %v1384, %v1388
        %v1391 = vmul.f32 %v1387, %v1389
        %v1392 = vsub.f32 2.0, %v1390
        %v1393 = vsub.f32 2.0, %v1391
        %v1394 = vmul.f32 %v1388, %v1392
        %v1395 = vmul.f32 %v1389, %v1393
        %v1396 = vmul.f32 %v1379, %v1394
        %v1397 = vmul.f32 %v1381, %v1395
        %v1398 = vpack.c.bf16 %v1397, %v1396
        %1401 = vrot.lane.b32.xlu0 %v1309, 120
        %v1402 = vpop.permute.xlu0 %1401
        %1403 = vrot.lane.b32.xlu0 %v1310, 120
        %v1404 = vpop.permute.xlu0 %1403
        %v1408 = vsel %vm1084, %v1398, 0
        %1410 = vmatprep.subr.bf16.mxu0 0
        %1411 = vmatpush1.bf16.msra.mxu0 %v1402
        %1412 = vmatprep.subr.bf16.mxu0 0
        %1413 = vmatpush1.bf16.msra.mxu0 %v1404
        %1414 = vmatprep.subr.bf16.mxu0 0
        %1415 = vmatpush1.bf16.msra.mxu0 0
        %1416 = vmatprep.subr.bf16.mxu0 0
        %1417 = vmatpush1.bf16.msra.mxu0 0
        %1418 = vmatprep.subr.bf16.mxu0 0
        %1419 = vmatpush1.bf16.msra.mxu0 0
        %1420 = vmatprep.subr.bf16.mxu0 0
        %1421 = vmatpush1.bf16.msra.mxu0 0
        %1422 = vmatprep.subr.bf16.mxu0 0
        %1423 = vmatpush1.bf16.msra.mxu0 0
        %1424 = vmatprep.subr.bf16.mxu0 0
        %1425 = vmatpush1.bf16.msra.mxu0 0
        %1426 = vmatprep.subr.bf16.mxu0 0
        %1427 = vmatpush1.bf16.msra.mxu0 0
        %1428 = vmatprep.subr.bf16.mxu0 0
        %1429 = vmatpush1.bf16.msra.mxu0 0
        %1430 = vmatprep.subr.bf16.mxu0 0
        %1431 = vmatpush1.bf16.msra.mxu0 0
        %1432 = vmatprep.subr.bf16.mxu0 0
        %1433 = vmatpush1.bf16.msra.mxu0 0
        %1434 = vmatprep.subr.bf16.mxu0 0
        %1435 = vmatpush1.bf16.msra.mxu0 0
        %1436 = vmatprep.subr.bf16.mxu0 0
        %1437 = vmatpush1.bf16.msra.mxu0 0
        %1438 = vmatprep.subr.bf16.mxu0 0
        %1439 = vmatpush1.bf16.msra.mxu0 0
        %1440 = vmatprep.subr.bf16.mxu0 0
        %1441 = vmatpush1.bf16.msra.mxu0 0
        %1442 = vmatprep.mubr.bf16.mxu0 0
        %1443 = vmatmul.mubr.bf16.gmra.mrb[0].mxu0 %v1408
        %v1444 = vpop.f32.mrb[0].mxu0
        %v1445 = vadd.f32 0.0, %v1444
        %v1446 = vpop.f32.mrb[0].mxu0
        %v1447 = vpop.f32.mrb[0].mxu0
        %v1448 = vadd.f32 0.0, %v1447
        %v1449 = vpop.f32.mrb[0].mxu0
        %1450 = vdwg.mxu0
        %v1451 = vpack.c.bf16 %v1448, %v1445
        %1453 = vrot.lane.b32.xlu0 %v1451, 8
        %v1454 = vpop.permute.xlu0 %1453
        %vm1456 = vcmask 130112
        %1457 = vst.msk [vmem:[#allocation5] sm:$0xff] %vm1456, %v1454
        %v1458 = vld [vmem:[#allocation3] sm:$0xff]
        %v1459 = vld [vmem:[#allocation3 + $0x8] sm:$0xff]
        %v1460 = vld [vmem:[#allocation4] sm:$0xff]
        %v1461 = vld [vmem:[#allocation4 + $0x8] sm:$0xff]
        %1462 = vrot.lane.b32.xlu0 %v1164, 112
        %v1463 = vpop.permute.xlu0 %1462
        %1466 = vrot.lane.b32.xlu0 %v1458, 112
        %v1467 = vpop.permute.xlu0 %1466
        %1468 = vrot.lane.b32.xlu0 %v1459, 112
        %v1469 = vpop.permute.xlu0 %1468
        %v1471 = vsel %vm1181, %v1463, 0
        %v1474 = vsel %vm1181, %v1467, 0
        %v1477 = vsel %vm1181, %v1469, 0
        %1479 = vmatprep.subr.bf16.mxu0 0
        %1480 = vmatpush1.bf16.xpose.msra.mxu0 %v1474
        %1481 = vmatprep.subr.bf16.mxu0 0
        %1482 = vmatpush1.bf16.xpose.msra.mxu0 %v1477
        %1483 = vmatprep.subr.bf16.mxu0 0
        %1484 = vmatpush1.bf16.xpose.msra.mxu0 0
        %1485 = vmatprep.subr.bf16.mxu0 0
        %1486 = vmatpush1.bf16.xpose.msra.mxu0 0
        %1487 = vmatprep.subr.bf16.mxu0 0
        %1488 = vmatpush1.bf16.xpose.msra.mxu0 0
        %1489 = vmatprep.subr.bf16.mxu0 0
        %1490 = vmatpush1.bf16.xpose.msra.mxu0 0
        %1491 = vmatprep.subr.bf16.mxu0 0
        %1492 = vmatpush1.bf16.xpose.msra.mxu0 0
        %1493 = vmatprep.subr.bf16.mxu0 0
        %1494 = vmatpush1.bf16.xpose.msra.mxu0 0
        %1495 = vmatprep.subr.bf16.mxu0 0
        %1496 = vmatpush1.bf16.xpose.msra.mxu0 0
        %1497 = vmatprep.subr.bf16.mxu0 0
        %1498 = vmatpush1.bf16.xpose.msra.mxu0 0
        %1499 = vmatprep.subr.bf16.mxu0 0
        %1500 = vmatpush1.bf16.xpose.msra.mxu0 0
        %1501 = vmatprep.subr.bf16.mxu0 0
        %1502 = vmatpush1.bf16.xpose.msra.mxu0 0
        %1503 = vmatprep.subr.bf16.mxu0 0
        %1504 = vmatpush1.bf16.xpose.msra.mxu0 0
        %1505 = vmatprep.subr.bf16.mxu0 0
        %1506 = vmatpush1.bf16.xpose.msra.mxu0 0
        %1507 = vmatprep.subr.bf16.mxu0 0
        %1508 = vmatpush1.bf16.xpose.msra.mxu0 0
        %1509 = vmatprep.subr.bf16.mxu0 0
        %1510 = vmatpush1.bf16.xpose.msra.mxu0 0
        %1511 = vmatprep.mubr.bf16.mxu0 0
        %1512 = vmatmul.mubr.bf16.gmra.mrb[0].mxu0 %v1471
        %v1513 = vpop.f32.mrb[0].mxu0
        %v1514 = vadd.f32 %v1175, %v1513
        %v1515 = vpop.f32.mrb[0].mxu0
        %v1516 = vpop.f32.mrb[0].mxu0
        %v1517 = vadd.f32 %v1176, %v1516
        %v1518 = vpop.f32.mrb[0].mxu0
        %1519 = vdwg.mxu0
        %v1520 = vsel %vm1084, %v1514, -inf
        %1521 = vmax.xlane.f32.xlu0 %v1520
        %v1522 = vpop.xlane.xlu0 %1521
        %v1523 = vsel %vm1084, %v1517, -inf
        %1524 = vmax.xlane.f32.xlu0 %v1523
        %v1525 = vpop.xlane.xlu0 %1524
        %v1526 = vsub.f32 %v1514, %v1522
        %v1527 = vsub.f32 %v1517, %v1525
        %v1528 = vmul.f32 %v1526, 1.442695
        %v1529 = vpow.pop %v1528
        %v1530 = vmul.f32 %v1527, 1.442695
        %v1531 = vpow.pop %v1530
        %v1532 = vsel %vm1084, %v1529, 0.0
        %1533 = vadd.xlane.f32.xlu0 %v1532
        %v1534 = vpop.xlane.xlu0 %1533
        %v1535 = vsel %vm1084, %v1531, 0.0
        %1536 = vadd.xlane.f32.xlu0 %v1535
        %v1537 = vpop.xlane.xlu0 %1536
        %v1538 = vrcp.pop %v1534
        %v1539 = vrcp.pop %v1537
        %v1540 = vmul.f32 %v1534, %v1538
        %v1541 = vmul.f32 %v1537, %v1539
        %v1542 = vsub.f32 2.0, %v1540
        %v1543 = vsub.f32 2.0, %v1541
        %v1544 = vmul.f32 %v1538, %v1542
        %v1545 = vmul.f32 %v1539, %v1543
        %v1546 = vmul.f32 %v1529, %v1544
        %v1547 = vmul.f32 %v1531, %v1545
        %v1548 = vpack.c.bf16 %v1547, %v1546
        %1551 = vrot.lane.b32.xlu0 %v1460, 112
        %v1552 = vpop.permute.xlu0 %1551
        %1553 = vrot.lane.b32.xlu0 %v1461, 112
        %v1554 = vpop.permute.xlu0 %1553
        %v1558 = vsel %vm1084, %v1548, 0
        %1560 = vmatprep.subr.bf16.mxu0 0
        %1561 = vmatpush1.bf16.msra.mxu0 %v1552
        %1562 = vmatprep.subr.bf16.mxu0 0
        %1563 = vmatpush1.bf16.msra.mxu0 %v1554
        %1564 = vmatprep.subr.bf16.mxu0 0
        %1565 = vmatpush1.bf16.msra.mxu0 0
        %1566 = vmatprep.subr.bf16.mxu0 0
        %1567 = vmatpush1.bf16.msra.mxu0 0
        %1568 = vmatprep.subr.bf16.mxu0 0
        %1569 = vmatpush1.bf16.msra.mxu0 0
        %1570 = vmatprep.subr.bf16.mxu0 0
        %1571 = vmatpush1.bf16.msra.mxu0 0
        %1572 = vmatprep.subr.bf16.mxu0 0
        %1573 = vmatpush1.bf16.msra.mxu0 0
        %1574 = vmatprep.subr.bf16.mxu0 0
        %1575 = vmatpush1.bf16.msra.mxu0 0
        %1576 = vmatprep.subr.bf16.mxu0 0
        %1577 = vmatpush1.bf16.msra.mxu0 0
        %1578 = vmatprep.subr.bf16.mxu0 0
        %1579 = vmatpush1.bf16.msra.mxu0 0
        %1580 = vmatprep.subr.bf16.mxu0 0
        %1581 = vmatpush1.bf16.msra.mxu0 0
        %1582 = vmatprep.subr.bf16.mxu0 0
        %1583 = vmatpush1.bf16.msra.mxu0 0
        %1584 = vmatprep.subr.bf16.mxu0 0
        %1585 = vmatpush1.bf16.msra.mxu0 0
        %1586 = vmatprep.subr.bf16.mxu0 0
        %1587 = vmatpush1.bf16.msra.mxu0 0
        %1588 = vmatprep.subr.bf16.mxu0 0
        %1589 = vmatpush1.bf16.msra.mxu0 0
        %1590 = vmatprep.subr.bf16.mxu0 0
        %1591 = vmatpush1.bf16.msra.mxu0 0
        %1592 = vmatprep.mubr.bf16.mxu0 0
        %1593 = vmatmul.mubr.bf16.gmra.mrb[0].mxu0 %v1558
        %v1594 = vpop.f32.mrb[0].mxu0
        %v1595 = vadd.f32 0.0, %v1594
        %v1596 = vpop.f32.mrb[0].mxu0
        %v1597 = vpop.f32.mrb[0].mxu0
        %v1598 = vadd.f32 0.0, %v1597
        %v1599 = vpop.f32.mrb[0].mxu0
        %1600 = vdwg.mxu0
        %v1601 = vpack.c.bf16 %v1598, %v1595
        %1603 = vrot.lane.b32.xlu0 %v1601, 16
        %v1604 = vpop.permute.xlu0 %1603
        %vm1606 = vcmask 195712
        %1607 = vst.msk [vmem:[#allocation5] sm:$0xff] %vm1606, %v1604
        %v1608 = vld [vmem:[#allocation3] sm:$0xff]
        %v1609 = vld [vmem:[#allocation3 + $0x8] sm:$0xff]
        %v1610 = vld [vmem:[#allocation4] sm:$0xff]
        %v1611 = vld [vmem:[#allocation4 + $0x8] sm:$0xff]
        %1612 = vrot.lane.b32.xlu0 %v1164, 104
        %v1613 = vpop.permute.xlu0 %1612
        %1616 = vrot.lane.b32.xlu0 %v1608, 104
        %v1617 = vpop.permute.xlu0 %1616
        %1618 = vrot.lane.b32.xlu0 %v1609, 104
        %v1619 = vpop.permute.xlu0 %1618
        %v1621 = vsel %vm1181, %v1613, 0
        %v1624 = vsel %vm1181, %v1617, 0
        %v1627 = vsel %vm1181, %v1619, 0
        %1629 = vmatprep.subr.bf16.mxu0 0
        %1630 = vmatpush1.bf16.xpose.msra.mxu0 %v1624
        %1631 = vmatprep.subr.bf16.mxu0 0
        %1632 = vmatpush1.bf16.xpose.msra.mxu0 %v1627
        %1633 = vmatprep.subr.bf16.mxu0 0
        %1634 = vmatpush1.bf16.xpose.msra.mxu0 0
        %1635 = vmatprep.subr.bf16.mxu0 0
        %1636 = vmatpush1.bf16.xpose.msra.mxu0 0
        %1637 = vmatprep.subr.bf16.mxu0 0
        %1638 = vmatpush1.bf16.xpose.msra.mxu0 0
        %1639 = vmatprep.subr.bf16.mxu0 0
        %1640 = vmatpush1.bf16.xpose.msra.mxu0 0
        %1641 = vmatprep.subr.bf16.mxu0 0
        %1642 = vmatpush1.bf16.xpose.msra.mxu0 0
        %1643 = vmatprep.subr.bf16.mxu0 0
        %1644 = vmatpush1.bf16.xpose.msra.mxu0 0
        %1645 = vmatprep.subr.bf16.mxu0 0
        %1646 = vmatpush1.bf16.xpose.msra.mxu0 0
        %1647 = vmatprep.subr.bf16.mxu0 0
        %1648 = vmatpush1.bf16.xpose.msra.mxu0 0
        %1649 = vmatprep.subr.bf16.mxu0 0
        %1650 = vmatpush1.bf16.xpose.msra.mxu0 0
        %1651 = vmatprep.subr.bf16.mxu0 0
        %1652 = vmatpush1.bf16.xpose.msra.mxu0 0
        %1653 = vmatprep.subr.bf16.mxu0 0
        %1654 = vmatpush1.bf16.xpose.msra.mxu0 0
        %1655 = vmatprep.subr.bf16.mxu0 0
        %1656 = vmatpush1.bf16.xpose.msra.mxu0 0
        %1657 = vmatprep.subr.bf16.mxu0 0
        %1658 = vmatpush1.bf16.xpose.msra.mxu0 0
        %1659 = vmatprep.subr.bf16.mxu0 0
        %1660 = vmatpush1.bf16.xpose.msra.mxu0 0
        %1661 = vmatprep.mubr.bf16.mxu0 0
        %1662 = vmatmul.mubr.bf16.gmra.mrb[0].mxu0 %v1621
        %v1663 = vpop.f32.mrb[0].mxu0
        %v1664 = vadd.f32 %v1175, %v1663
        %v1665 = vpop.f32.mrb[0].mxu0
        %v1666 = vpop.f32.mrb[0].mxu0
        %v1667 = vadd.f32 %v1176, %v1666
        %v1668 = vpop.f32.mrb[0].mxu0
        %1669 = vdwg.mxu0
        %v1670 = vsel %vm1084, %v1664, -inf
        %1671 = vmax.xlane.f32.xlu0 %v1670
        %v1672 = vpop.xlane.xlu0 %1671
        %v1673 = vsel %vm1084, %v1667, -inf
        %1674 = vmax.xlane.f32.xlu0 %v1673
        %v1675 = vpop.xlane.xlu0 %1674
        %v1676 = vsub.f32 %v1664, %v1672
        %v1677 = vsub.f32 %v1667, %v1675
        %v1678 = vmul.f32 %v1676, 1.442695
        %v1679 = vpow.pop %v1678
        %v1680 = vmul.f32 %v1677, 1.442695
        %v1681 = vpow.pop %v1680
        %v1682 = vsel %vm1084, %v1679, 0.0
        %1683 = vadd.xlane.f32.xlu0 %v1682
        %v1684 = vpop.xlane.xlu0 %1683
        %v1685 = vsel %vm1084, %v1681, 0.0
        %1686 = vadd.xlane.f32.xlu0 %v1685
        %v1687 = vpop.xlane.xlu0 %1686
        %v1688 = vrcp.pop %v1684
        %v1689 = vrcp.pop %v1687
        %v1690 = vmul.f32 %v1684, %v1688
        %v1691 = vmul.f32 %v1687, %v1689
        %v1692 = vsub.f32 2.0, %v1690
        %v1693 = vsub.f32 2.0, %v1691
        %v1694 = vmul.f32 %v1688, %v1692
        %v1695 = vmul.f32 %v1689, %v1693
        %v1696 = vmul.f32 %v1679, %v1694
        %v1697 = vmul.f32 %v1681, %v1695
        %v1698 = vpack.c.bf16 %v1697, %v1696
        %1701 = vrot.lane.b32.xlu0 %v1610, 104
        %v1702 = vpop.permute.xlu0 %1701
        %1703 = vrot.lane.b32.xlu0 %v1611, 104
        %v1704 = vpop.permute.xlu0 %1703
        %v1708 = vsel %vm1084, %v1698, 0
        %1710 = vmatprep.subr.bf16.mxu0 0
        %1711 = vmatpush1.bf16.msra.mxu0 %v1702
        %1712 = vmatprep.subr.bf16.mxu0 0
        %1713 = vmatpush1.bf16.msra.mxu0 %v1704
        %1714 = vmatprep.subr.bf16.mxu0 0
        %1715 = vmatpush1.bf16.msra.mxu0 0
        %1716 = vmatprep.subr.bf16.mxu0 0
        %1717 = vmatpush1.bf16.msra.mxu0 0
        %1718 = vmatprep.subr.bf16.mxu0 0
        %1719 = vmatpush1.bf16.msra.mxu0 0
        %1720 = vmatprep.subr.bf16.mxu0 0
        %1721 = vmatpush1.bf16.msra.mxu0 0
        %1722 = vmatprep.subr.bf16.mxu0 0
        %1723 = vmatpush1.bf16.msra.mxu0 0
        %1724 = vmatprep.subr.bf16.mxu0 0
        %1725 = vmatpush1.bf16.msra.mxu0 0
        %1726 = vmatprep.subr.bf16.mxu0 0
        %1727 = vmatpush1.bf16.msra.mxu0 0
        %1728 = vmatprep.subr.bf16.mxu0 0
        %1729 = vmatpush1.bf16.msra.mxu0 0
        %1730 = vmatprep.subr.bf16.mxu0 0
        %1731 = vmatpush1.bf16.msra.mxu0 0
        %1732 = vmatprep.subr.bf16.mxu0 0
        %1733 = vmatpush1.bf16.msra.mxu0 0
        %1734 = vmatprep.subr.bf16.mxu0 0
        %1735 = vmatpush1.bf16.msra.mxu0 0
        %1736 = vmatprep.subr.bf16.mxu0 0
        %1737 = vmatpush1.bf16.msra.mxu0 0
        %1738 = vmatprep.subr.bf16.mxu0 0
        %1739 = vmatpush1.bf16.msra.mxu0 0
        %1740 = vmatprep.subr.bf16.mxu0 0
        %1741 = vmatpush1.bf16.msra.mxu0 0
        %1742 = vmatprep.mubr.bf16.mxu0 0
        %1743 = vmatmul.mubr.bf16.gmra.mrb[0].mxu0 %v1708
        %v1744 = vpop.f32.mrb[0].mxu0
        %v1745 = vadd.f32 0.0, %v1744
        %v1746 = vpop.f32.mrb[0].mxu0
        %v1747 = vpop.f32.mrb[0].mxu0
        %v1748 = vadd.f32 0.0, %v1747
        %v1749 = vpop.f32.mrb[0].mxu0
        %1750 = vdwg.mxu0
        %v1751 = vpack.c.bf16 %v1748, %v1745
        %1753 = vrot.lane.b32.xlu0 %v1751, 24
        %v1754 = vpop.permute.xlu0 %1753
        %vm1756 = vcmask 261312
        %1757 = vst.msk [vmem:[#allocation5] sm:$0xff] %vm1756, %v1754
        %v1758 = vld [vmem:[#allocation5] sm:$0xff]
        %v1759 = vld [vmem:[%s10] sm:$0xf]
        %v1760 = vld [vmem:[%s10 + $0x4] sm:$0xf]
        %v1761 = vld [vmem:[%s10 + $0x8] sm:$0xf]
        %v1762 = vld [vmem:[%s10 + $0xc] sm:$0xf]
        %v1763 = vld [vmem:[#allocation18] sm:$0x1]
        %v1765 = vlaneseq
        %v1766 = vshrl.u32 %v1765, 7
        %v1767 = vsub.s32 0, %v1766
        %v1768 = vrot.slane %v1763, %v1767
        %v1774 = vunpack.c.l.b16 %v1759
        %v1775 = vunpack.c.l.b16 %v1760
        %v1776 = vunpack.c.l.b16 %v1761
        %v1777 = vunpack.c.l.b16 %v1762
        %v1778 = vpack.c.b16 %v1775, %v1774
        %v1779 = vpack.c.b16 %v1777, %v1776
        %v1783 = vsel %vm1084, %v1758, 0
        %1785 = vmatprep.subr.bf16.mxu0 0
        %1786 = vmatpush1.bf16.msra.mxu0 %v1778
        %1787 = vmatprep.subr.bf16.mxu0 0
        %1788 = vmatpush1.bf16.msra.mxu0 %v1779
        %1789 = vmatprep.subr.bf16.mxu0 0
        %1790 = vmatpush1.bf16.msra.mxu0 0
        %1791 = vmatprep.subr.bf16.mxu0 0
        %1792 = vmatpush1.bf16.msra.mxu0 0
        %1793 = vmatprep.subr.bf16.mxu0 0
        %1794 = vmatpush1.bf16.msra.mxu0 0
        %1795 = vmatprep.subr.bf16.mxu0 0
        %1796 = vmatpush1.bf16.msra.mxu0 0
        %1797 = vmatprep.subr.bf16.mxu0 0
        %1798 = vmatpush1.bf16.msra.mxu0 0
        %1799 = vmatprep.subr.bf16.mxu0 0
        %1800 = vmatpush1.bf16.msra.mxu0 0
        %1801 = vmatprep.subr.bf16.mxu0 0
        %1802 = vmatpush1.bf16.msra.mxu0 0
        %1803 = vmatprep.subr.bf16.mxu0 0
        %1804 = vmatpush1.bf16.msra.mxu0 0
        %1805 = vmatprep.subr.bf16.mxu0 0
        %1806 = vmatpush1.bf16.msra.mxu0 0
        %1807 = vmatprep.subr.bf16.mxu0 0
        %1808 = vmatpush1.bf16.msra.mxu0 0
        %1809 = vmatprep.subr.bf16.mxu0 0
        %1810 = vmatpush1.bf16.msra.mxu0 0
        %1811 = vmatprep.subr.bf16.mxu0 0
        %1812 = vmatpush1.bf16.msra.mxu0 0
        %1813 = vmatprep.subr.bf16.mxu0 0
        %1814 = vmatpush1.bf16.msra.mxu0 0
        %1815 = vmatprep.subr.bf16.mxu0 0
        %1816 = vmatpush1.bf16.msra.mxu0 0
        %1817 = vmatprep.mubr.bf16.mxu0 0
        %1818 = vmatmul.mubr.bf16.gmra.mrb[0].mxu0 %v1783
        %v1819 = vpop.f32.mrb[0].mxu0
        %v1820 = vadd.f32 %v1768, %v1819
        %v1821 = vpop.f32.mrb[0].mxu0
        %v1822 = vpop.f32.mrb[0].mxu0
        %v1823 = vadd.f32 %v1768, %v1822
        %v1824 = vpop.f32.mrb[0].mxu0
        %1825 = vdwg.mxu0
        %v1826 = vld [vmem:[%s712] sm:$0xff]
        %v1827 = vld [vmem:[%s712 + $0x8] sm:$0xff]
        %v1828 = vadd.f32 %v1826, %v1820
        %v1829 = vadd.f32 %v1827, %v1823
        %v1830 = vld [vmem:[#allocation20] sm:$0x1]
        %v1831 = vld [vmem:[#allocation21] sm:$0x1]
        %v1832 = vsel %vm1084, %v1828, 0.0
        %1833 = vadd.xlane.f32.xlu0 %v1832
        %v1834 = vpop.xlane.xlu0 %1833
        %v1835 = vsel %vm1084, %v1829, 0.0
        %1836 = vadd.xlane.f32.xlu0 %v1835
        %v1837 = vpop.xlane.xlu0 %1836
        %v1838 = vrcp.pop 32.0
        %v1839 = vmul.f32 %v1834, %v1838
        %v1840 = vmul.f32 %v1837, %v1838
        %v1841 = vsub.f32 %v1828, %v1839
        %v1842 = vsub.f32 %v1829, %v1840
        %v1843 = vmul.f32 %v1841, %v1841
        %v1844 = vmul.f32 %v1842, %v1842
        %v1845 = vsel %vm1084, %v1843, 0.0
        %1846 = vadd.xlane.f32.xlu0 %v1845
        %v1847 = vpop.xlane.xlu0 %1846
        %v1848 = vsel %vm1084, %v1844, 0.0
        %1849 = vadd.xlane.f32.xlu0 %v1848
        %v1850 = vpop.xlane.xlu0 %1849
        %v1851 = vmul.f32 %v1847, %v1838
        %v1852 = vmul.f32 %v1850, %v1838
        %v1853 = vadd.f32 %v1851, 1e-05
        %v1854 = vadd.f32 %v1852, 1e-05
        %v1855 = vrsqrt.pop %v1853
        %v1856 = vrsqrt.pop %v1854
        %v1857 = vmul.f32 %v1841, %v1855
        %v1858 = vmul.f32 %v1842, %v1856
        %v1860 = vlaneseq
        %v1861 = vshrl.u32 %v1860, 7
        %v1862 = vsub.s32 0, %v1861
        %v1863 = vrot.slane %v1830, %v1862
        %v1865 = vmul.f32 %v1857, %v1863
        %v1866 = vmul.f32 %v1858, %v1863
        %v1868 = vlaneseq
        %v1869 = vshrl.u32 %v1868, 7
        %v1870 = vsub.s32 0, %v1869
        %v1871 = vrot.slane %v1831, %v1870
        %v1873 = vadd.f32 %v1865, %v1871
        %v1874 = vadd.f32 %v1866, %v1871
        %v1875 = vpack.c.bf16 %v1874, %v1873
        %v1876 = vld [vmem:[%s14] sm:$0xf]
        %v1877 = vld [vmem:[%s14 + $0x4] sm:$0xf]
        %v1878 = vld [vmem:[%s14 + $0x8] sm:$0xf]
        %v1879 = vld [vmem:[%s14 + $0xc] sm:$0xf]
        %v1880 = vld [vmem:[%s15] sm:$0x1]
        %v1882 = vlaneseq
        %v1883 = vshrl.u32 %v1882, 7
        %v1884 = vsub.s32 0, %v1883
        %v1885 = vrot.slane %v1880, %v1884
        %v1891 = vunpack.c.l.b16 %v1876
        %v1892 = vunpack.c.l.b16 %v1877
        %v1893 = vunpack.c.l.b16 %v1878
        %v1894 = vunpack.c.l.b16 %v1879
        %v1895 = vpack.c.b16 %v1892, %v1891
        %v1896 = vpack.c.b16 %v1894, %v1893
        %v1900 = vsel %vm1084, %v1875, 0
        %1902 = vmatprep.subr.bf16.mxu0 0
        %1903 = vmatpush1.bf16.msra.mxu0 %v1895
        %1904 = vmatprep.subr.bf16.mxu0 0
        %1905 = vmatpush1.bf16.msra.mxu0 %v1896
        %1906 = vmatprep.subr.bf16.mxu0 0
        %1907 = vmatpush1.bf16.msra.mxu0 0
        %1908 = vmatprep.subr.bf16.mxu0 0
        %1909 = vmatpush1.bf16.msra.mxu0 0
        %1910 = vmatprep.subr.bf16.mxu0 0
        %1911 = vmatpush1.bf16.msra.mxu0 0
        %1912 = vmatprep.subr.bf16.mxu0 0
        %1913 = vmatpush1.bf16.msra.mxu0 0
        %1914 = vmatprep.subr.bf16.mxu0 0
        %1915 = vmatpush1.bf16.msra.mxu0 0
        %1916 = vmatprep.subr.bf16.mxu0 0
        %1917 = vmatpush1.bf16.msra.mxu0 0
        %1918 = vmatprep.subr.bf16.mxu0 0
        %1919 = vmatpush1.bf16.msra.mxu0 0
        %1920 = vmatprep.subr.bf16.mxu0 0
        %1921 = vmatpush1.bf16.msra.mxu0 0
        %1922 = vmatprep.subr.bf16.mxu0 0
        %1923 = vmatpush1.bf16.msra.mxu0 0
        %1924 = vmatprep.subr.bf16.mxu0 0
        %1925 = vmatpush1.bf16.msra.mxu0 0
        %1926 = vmatprep.subr.bf16.mxu0 0
        %1927 = vmatpush1.bf16.msra.mxu0 0
        %1928 = vmatprep.subr.bf16.mxu0 0
        %1929 = vmatpush1.bf16.msra.mxu0 0
        %1930 = vmatprep.subr.bf16.mxu0 0
        %1931 = vmatpush1.bf16.msra.mxu0 0
        %1932 = vmatprep.subr.bf16.mxu0 0
        %1933 = vmatpush1.bf16.msra.mxu0 0
        %1934 = vmatprep.mubr.bf16.mxu0 0
        %1935 = vmatmul.mubr.bf16.gmra.mrb[0].mxu0 %v1900
        %v1936 = vpop.f32.mrb[0].mxu0
        %v1937 = vadd.f32 %v1885, %v1936
        %v1938 = vpop.f32.mrb[0].mxu0
        %v1939 = vpop.f32.mrb[0].mxu0
        %v1940 = vadd.f32 %v1885, %v1939
        %v1941 = vpop.f32.mrb[0].mxu0
        %1942 = vdwg.mxu0
        %v1943 = vmul.f32 %v1937, 0.5
        %v1944 = vmul.f32 %v1940, 0.5
        %v1945 = vmul.f32 %v1937, 0.70710677
        %v1946 = vmul.f32 %v1940, 0.70710677
        %vm1947 = vcmp.ge.f32.partialorder %v1945, 0.0
        %vm1948 = vcmp.ge.f32.partialorder %v1946, 0.0
        %v1949 = vsel %vm1947, 1.0, -1.0
        %v1950 = vsel %vm1948, 1.0, -1.0
        %v1951 = vand.u32 2147483647, %v1945
        %v1952 = vand.u32 2147483647, %v1946
        %v1953 = vmul.f32 %v1951, 0.3275911
        %v1954 = vmul.f32 %v1952, 0.3275911
        %v1955 = vadd.f32 %v1953, 1.0
        %v1956 = vadd.f32 %v1954, 1.0
        %v1957 = vrcp.pop %v1955
        %v1958 = vrcp.pop %v1956
        %v1959 = vmul.f32 %v1957, 1.0614054
        %v1960 = vmul.f32 %v1958, 1.0614054
        %v1961 = vadd.f32 %v1959, -1.4531521
        %v1962 = vadd.f32 %v1960, -1.4531521
        %v1963 = vmul.f32 %v1961, %v1957
        %v1964 = vmul.f32 %v1962, %v1958
        %v1965 = vadd.f32 %v1963, 1.4214138
        %v1966 = vadd.f32 %v1964, 1.4214138
        %v1967 = vmul.f32 %v1965, %v1957
        %v1968 = vmul.f32 %v1966, %v1958
        %v1969 = vadd.f32 %v1967, -0.28449672
        %v1970 = vadd.f32 %v1968, -0.28449672
        %v1971 = vmul.f32 %v1969, %v1957
        %v1972 = vmul.f32 %v1970, %v1958
        %v1973 = vadd.f32 %v1971, 0.2548296
        %v1974 = vadd.f32 %v1972, 0.2548296
        %v1975 = vmul.f32 %v1973, %v1957
        %v1976 = vmul.f32 %v1974, %v1958
        %v1977 = vsub.f32 0.0, %v1951
        %v1978 = vsub.f32 0.0, %v1952
        %v1979 = vmul.f32 %v1977, %v1951
        %v1980 = vmul.f32 %v1978, %v1952
        %v1981 = vmul.f32 %v1979, 1.442695
        %v1982 = vpow.pop %v1981
        %v1983 = vmul.f32 %v1980, 1.442695
        %v1984 = vpow.pop %v1983
        %v1985 = vmul.f32 %v1975, %v1982
        %v1986 = vmul.f32 %v1976, %v1984
        %v1987 = vsub.f32 1.0, %v1985
        %v1988 = vsub.f32 1.0, %v1986
        %v1989 = vmul.f32 %v1949, %v1987
        %v1990 = vmul.f32 %v1950, %v1988
        %v1991 = vadd.f32 %v1989, 1.0
        %v1992 = vadd.f32 %v1990, 1.0
        %v1993 = vmul.f32 %v1943, %v1991
        %v1994 = vmul.f32 %v1944, %v1992
        %v1995 = vpack.c.bf16 %v1994, %v1993
        %v1996 = vld [vmem:[%s16] sm:$0xf]
        %v1997 = vld [vmem:[%s16 + $0x4] sm:$0xf]
        %v1998 = vld [vmem:[%s16 + $0x8] sm:$0xf]
        %v1999 = vld [vmem:[%s16 + $0xc] sm:$0xf]
        %v2000 = vld [vmem:[%s16 + $0x10] sm:$0xf]
        %v2001 = vld [vmem:[%s16 + $0x14] sm:$0xf]
        %v2002 = vld [vmem:[%s16 + $0x18] sm:$0xf]
        %v2003 = vld [vmem:[%s16 + $0x1c] sm:$0xf]
        %v2004 = vld [vmem:[%s16 + $0x20] sm:$0xf]
        %v2005 = vld [vmem:[%s16 + $0x24] sm:$0xf]
        %v2006 = vld [vmem:[%s16 + $0x28] sm:$0xf]
        %v2007 = vld [vmem:[%s16 + $0x2c] sm:$0xf]
        %v2008 = vld [vmem:[%s16 + $0x30] sm:$0xf]
        %v2009 = vld [vmem:[%s16 + $0x34] sm:$0xf]
        %v2010 = vld [vmem:[%s16 + $0x38] sm:$0xf]
        %v2011 = vld [vmem:[%s16 + $0x3c] sm:$0xf]
        %v2012 = vld [vmem:[%s17] sm:$0x1]
        %v2014 = vlaneseq
        %v2015 = vshrl.u32 %v2014, 7
        %v2016 = vsub.s32 0, %v2015
        %v2017 = vrot.slane %v2012, %v2016
        %v2035 = vunpack.c.l.b16 %v1996
        %v2036 = vunpack.c.l.b16 %v1997
        %v2037 = vunpack.c.l.b16 %v1998
        %v2038 = vunpack.c.l.b16 %v1999
        %v2039 = vunpack.c.l.b16 %v2000
        %v2040 = vunpack.c.l.b16 %v2001
        %v2041 = vunpack.c.l.b16 %v2002
        %v2042 = vunpack.c.l.b16 %v2003
        %v2043 = vunpack.c.l.b16 %v2004
        %v2044 = vunpack.c.l.b16 %v2005
        %v2045 = vunpack.c.l.b16 %v2006
        %v2046 = vunpack.c.l.b16 %v2007
        %v2047 = vunpack.c.l.b16 %v2008
        %v2048 = vunpack.c.l.b16 %v2009
        %v2049 = vunpack.c.l.b16 %v2010
        %v2050 = vunpack.c.l.b16 %v2011
        %v2051 = vpack.c.b16 %v2036, %v2035
        %v2052 = vpack.c.b16 %v2038, %v2037
        %v2053 = vpack.c.b16 %v2040, %v2039
        %v2054 = vpack.c.b16 %v2042, %v2041
        %v2055 = vpack.c.b16 %v2044, %v2043
        %v2056 = vpack.c.b16 %v2046, %v2045
        %v2057 = vpack.c.b16 %v2048, %v2047
        %v2058 = vpack.c.b16 %v2050, %v2049
        %2067 = vmatprep.subr.bf16.mxu0 0
        %2068 = vmatpush1.bf16.msra.mxu0 %v2051
        %2069 = vmatprep.subr.bf16.mxu0 0
        %2070 = vmatpush1.bf16.msra.mxu0 %v2052
        %2071 = vmatprep.subr.bf16.mxu0 0
        %2072 = vmatpush1.bf16.msra.mxu0 %v2053
        %2073 = vmatprep.subr.bf16.mxu0 0
        %2074 = vmatpush1.bf16.msra.mxu0 %v2054
        %2075 = vmatprep.subr.bf16.mxu0 0
        %2076 = vmatpush1.bf16.msra.mxu0 %v2055
        %2077 = vmatprep.subr.bf16.mxu0 0
        %2078 = vmatpush1.bf16.msra.mxu0 %v2056
        %2079 = vmatprep.subr.bf16.mxu0 0
        %2080 = vmatpush1.bf16.msra.mxu0 %v2057
        %2081 = vmatprep.subr.bf16.mxu0 0
        %2082 = vmatpush1.bf16.msra.mxu0 %v2058
        %2083 = vmatprep.subr.bf16.mxu0 0
        %2084 = vmatpush1.bf16.msra.mxu0 0
        %2085 = vmatprep.subr.bf16.mxu0 0
        %2086 = vmatpush1.bf16.msra.mxu0 0
        %2087 = vmatprep.subr.bf16.mxu0 0
        %2088 = vmatpush1.bf16.msra.mxu0 0
        %2089 = vmatprep.subr.bf16.mxu0 0
        %2090 = vmatpush1.bf16.msra.mxu0 0
        %2091 = vmatprep.subr.bf16.mxu0 0
        %2092 = vmatpush1.bf16.msra.mxu0 0
        %2093 = vmatprep.subr.bf16.mxu0 0
        %2094 = vmatpush1.bf16.msra.mxu0 0
        %2095 = vmatprep.subr.bf16.mxu0 0
        %2096 = vmatpush1.bf16.msra.mxu0 0
        %2097 = vmatprep.subr.bf16.mxu0 0
        %2098 = vmatpush1.bf16.msra.mxu0 0
        %2099 = vmatprep.mubr.bf16.mxu0 0
        %2100 = vmatmul.mubr.bf16.gmra.mrb[0].mxu0 %v1995
        %v2101 = vpop.f32.mrb[0].mxu0
        %v2102 = vadd.f32 %v2017, %v2101
        %v2103 = vpop.f32.mrb[0].mxu0
        %v2104 = vpop.f32.mrb[0].mxu0
        %v2105 = vadd.f32 %v2017, %v2104
        %v2106 = vpop.f32.mrb[0].mxu0
        %2107 = vdwg.mxu0
        %v2108 = vadd.f32 %v1828, %v2102
        %v2109 = vadd.f32 %v1829, %v2105
        %2110 = vst.msk [vmem:[%s805] sm:$0xff] %vm1084, %v2108
        %2111 = vst.msk [vmem:[%s805 + $0x8] sm:$0xff] %vm1084, %v2109
        %s2112 = sand.u32 %s458, 1
        %s2113 = scalar_lea.sflag [#allocation8], %s2112
        %s2114 = sand.u32 %s458, 1
        %s2115 = smul.addr %s2114, 16
        %s2116 = scalar_lea.vmem [#allocation23], %s2115
        %s2117 = sand.u32 %s46, 1
        %s2118 = scalar_lea.sflag [#allocation25], %s2117
        %s2119 = sand.u32 %s486, 1
        %s2120 = smul.addr %s2119, 16
        %s2121 = scalar_lea.vmem [#allocation24], %s2120
        %s2122 = sand.u32 %s46, 1
        %s2123 = scalar_lea.sflag [#allocation25], %s2122
        %s2124 = sand.u32 %s514, 1
        %s2125 = smul.addr %s2124, 16
        %s2126 = scalar_lea.vmem [#allocation26], %s2125
        // Predicated region
        $region137: #{tpu_custom_call.1} parent=91 // pred_check
          %p2127 = pneg %p468
        $region138: #{tpu_custom_call.1} parent=91 // pred_check_branch
          %2129 = sbr.rel (%p2127) target = $region140
        $region139: #{tpu_custom_call.1} parent=91 // pred_region
          %s2130 = smul.u32 2, %s51
          %s2132 = ssub.s32 256, 256
          %2133 = vsyncadd %s2113, %s2132
          %s2134 = smul.addr %s50, 4
          %s2135 = sadd.s32 %s2130, %s2134
          %s2136 = smul.addr %s2135, 128
          %s2137 = scalar_lea.hbm %s18, %s2136
          %s2138 = sshll.u32 %s2116, 4
          %s2139 = int_to_ptr.vmem [resolvable:$true] %s2138
          %2144 = dma.vmem_to_hbm [thread:$0]  %s2139, 256, %s2137, %s2113, 128, 128, 8
        $region140: #{tpu_custom_call.1} parent=91 // pred_fallthru
          _
        // Predicated region
        $region141: #{tpu_custom_call.1} parent=91 // pred_check
          %p2145 = pneg %p496
        $region142: #{tpu_custom_call.1} parent=91 // pred_check_branch
          %2147 = sbr.rel (%p2145) target = $region144
        $region143: #{tpu_custom_call.1} parent=91 // pred_region
          %s2148 = smul.u32 2, %s51
          %s2150 = ssub.s32 256, 256
          %2151 = vsyncadd %s2118, %s2150
          %s2152 = smul.addr %s50, 4
          %s2153 = sadd.s32 %s2148, %s2152
          %s2154 = smul.addr %s2153, 128
          %s2155 = scalar_lea.hbm %s19, %s2154
          %s2156 = sshll.u32 %s2121, 4
          %s2157 = int_to_ptr.vmem [resolvable:$true] %s2156
          %2162 = dma.vmem_to_hbm [thread:$0]  %s2157, 256, %s2155, %s2118, 128, 128, 8
        $region144: #{tpu_custom_call.1} parent=91 // pred_fallthru
          _
        // Predicated region
        $region145: #{tpu_custom_call.1} parent=91 // pred_check
          %p2163 = pneg %p524
        $region146: #{tpu_custom_call.1} parent=91 // pred_check_branch
          %2165 = sbr.rel (%p2163) target = $region148
        $region147: #{tpu_custom_call.1} parent=91 // pred_region
          %s2166 = smul.u32 2, %s51
          %s2168 = ssub.s32 256, 256
          %2169 = vsyncadd %s2123, %s2168
          %s2170 = smul.addr %s50, 4
          %s2171 = sadd.s32 %s2166, %s2170
          %s2172 = smul.addr %s2171, 128
          %s2173 = scalar_lea.hbm %s20, %s2172
          %s2174 = sshll.u32 %s2126, 4
          %s2175 = int_to_ptr.vmem [resolvable:$true] %s2174
          %2180 = dma.vmem_to_hbm [thread:$0]  %s2175, 256, %s2173, %s2123, 128, 128, 8
        $region148: #{tpu_custom_call.1} parent=91 // pred_fallthru
          _
      $region92: #{tpu_custom_call.1} parent=5 // pred_fallthru
        _
      %p2181 = scmp.le.s32.totalorder 2, %s41
      // Predicated region
      $region149: #{tpu_custom_call.1} parent=5 // pred_check
        %p2182 = pneg %p2181
      $region150: #{tpu_custom_call.1} parent=5 // pred_check_branch
        %2184 = sbr.rel (%p2182) target = $region152
      $region151: #{tpu_custom_call.1} parent=5 // pred_region
        %s2185 = ssub.s32 %s41, 2
        // Predicated region
        $region153: #{tpu_custom_call.1} parent=151 // pred_check
          %p2186 = pneg %p474
        $region154: #{tpu_custom_call.1} parent=151 // pred_check_branch
          %2188 = sbr.rel (%p2186) target = $region156
        $region155: #{tpu_custom_call.1} parent=151 // pred_region
          %s2189 = sand.u32 %s459, 1
          %s2190 = scalar_lea.sflag [#allocation8], %s2189
          %s2191 = sand.u32 %s459, 1
          %s2192 = smul.addr %s2191, 16
          %s2193 = scalar_lea.vmem [#allocation23], %s2192
          %2194 = dma.done %s2190, 256
        $region156: #{tpu_custom_call.1} parent=151 // pred_fallthru
          _
        // Predicated region
        $region157: #{tpu_custom_call.1} parent=151 // pred_check
          %p2195 = pneg %p502
        $region158: #{tpu_custom_call.1} parent=151 // pred_check_branch
          %2197 = sbr.rel (%p2195) target = $region160
        $region159: #{tpu_custom_call.1} parent=151 // pred_region
          %s2198 = sand.u32 %s47, 1
          %s2199 = scalar_lea.sflag [#allocation25], %s2198
          %s2200 = sand.u32 %s487, 1
          %s2201 = smul.addr %s2200, 16
          %s2202 = scalar_lea.vmem [#allocation24], %s2201
          %2203 = dma.done %s2199, 256
        $region160: #{tpu_custom_call.1} parent=151 // pred_fallthru
          _
        // Predicated region
        $region161: #{tpu_custom_call.1} parent=151 // pred_check
          %p2204 = pneg %p530
        $region162: #{tpu_custom_call.1} parent=151 // pred_check_branch
          %2206 = sbr.rel (%p2204) target = $region164
        $region163: #{tpu_custom_call.1} parent=151 // pred_region
          %s2207 = sand.u32 %s47, 1
          %s2208 = scalar_lea.sflag [#allocation25], %s2207
          %s2209 = sand.u32 %s515, 1
          %s2210 = smul.addr %s2209, 16
          %s2211 = scalar_lea.vmem [#allocation26], %s2210
          %2212 = dma.done %s2208, 256
        $region164: #{tpu_custom_call.1} parent=151 // pred_fallthru
          _
      $region152: #{tpu_custom_call.1} parent=5 // pred_fallthru
        _
    $region6: #{tpu_custom_call.1} parent=1 // loop_footer
      %s45 = sadd.s32 1, %s41
    $region7: #{tpu_custom_call.1} parent=1 // loop_footer_branch
      %40 = sbr.rel target = $region3
    $region8: #{tpu_custom_call.1} parent=1 // loop_exit
      _
    %2213 = vsyncpa [#allocation7], 1
    %s2214 = scalar_lea.sflag [#allocation7], 1
    %2215 = vsyncpa %s2214, 1
    %2216 = vsyncpa [#allocation10], 1
    %2217 = vsyncpa [#allocation13], 1
    %2218 = vsyncpa [#allocation16], 1
    %2219 = vsyncpa [#allocation19], 1
    %2220 = vsyncpa [#allocation22], 1
    %2221 = vsyncpa [#allocation8], 1
    %s2222 = scalar_lea.sflag [#allocation8], 1
    %2223 = vsyncpa %s2222, 1
    %2224 = vsyncpa [#allocation25], 1
    %s2225 = scalar_lea.sflag [#allocation25], 1
    %2226 = vsyncpa %s2225, 1

</llo_original>
